<compile_context>
chip_gen: v7x
topology: tpu7x:2x2x1
jax: 0.10.0
libtpu: 0.0.40
codegen_flags: <defaults>
</compile_context>

<pallas_src>
import functools

import jax
import jax.numpy as jnp
from jax.experimental import pallas as pl
from jax.experimental.pallas import tpu as pltpu


def _fused_block_kernel(x_ref, w1_ref, b1_ref, w2_ref, ws_ref, b2s_ref,
                        mask_ref, o_ref, y1e_s, *, H, W, G):
    """Fused ConvWithSkipBlock for one batch element (channel-major, flat).

    The zero-padded image is flattened to P=(H+2)*(W+2) positions and flanked
    by G guard columns, so each 3x3 tap's operand is a *contiguous* lane slice
    of the (C, E) buffer (E = 2G + P).  Only interior positions are extracted
    to the output, so garbage in guard/halo columns is harmless; the interior
    mask keeps y1's halo exactly zero for the second conv.

    x_ref   : (1, Cin, E)     padded + guarded input, flat, channel-major
    w1_ref  : (9, Cmid, Cin)  conv1 per-tap matrices, tap = dh*3 + dw
    b1_ref  : (Cmid, 1)       conv1 bias (f32)
    w2_ref  : (9, Cout, Cmid) conv2 per-tap matrices
    ws_ref  : (Cout, Cin)     1x1 skip projection
    b2s_ref : (Cout, 1)       b2 + bs, pre-summed (f32)
    mask_ref: (1, P)          1.0 inside the image, 0.0 on the SAME halo
    o_ref   : (1, Cout, H*W)  lane-dense channel-major output
    y1e_s   : VMEM (Cmid, E)  guarded scratch for the intermediate activation
    """
    Wp = W + 2
    P = (H + 2) * Wp
    Cmid = w1_ref.shape[1]

    x = x_ref[0]                      # (Cin, E): one load, sliced per tap
    w1 = w1_ref[...]                  # (9, Cmid, Cin), tiny
    w2 = w2_ref[...]                  # (9, Cout, Cmid)

    # ---- conv1: 9 per-tap accumulating MXU matmuls (Cmid, Cin) @ (Cin, P) --
    acc = jnp.zeros((Cmid, P), jnp.float32)
    for dh in range(3):
        for dw in range(3):
            off = G + (dh - 1) * Wp + (dw - 1)
            acc = acc + jnp.dot(w1[dh * 3 + dw], x[:, off:off + P],
                                preferred_element_type=jnp.float32)
    # Bias + ReLU in f32; the mask re-zeroes the SAME halo so conv2 sees zeros.
    y1 = jnp.maximum(acc + b1_ref[...], 0.0) * mask_ref[...]

    # ---- y1 stays in VMEM; guards are zeroed only defensively (interior
    #      results of conv2 never read them, see index analysis above) -------
    y1e_s[:, 0:G] = jnp.zeros((Cmid, G), y1e_s.dtype)
    y1e_s[:, G + P:G + P + G] = jnp.zeros((Cmid, G), y1e_s.dtype)
    y1e_s[:, G:G + P] = y1.astype(y1e_s.dtype)

    # ---- conv2 (9 per-tap matmuls) + fused 1x1 skip as its own matmul ------
    acc = jnp.dot(ws_ref[...], x[:, G:G + P],
                  preferred_element_type=jnp.float32)
    for dh in range(3):
        for dw in range(3):
            off = G + (dh - 1) * Wp + (dw - 1)
            acc = acc + jnp.dot(w2[dh * 3 + dw], y1e_s[:, off:off + P],
                                preferred_element_type=jnp.float32)
    y = jnp.maximum(acc + b2s_ref[...], 0.0)          # (Cout, P), f32

    # ---- extract interior rows into the lane-dense (Cout, H*W) output ------
    # (native channel-major: the wrapper reshape to NCHW is free)
    for h in range(H):
        src = (h + 1) * Wp + 1
        o_ref[0, :, h * W:(h + 1) * W] = y[:, src:src + W].astype(o_ref.dtype)


def _vmem_limit_bytes(fraction=0.8, fallback=48 * 1024 * 1024):
    """Generation-aware VMEM request with ~20% headroom.

    v7x has only 64 MiB / TensorCore; v5e/v6e have 128 MiB — query instead of
    hard-coding either number.
    """
    try:
        cap = int(pltpu.get_tpu_info().vmem_capacity_bytes)
        return max(16 * 1024 * 1024, int(cap * fraction))
    except Exception:  # conservative fallback if the query is unavailable
        return fallback


def init_structure_encoder_block_params(key, in_channels, out_channels,
                                        dtype=jnp.float32):
    """Deterministic parameter init (HWIO conv weights, PyTorch-like ranges)."""
    k1, k2, k3, k4, k5, k6 = jax.random.split(key, 6)
    s1 = 1.0 / jnp.sqrt(9 * in_channels)
    s2 = 1.0 / jnp.sqrt(9 * out_channels)
    s3 = 1.0 / jnp.sqrt(in_channels)
    return {
        "w1": jax.random.uniform(k1, (3, 3, in_channels, out_channels),
                                 dtype, -s1, s1),
        "b1": jax.random.uniform(k2, (out_channels,), dtype, -s1, s1),
        "w2": jax.random.uniform(k3, (3, 3, out_channels, out_channels),
                                 dtype, -s2, s2),
        "b2": jax.random.uniform(k4, (out_channels,), dtype, -s2, s2),
        "ws": jax.random.uniform(k5, (in_channels, out_channels),
                                 dtype, -s3, s3),
        "bs": jax.random.uniform(k6, (out_channels,), dtype, -s3, s3),
    }


@functools.partial(jax.jit, static_argnames=("compute_dtype",))
def structure_encoder_block(x_nchw, params, *, compute_dtype=jnp.float32):
    """Forward pass. x_nchw: (N, Cin, H, W) -> (N, Cout, H, W).

    Set compute_dtype=jnp.bfloat16 on v6e/v7x for MXU-native operands
    (accumulation and epilogue stay f32).
    """
    N, Cin, H, W = x_nchw.shape
    w1 = params["w1"]                       # (3, 3, Cin,  Cmid)  HWIO
    w2 = params["w2"]                       # (3, 3, Cmid, Cout)  HWIO
    Cmid = w1.shape[-1]
    Cout = w2.shape[-1]

    Hp, Wp = H + 2, W + 2
    P = Hp * Wp                             # padded-flat positions
    G = Wp + 1                              # max |tap offset| -> guard width
    E = P + 2 * G

    # ---- one-time (under jit) weight prep: channel-major per-tap matrices --
    w1_taps = jnp.transpose(w1, (0, 1, 3, 2)).reshape(9, Cmid, Cin)
    w2_taps = jnp.transpose(w2, (0, 1, 3, 2)).reshape(9, Cout, Cmid)
    ws_mat = jnp.transpose(params["ws"], (1, 0))            # (Cout, Cin)
    w1_taps = w1_taps.astype(compute_dtype)
    w2_taps = w2_taps.astype(compute_dtype)
    ws_mat = ws_mat.astype(compute_dtype)
    b1_mat = params["b1"].reshape(Cmid, 1).astype(jnp.float32)
    b2s_mat = (params["b2"] + params["bs"]).reshape(Cout, 1).astype(jnp.float32)

    # ---- input prep: SAME halo + flatten + flat guards (cheap XLA ops) -----
    x_pad = jnp.pad(x_nchw, ((0, 0), (0, 0), (1, 1), (1, 1)))
    x_ext = jnp.pad(x_pad.reshape(N, Cin, P), ((0, 0), (0, 0), (G, G)))
    x_ext = x_ext.astype(compute_dtype)

    # interior mask over the padded-flat domain (zeroes y1's halo in-kernel)
    pos = jnp.arange(P, dtype=jnp.int32)
    rr, cc = pos // Wp, pos % Wp
    mask = (((rr >= 1) & (rr <= H) & (cc >= 1) & (cc <= W))
            .astype(jnp.float32).reshape(1, P))

    kernel = functools.partial(_fused_block_kernel, H=H, W=W, G=G)

    out = pl.pallas_call(
        kernel,
        out_shape=jax.ShapeDtypeStruct((N, Cout, H * W), x_nchw.dtype),
        grid=(N,),
        in_specs=[
            pl.BlockSpec((1, Cin, E), lambda n: (n, 0, 0)),
            pl.BlockSpec((9, Cmid, Cin), lambda n: (0, 0, 0)),
            pl.BlockSpec((Cmid, 1), lambda n: (0, 0)),
            pl.BlockSpec((9, Cout, Cmid), lambda n: (0, 0, 0)),
            pl.BlockSpec((Cout, Cin), lambda n: (0, 0)),
            pl.BlockSpec((Cout, 1), lambda n: (0, 0)),
            pl.BlockSpec((1, P), lambda n: (0, 0)),
        ],
        out_specs=pl.BlockSpec((1, Cout, H * W), lambda n: (n, 0, 0)),
        scratch_shapes=[pltpu.VMEM((Cmid, E), compute_dtype)],
        compiler_params=pltpu.CompilerParams(
            dimension_semantics=("parallel",),   # batch shards across TCs
            vmem_limit_bytes=_vmem_limit_bytes(),
        ),
    )(x_ext, w1_taps, b1_mat, w2_taps, ws_mat, b2s_mat, mask)

    # Free reshape: output is already channel-major (NCHW).
    return out.reshape(N, Cout, H, W)


def _reference(x_nchw, params):
    """Plain-JAX reference (XLA convs) for correctness checking."""
    x = jnp.transpose(x_nchw, (0, 2, 3, 1))
    dn = jax.lax.conv_dimension_numbers(x.shape, params["w1"].shape,
                                        ("NHWC", "HWIO", "NHWC"))
    y1 = jax.lax.conv_general_dilated(x, params["w1"], (1, 1), "SAME",
                                      dimension_numbers=dn)
    y1 = jax.nn.relu(y1 + params["b1"])
    dn2 = jax.lax.conv_dimension_numbers(y1.shape, params["w2"].shape,
                                         ("NHWC", "HWIO", "NHWC"))
    y2 = jax.lax.conv_general_dilated(y1, params["w2"], (1, 1), "SAME",
                                      dimension_numbers=dn2)
    skip = jnp.einsum("nhwi,io->nhwo", x, params["ws"]) + params["bs"]
    y = jax.nn.relu(y2 + params["b2"] + skip)
    return jnp.transpose(y, (0, 3, 1, 2))


if __name__ == "__main__":
    key = jax.random.PRNGKey(0)
    kx, kp = jax.random.split(key)

    batch, in_ch, out_ch, H, W = 2, 4, 8, 16, 16
    x = jax.random.normal(kx, (batch, in_ch, H, W), jnp.float32)
    params = init_structure_encoder_block_params(kp, in_ch, out_ch)

    out = jax.block_until_ready(structure_encoder_block(x, params))
    ref = jax.block_until_ready(_reference(x, params))

    assert out.shape == (batch, out_ch, H, W), out.shape
    assert jnp.allclose(out, ref, atol=1e-4, rtol=1e-4), \
        float(jnp.max(jnp.abs(out - ref)))

    print("KERNEL_OK")
</pallas_src>

<mosaic_0001>
module attributes {stable_mosaic.version = 11 : i64} {
  func.func @_fused_block_kernel(%arg0: i32, %arg1: memref<1x4x362xf32, #tpu.memory_space<vmem>>, %arg2: memref<9x8x4xf32, #tpu.memory_space<vmem>>, %arg3: memref<8x1xf32, #tpu.memory_space<vmem>>, %arg4: memref<9x8x8xf32, #tpu.memory_space<vmem>>, %arg5: memref<8x4xf32, #tpu.memory_space<vmem>>, %arg6: memref<8x1xf32, #tpu.memory_space<vmem>>, %arg7: memref<1x324xf32, #tpu.memory_space<vmem>>, %arg8: memref<1x8x256xf32, #tpu.memory_space<vmem>>, %arg9: memref<8x362xf32, #tpu.memory_space<vmem>>) attributes {dimension_semantics = [#tpu.dimension_semantics<parallel>], iteration_bounds = array<i64: 2>, scalar_prefetch = 0 : i64, scratch_operands = 1 : i64, tpu.core_type = #tpu.core_type<tc>, window_params = [{transform_indices = @transform_0, window_bounds = array<i64: 1, 4, 362>}, {pipeline_mode = #tpu.pipeline_mode<synchronous>, transform_indices = @transform_1, window_bounds = array<i64: 9, 8, 4>}, {pipeline_mode = #tpu.pipeline_mode<synchronous>, transform_indices = @transform_2, window_bounds = array<i64: 8, 1>}, {pipeline_mode = #tpu.pipeline_mode<synchronous>, transform_indices = @transform_3, window_bounds = array<i64: 9, 8, 8>}, {pipeline_mode = #tpu.pipeline_mode<synchronous>, transform_indices = @transform_4, window_bounds = array<i64: 8, 4>}, {pipeline_mode = #tpu.pipeline_mode<synchronous>, transform_indices = @transform_5, window_bounds = array<i64: 8, 1>}, {pipeline_mode = #tpu.pipeline_mode<synchronous>, transform_indices = @transform_6, window_bounds = array<i64: 1, 324>}, {transform_indices = @transform_7, window_bounds = array<i64: 1, 8, 256>}]} {
    %c0 = arith.constant 0 : index
    %c0_0 = arith.constant 0 : index
    %c0_1 = arith.constant 0 : index
    %0 = vector.load %arg1[%c0, %c0_0, %c0_1] : memref<1x4x362xf32, #tpu.memory_space<vmem>>, vector<1x4x362xf32>
    %1 = vector.shape_cast %0 : vector<1x4x362xf32> to vector<4x362xf32>
    %c0_2 = arith.constant 0 : index
    %c0_3 = arith.constant 0 : index
    %c0_4 = arith.constant 0 : index
    %2 = vector.load %arg2[%c0_2, %c0_3, %c0_4] : memref<9x8x4xf32, #tpu.memory_space<vmem>>, vector<9x8x4xf32>
    %c0_5 = arith.constant 0 : index
    %c0_6 = arith.constant 0 : index
    %c0_7 = arith.constant 0 : index
    %3 = vector.load %arg4[%c0_5, %c0_6, %c0_7] : memref<9x8x8xf32, #tpu.memory_space<vmem>>, vector<9x8x8xf32>
    %cst = arith.constant 0.000000e+00 : f32
    %4 = vector.broadcast %cst : f32 to vector<8x324xf32>
    %5 = vector.extract_strided_slice %2 {offsets = [0, 0, 0], sizes = [1, 8, 4], strides = [1, 1, 1]} : vector<9x8x4xf32> to vector<1x8x4xf32>
    %6 = vector.shape_cast %5 : vector<1x8x4xf32> to vector<8x4xf32>
    %7 = vector.extract_strided_slice %1 {offsets = [0, 0], sizes = [4, 324], strides = [1, 1]} : vector<4x362xf32> to vector<4x324xf32>
    %cst_8 = arith.constant dense<0.000000e+00> : vector<8x324xf32>
    %8 = tpu.matmul %6, %7, %cst_8 {dimension_numbers = #tpu.dot_dimension_numbers<[1], [0], [0], [1], [0, 0, 1, 1], [], []>} : vector<8x4xf32>, vector<4x324xf32>, vector<8x324xf32> -> vector<8x324xf32>
    %9 = arith.addf %4, %8 : vector<8x324xf32>
    %10 = vector.extract_strided_slice %2 {offsets = [1, 0, 0], sizes = [1, 8, 4], strides = [1, 1, 1]} : vector<9x8x4xf32> to vector<1x8x4xf32>
    %11 = vector.shape_cast %10 : vector<1x8x4xf32> to vector<8x4xf32>
    %12 = vector.extract_strided_slice %1 {offsets = [0, 1], sizes = [4, 324], strides = [1, 1]} : vector<4x362xf32> to vector<4x324xf32>
    %cst_9 = arith.constant dense<0.000000e+00> : vector<8x324xf32>
    %13 = tpu.matmul %11, %12, %cst_9 {dimension_numbers = #tpu.dot_dimension_numbers<[1], [0], [0], [1], [0, 0, 1, 1], [], []>} : vector<8x4xf32>, vector<4x324xf32>, vector<8x324xf32> -> vector<8x324xf32>
    %14 = arith.addf %9, %13 : vector<8x324xf32>
    %15 = vector.extract_strided_slice %2 {offsets = [2, 0, 0], sizes = [1, 8, 4], strides = [1, 1, 1]} : vector<9x8x4xf32> to vector<1x8x4xf32>
    %16 = vector.shape_cast %15 : vector<1x8x4xf32> to vector<8x4xf32>
    %17 = vector.extract_strided_slice %1 {offsets = [0, 2], sizes = [4, 324], strides = [1, 1]} : vector<4x362xf32> to vector<4x324xf32>
    %cst_10 = arith.constant dense<0.000000e+00> : vector<8x324xf32>
    %18 = tpu.matmul %16, %17, %cst_10 {dimension_numbers = #tpu.dot_dimension_numbers<[1], [0], [0], [1], [0, 0, 1, 1], [], []>} : vector<8x4xf32>, vector<4x324xf32>, vector<8x324xf32> -> vector<8x324xf32>
    %19 = arith.addf %14, %18 : vector<8x324xf32>
    %20 = vector.extract_strided_slice %2 {offsets = [3, 0, 0], sizes = [1, 8, 4], strides = [1, 1, 1]} : vector<9x8x4xf32> to vector<1x8x4xf32>
    %21 = vector.shape_cast %20 : vector<1x8x4xf32> to vector<8x4xf32>
    %22 = vector.extract_strided_slice %1 {offsets = [0, 18], sizes = [4, 324], strides = [1, 1]} : vector<4x362xf32> to vector<4x324xf32>
    %cst_11 = arith.constant dense<0.000000e+00> : vector<8x324xf32>
    %23 = tpu.matmul %21, %22, %cst_11 {dimension_numbers = #tpu.dot_dimension_numbers<[1], [0], [0], [1], [0, 0, 1, 1], [], []>} : vector<8x4xf32>, vector<4x324xf32>, vector<8x324xf32> -> vector<8x324xf32>
    %24 = arith.addf %19, %23 : vector<8x324xf32>
    %25 = vector.extract_strided_slice %2 {offsets = [4, 0, 0], sizes = [1, 8, 4], strides = [1, 1, 1]} : vector<9x8x4xf32> to vector<1x8x4xf32>
    %26 = vector.shape_cast %25 : vector<1x8x4xf32> to vector<8x4xf32>
    %27 = vector.extract_strided_slice %1 {offsets = [0, 19], sizes = [4, 324], strides = [1, 1]} : vector<4x362xf32> to vector<4x324xf32>
    %cst_12 = arith.constant dense<0.000000e+00> : vector<8x324xf32>
    %28 = tpu.matmul %26, %27, %cst_12 {dimension_numbers = #tpu.dot_dimension_numbers<[1], [0], [0], [1], [0, 0, 1, 1], [], []>} : vector<8x4xf32>, vector<4x324xf32>, vector<8x324xf32> -> vector<8x324xf32>
    %29 = arith.addf %24, %28 : vector<8x324xf32>
    %30 = vector.extract_strided_slice %2 {offsets = [5, 0, 0], sizes = [1, 8, 4], strides = [1, 1, 1]} : vector<9x8x4xf32> to vector<1x8x4xf32>
    %31 = vector.shape_cast %30 : vector<1x8x4xf32> to vector<8x4xf32>
    %32 = vector.extract_strided_slice %1 {offsets = [0, 20], sizes = [4, 324], strides = [1, 1]} : vector<4x362xf32> to vector<4x324xf32>
    %cst_13 = arith.constant dense<0.000000e+00> : vector<8x324xf32>
    %33 = tpu.matmul %31, %32, %cst_13 {dimension_numbers = #tpu.dot_dimension_numbers<[1], [0], [0], [1], [0, 0, 1, 1], [], []>} : vector<8x4xf32>, vector<4x324xf32>, vector<8x324xf32> -> vector<8x324xf32>
    %34 = arith.addf %29, %33 : vector<8x324xf32>
    %35 = vector.extract_strided_slice %2 {offsets = [6, 0, 0], sizes = [1, 8, 4], strides = [1, 1, 1]} : vector<9x8x4xf32> to vector<1x8x4xf32>
    %36 = vector.shape_cast %35 : vector<1x8x4xf32> to vector<8x4xf32>
    %37 = vector.extract_strided_slice %1 {offsets = [0, 36], sizes = [4, 324], strides = [1, 1]} : vector<4x362xf32> to vector<4x324xf32>
    %cst_14 = arith.constant dense<0.000000e+00> : vector<8x324xf32>
    %38 = tpu.matmul %36, %37, %cst_14 {dimension_numbers = #tpu.dot_dimension_numbers<[1], [0], [0], [1], [0, 0, 1, 1], [], []>} : vector<8x4xf32>, vector<4x324xf32>, vector<8x324xf32> -> vector<8x324xf32>
    %39 = arith.addf %34, %38 : vector<8x324xf32>
    %40 = vector.extract_strided_slice %2 {offsets = [7, 0, 0], sizes = [1, 8, 4], strides = [1, 1, 1]} : vector<9x8x4xf32> to vector<1x8x4xf32>
    %41 = vector.shape_cast %40 : vector<1x8x4xf32> to vector<8x4xf32>
    %42 = vector.extract_strided_slice %1 {offsets = [0, 37], sizes = [4, 324], strides = [1, 1]} : vector<4x362xf32> to vector<4x324xf32>
    %cst_15 = arith.constant dense<0.000000e+00> : vector<8x324xf32>
    %43 = tpu.matmul %41, %42, %cst_15 {dimension_numbers = #tpu.dot_dimension_numbers<[1], [0], [0], [1], [0, 0, 1, 1], [], []>} : vector<8x4xf32>, vector<4x324xf32>, vector<8x324xf32> -> vector<8x324xf32>
    %44 = arith.addf %39, %43 : vector<8x324xf32>
    %45 = vector.extract_strided_slice %2 {offsets = [8, 0, 0], sizes = [1, 8, 4], strides = [1, 1, 1]} : vector<9x8x4xf32> to vector<1x8x4xf32>
    %46 = vector.shape_cast %45 : vector<1x8x4xf32> to vector<8x4xf32>
    %47 = vector.extract_strided_slice %1 {offsets = [0, 38], sizes = [4, 324], strides = [1, 1]} : vector<4x362xf32> to vector<4x324xf32>
    %cst_16 = arith.constant dense<0.000000e+00> : vector<8x324xf32>
    %48 = tpu.matmul %46, %47, %cst_16 {dimension_numbers = #tpu.dot_dimension_numbers<[1], [0], [0], [1], [0, 0, 1, 1], [], []>} : vector<8x4xf32>, vector<4x324xf32>, vector<8x324xf32> -> vector<8x324xf32>
    %49 = arith.addf %44, %48 : vector<8x324xf32>
    %c0_17 = arith.constant 0 : index
    %c0_18 = arith.constant 0 : index
    %50 = vector.load %arg3[%c0_17, %c0_18] : memref<8x1xf32, #tpu.memory_space<vmem>>, vector<8x1xf32>
    %51 = vector.broadcast %50 : vector<8x1xf32> to vector<8x324xf32>
    %52 = arith.addf %49, %51 : vector<8x324xf32>
    %cst_19 = arith.constant 0.000000e+00 : f32
    %53 = vector.broadcast %cst_19 : f32 to vector<8x324xf32>
    %54 = arith.maximumf %52, %53 : vector<8x324xf32>
    %c0_20 = arith.constant 0 : index
    %c0_21 = arith.constant 0 : index
    %55 = vector.load %arg7[%c0_20, %c0_21] : memref<1x324xf32, #tpu.memory_space<vmem>>, vector<1x324xf32>
    %56 = vector.broadcast %55 : vector<1x324xf32> to vector<8x324xf32>
    %57 = arith.mulf %54, %56 : vector<8x324xf32>
    %cst_22 = arith.constant 0.000000e+00 : f32
    %58 = vector.broadcast %cst_22 : f32 to vector<8x19xf32>
    %c0_23 = arith.constant 0 : index
    %c0_24 = arith.constant 0 : index
    %59 = vector.load %arg9[%c0_23, %c0_24] : memref<8x362xf32, #tpu.memory_space<vmem>>, vector<8x19xf32>
    tpu.vector_store %arg9[%c0_23, %c0_24], %58 {strides = array<i32>} : memref<8x362xf32, #tpu.memory_space<vmem>>, vector<8x19xf32>,
    %cst_25 = arith.constant 0.000000e+00 : f32
    %60 = vector.broadcast %cst_25 : f32 to vector<8x19xf32>
    %c0_26 = arith.constant 0 : index
    %c343 = arith.constant 343 : index
    %61 = vector.load %arg9[%c0_26, %c343] : memref<8x362xf32, #tpu.memory_space<vmem>>, vector<8x19xf32>
    tpu.vector_store %arg9[%c0_26, %c343], %60 {strides = array<i32>} : memref<8x362xf32, #tpu.memory_space<vmem>>, vector<8x19xf32>,
    %c0_27 = arith.constant 0 : index
    %c19 = arith.constant 19 : index
    %62 = vector.load %arg9[%c0_27, %c19] : memref<8x362xf32, #tpu.memory_space<vmem>>, vector<8x324xf32>
    tpu.vector_store %arg9[%c0_27, %c19], %57 {strides = array<i32>} : memref<8x362xf32, #tpu.memory_space<vmem>>, vector<8x324xf32>,
    %c0_28 = arith.constant 0 : index
    %c0_29 = arith.constant 0 : index
    %63 = vector.load %arg5[%c0_28, %c0_29] : memref<8x4xf32, #tpu.memory_space<vmem>>, vector<8x4xf32>
    %64 = vector.extract_strided_slice %1 {offsets = [0, 19], sizes = [4, 324], strides = [1, 1]} : vector<4x362xf32> to vector<4x324xf32>
    %cst_30 = arith.constant dense<0.000000e+00> : vector<8x324xf32>
    %65 = tpu.matmul %63, %64, %cst_30 {dimension_numbers = #tpu.dot_dimension_numbers<[1], [0], [0], [1], [0, 0, 1, 1], [], []>} : vector<8x4xf32>, vector<4x324xf32>, vector<8x324xf32> -> vector<8x324xf32>
    %66 = vector.extract_strided_slice %3 {offsets = [0, 0, 0], sizes = [1, 8, 8], strides = [1, 1, 1]} : vector<9x8x8xf32> to vector<1x8x8xf32>
    %67 = vector.shape_cast %66 : vector<1x8x8xf32> to vector<8x8xf32>
    %c0_31 = arith.constant 0 : index
    %c0_32 = arith.constant 0 : index
    %68 = vector.load %arg9[%c0_31, %c0_32] : memref<8x362xf32, #tpu.memory_space<vmem>>, vector<8x324xf32>
    %cst_33 = arith.constant dense<0.000000e+00> : vector<8x324xf32>
    %69 = tpu.matmul %67, %68, %cst_33 {dimension_numbers = #tpu.dot_dimension_numbers<[1], [0], [0], [1], [0, 0, 1, 1], [], []>} : vector<8x8xf32>, vector<8x324xf32>, vector<8x324xf32> -> vector<8x324xf32>
    %70 = arith.addf %65, %69 : vector<8x324xf32>
    %71 = vector.extract_strided_slice %3 {offsets = [1, 0, 0], sizes = [1, 8, 8], strides = [1, 1, 1]} : vector<9x8x8xf32> to vector<1x8x8xf32>
    %72 = vector.shape_cast %71 : vector<1x8x8xf32> to vector<8x8xf32>
    %c0_34 = arith.constant 0 : index
    %c1 = arith.constant 1 : index
    %73 = vector.load %arg9[%c0_34, %c1] : memref<8x362xf32, #tpu.memory_space<vmem>>, vector<8x324xf32>
    %cst_35 = arith.constant dense<0.000000e+00> : vector<8x324xf32>
    %74 = tpu.matmul %72, %73, %cst_35 {dimension_numbers = #tpu.dot_dimension_numbers<[1], [0], [0], [1], [0, 0, 1, 1], [], []>} : vector<8x8xf32>, vector<8x324xf32>, vector<8x324xf32> -> vector<8x324xf32>
    %75 = arith.addf %70, %74 : vector<8x324xf32>
    %76 = vector.extract_strided_slice %3 {offsets = [2, 0, 0], sizes = [1, 8, 8], strides = [1, 1, 1]} : vector<9x8x8xf32> to vector<1x8x8xf32>
    %77 = vector.shape_cast %76 : vector<1x8x8xf32> to vector<8x8xf32>
    %c0_36 = arith.constant 0 : index
    %c2 = arith.constant 2 : index
    %78 = vector.load %arg9[%c0_36, %c2] : memref<8x362xf32, #tpu.memory_space<vmem>>, vector<8x324xf32>
    %cst_37 = arith.constant dense<0.000000e+00> : vector<8x324xf32>
    %79 = tpu.matmul %77, %78, %cst_37 {dimension_numbers = #tpu.dot_dimension_numbers<[1], [0], [0], [1], [0, 0, 1, 1], [], []>} : vector<8x8xf32>, vector<8x324xf32>, vector<8x324xf32> -> vector<8x324xf32>
    %80 = arith.addf %75, %79 : vector<8x324xf32>
    %81 = vector.extract_strided_slice %3 {offsets = [3, 0, 0], sizes = [1, 8, 8], strides = [1, 1, 1]} : vector<9x8x8xf32> to vector<1x8x8xf32>
    %82 = vector.shape_cast %81 : vector<1x8x8xf32> to vector<8x8xf32>
    %c0_38 = arith.constant 0 : index
    %c18 = arith.constant 18 : index
    %83 = vector.load %arg9[%c0_38, %c18] : memref<8x362xf32, #tpu.memory_space<vmem>>, vector<8x324xf32>
    %cst_39 = arith.constant dense<0.000000e+00> : vector<8x324xf32>
    %84 = tpu.matmul %82, %83, %cst_39 {dimension_numbers = #tpu.dot_dimension_numbers<[1], [0], [0], [1], [0, 0, 1, 1], [], []>} : vector<8x8xf32>, vector<8x324xf32>, vector<8x324xf32> -> vector<8x324xf32>
    %85 = arith.addf %80, %84 : vector<8x324xf32>
    %86 = vector.extract_strided_slice %3 {offsets = [4, 0, 0], sizes = [1, 8, 8], strides = [1, 1, 1]} : vector<9x8x8xf32> to vector<1x8x8xf32>
    %87 = vector.shape_cast %86 : vector<1x8x8xf32> to vector<8x8xf32>
    %c0_40 = arith.constant 0 : index
    %c19_41 = arith.constant 19 : index
    %88 = vector.load %arg9[%c0_40, %c19_41] : memref<8x362xf32, #tpu.memory_space<vmem>>, vector<8x324xf32>
    %cst_42 = arith.constant dense<0.000000e+00> : vector<8x324xf32>
    %89 = tpu.matmul %87, %88, %cst_42 {dimension_numbers = #tpu.dot_dimension_numbers<[1], [0], [0], [1], [0, 0, 1, 1], [], []>} : vector<8x8xf32>, vector<8x324xf32>, vector<8x324xf32> -> vector<8x324xf32>
    %90 = arith.addf %85, %89 : vector<8x324xf32>
    %91 = vector.extract_strided_slice %3 {offsets = [5, 0, 0], sizes = [1, 8, 8], strides = [1, 1, 1]} : vector<9x8x8xf32> to vector<1x8x8xf32>
    %92 = vector.shape_cast %91 : vector<1x8x8xf32> to vector<8x8xf32>
    %c0_43 = arith.constant 0 : index
    %c20 = arith.constant 20 : index
    %93 = vector.load %arg9[%c0_43, %c20] : memref<8x362xf32, #tpu.memory_space<vmem>>, vector<8x324xf32>
    %cst_44 = arith.constant dense<0.000000e+00> : vector<8x324xf32>
    %94 = tpu.matmul %92, %93, %cst_44 {dimension_numbers = #tpu.dot_dimension_numbers<[1], [0], [0], [1], [0, 0, 1, 1], [], []>} : vector<8x8xf32>, vector<8x324xf32>, vector<8x324xf32> -> vector<8x324xf32>
    %95 = arith.addf %90, %94 : vector<8x324xf32>
    %96 = vector.extract_strided_slice %3 {offsets = [6, 0, 0], sizes = [1, 8, 8], strides = [1, 1, 1]} : vector<9x8x8xf32> to vector<1x8x8xf32>
    %97 = vector.shape_cast %96 : vector<1x8x8xf32> to vector<8x8xf32>
    %c0_45 = arith.constant 0 : index
    %c36 = arith.constant 36 : index
    %98 = vector.load %arg9[%c0_45, %c36] : memref<8x362xf32, #tpu.memory_space<vmem>>, vector<8x324xf32>
    %cst_46 = arith.constant dense<0.000000e+00> : vector<8x324xf32>
    %99 = tpu.matmul %97, %98, %cst_46 {dimension_numbers = #tpu.dot_dimension_numbers<[1], [0], [0], [1], [0, 0, 1, 1], [], []>} : vector<8x8xf32>, vector<8x324xf32>, vector<8x324xf32> -> vector<8x324xf32>
    %100 = arith.addf %95, %99 : vector<8x324xf32>
    %101 = vector.extract_strided_slice %3 {offsets = [7, 0, 0], sizes = [1, 8, 8], strides = [1, 1, 1]} : vector<9x8x8xf32> to vector<1x8x8xf32>
    %102 = vector.shape_cast %101 : vector<1x8x8xf32> to vector<8x8xf32>
    %c0_47 = arith.constant 0 : index
    %c37 = arith.constant 37 : index
    %103 = vector.load %arg9[%c0_47, %c37] : memref<8x362xf32, #tpu.memory_space<vmem>>, vector<8x324xf32>
    %cst_48 = arith.constant dense<0.000000e+00> : vector<8x324xf32>
    %104 = tpu.matmul %102, %103, %cst_48 {dimension_numbers = #tpu.dot_dimension_numbers<[1], [0], [0], [1], [0, 0, 1, 1], [], []>} : vector<8x8xf32>, vector<8x324xf32>, vector<8x324xf32> -> vector<8x324xf32>
    %105 = arith.addf %100, %104 : vector<8x324xf32>
    %106 = vector.extract_strided_slice %3 {offsets = [8, 0, 0], sizes = [1, 8, 8], strides = [1, 1, 1]} : vector<9x8x8xf32> to vector<1x8x8xf32>
    %107 = vector.shape_cast %106 : vector<1x8x8xf32> to vector<8x8xf32>
    %c0_49 = arith.constant 0 : index
    %c38 = arith.constant 38 : index
    %108 = vector.load %arg9[%c0_49, %c38] : memref<8x362xf32, #tpu.memory_space<vmem>>, vector<8x324xf32>
    %cst_50 = arith.constant dense<0.000000e+00> : vector<8x324xf32>
    %109 = tpu.matmul %107, %108, %cst_50 {dimension_numbers = #tpu.dot_dimension_numbers<[1], [0], [0], [1], [0, 0, 1, 1], [], []>} : vector<8x8xf32>, vector<8x324xf32>, vector<8x324xf32> -> vector<8x324xf32>
    %110 = arith.addf %105, %109 : vector<8x324xf32>
    %c0_51 = arith.constant 0 : index
    %c0_52 = arith.constant 0 : index
    %111 = vector.load %arg6[%c0_51, %c0_52] : memref<8x1xf32, #tpu.memory_space<vmem>>, vector<8x1xf32>
    %112 = vector.broadcast %111 : vector<8x1xf32> to vector<8x324xf32>
    %113 = arith.addf %110, %112 : vector<8x324xf32>
    %cst_53 = arith.constant 0.000000e+00 : f32
    %114 = vector.broadcast %cst_53 : f32 to vector<8x324xf32>
    %115 = arith.maximumf %113, %114 : vector<8x324xf32>
    %116 = vector.extract_strided_slice %115 {offsets = [0, 19], sizes = [8, 16], strides = [1, 1]} : vector<8x324xf32> to vector<8x16xf32>
    %c0_54 = arith.constant 0 : index
    %c0_55 = arith.constant 0 : index
    %c0_56 = arith.constant 0 : index
    %117 = vector.load %arg8[%c0_54, %c0_55, %c0_56] : memref<1x8x256xf32, #tpu.memory_space<vmem>>, vector<1x8x16xf32>
    %118 = vector.shape_cast %117 : vector<1x8x16xf32> to vector<8x16xf32>
    %119 = vector.shape_cast %116 : vector<8x16xf32> to vector<1x8x16xf32>
    tpu.vector_store %arg8[%c0_54, %c0_55, %c0_56], %119 {strides = array<i32>} : memref<1x8x256xf32, #tpu.memory_space<vmem>>, vector<1x8x16xf32>,
    %120 = vector.extract_strided_slice %115 {offsets = [0, 37], sizes = [8, 16], strides = [1, 1]} : vector<8x324xf32> to vector<8x16xf32>
    %c0_57 = arith.constant 0 : index
    %c0_58 = arith.constant 0 : index
    %c16 = arith.constant 16 : index
    %121 = vector.load %arg8[%c0_57, %c0_58, %c16] : memref<1x8x256xf32, #tpu.memory_space<vmem>>, vector<1x8x16xf32>
    %122 = vector.shape_cast %121 : vector<1x8x16xf32> to vector<8x16xf32>
    %123 = vector.shape_cast %120 : vector<8x16xf32> to vector<1x8x16xf32>
    tpu.vector_store %arg8[%c0_57, %c0_58, %c16], %123 {strides = array<i32>} : memref<1x8x256xf32, #tpu.memory_space<vmem>>, vector<1x8x16xf32>,
    %124 = vector.extract_strided_slice %115 {offsets = [0, 55], sizes = [8, 16], strides = [1, 1]} : vector<8x324xf32> to vector<8x16xf32>
    %c0_59 = arith.constant 0 : index
    %c0_60 = arith.constant 0 : index
    %c32 = arith.constant 32 : index
    %125 = vector.load %arg8[%c0_59, %c0_60, %c32] : memref<1x8x256xf32, #tpu.memory_space<vmem>>, vector<1x8x16xf32>
    %126 = vector.shape_cast %125 : vector<1x8x16xf32> to vector<8x16xf32>
    %127 = vector.shape_cast %124 : vector<8x16xf32> to vector<1x8x16xf32>
    tpu.vector_store %arg8[%c0_59, %c0_60, %c32], %127 {strides = array<i32>} : memref<1x8x256xf32, #tpu.memory_space<vmem>>, vector<1x8x16xf32>,
    %128 = vector.extract_strided_slice %115 {offsets = [0, 73], sizes = [8, 16], strides = [1, 1]} : vector<8x324xf32> to vector<8x16xf32>
    %c0_61 = arith.constant 0 : index
    %c0_62 = arith.constant 0 : index
    %c48 = arith.constant 48 : index
    %129 = vector.load %arg8[%c0_61, %c0_62, %c48] : memref<1x8x256xf32, #tpu.memory_space<vmem>>, vector<1x8x16xf32>
    %130 = vector.shape_cast %129 : vector<1x8x16xf32> to vector<8x16xf32>
    %131 = vector.shape_cast %128 : vector<8x16xf32> to vector<1x8x16xf32>
    tpu.vector_store %arg8[%c0_61, %c0_62, %c48], %131 {strides = array<i32>} : memref<1x8x256xf32, #tpu.memory_space<vmem>>, vector<1x8x16xf32>,
    %132 = vector.extract_strided_slice %115 {offsets = [0, 91], sizes = [8, 16], strides = [1, 1]} : vector<8x324xf32> to vector<8x16xf32>
    %c0_63 = arith.constant 0 : index
    %c0_64 = arith.constant 0 : index
    %c64 = arith.constant 64 : index
    %133 = vector.load %arg8[%c0_63, %c0_64, %c64] : memref<1x8x256xf32, #tpu.memory_space<vmem>>, vector<1x8x16xf32>
    %134 = vector.shape_cast %133 : vector<1x8x16xf32> to vector<8x16xf32>
    %135 = vector.shape_cast %132 : vector<8x16xf32> to vector<1x8x16xf32>
    tpu.vector_store %arg8[%c0_63, %c0_64, %c64], %135 {strides = array<i32>} : memref<1x8x256xf32, #tpu.memory_space<vmem>>, vector<1x8x16xf32>,
    %136 = vector.extract_strided_slice %115 {offsets = [0, 109], sizes = [8, 16], strides = [1, 1]} : vector<8x324xf32> to vector<8x16xf32>
    %c0_65 = arith.constant 0 : index
    %c0_66 = arith.constant 0 : index
    %c80 = arith.constant 80 : index
    %137 = vector.load %arg8[%c0_65, %c0_66, %c80] : memref<1x8x256xf32, #tpu.memory_space<vmem>>, vector<1x8x16xf32>
    %138 = vector.shape_cast %137 : vector<1x8x16xf32> to vector<8x16xf32>
    %139 = vector.shape_cast %136 : vector<8x16xf32> to vector<1x8x16xf32>
    tpu.vector_store %arg8[%c0_65, %c0_66, %c80], %139 {strides = array<i32>} : memref<1x8x256xf32, #tpu.memory_space<vmem>>, vector<1x8x16xf32>,
    %140 = vector.extract_strided_slice %115 {offsets = [0, 127], sizes = [8, 16], strides = [1, 1]} : vector<8x324xf32> to vector<8x16xf32>
    %c0_67 = arith.constant 0 : index
    %c0_68 = arith.constant 0 : index
    %c96 = arith.constant 96 : index
    %141 = vector.load %arg8[%c0_67, %c0_68, %c96] : memref<1x8x256xf32, #tpu.memory_space<vmem>>, vector<1x8x16xf32>
    %142 = vector.shape_cast %141 : vector<1x8x16xf32> to vector<8x16xf32>
    %143 = vector.shape_cast %140 : vector<8x16xf32> to vector<1x8x16xf32>
    tpu.vector_store %arg8[%c0_67, %c0_68, %c96], %143 {strides = array<i32>} : memref<1x8x256xf32, #tpu.memory_space<vmem>>, vector<1x8x16xf32>,
    %144 = vector.extract_strided_slice %115 {offsets = [0, 145], sizes = [8, 16], strides = [1, 1]} : vector<8x324xf32> to vector<8x16xf32>
    %c0_69 = arith.constant 0 : index
    %c0_70 = arith.constant 0 : index
    %c112 = arith.constant 112 : index
    %145 = vector.load %arg8[%c0_69, %c0_70, %c112] : memref<1x8x256xf32, #tpu.memory_space<vmem>>, vector<1x8x16xf32>
    %146 = vector.shape_cast %145 : vector<1x8x16xf32> to vector<8x16xf32>
    %147 = vector.shape_cast %144 : vector<8x16xf32> to vector<1x8x16xf32>
    tpu.vector_store %arg8[%c0_69, %c0_70, %c112], %147 {strides = array<i32>} : memref<1x8x256xf32, #tpu.memory_space<vmem>>, vector<1x8x16xf32>,
    %148 = vector.extract_strided_slice %115 {offsets = [0, 163], sizes = [8, 16], strides = [1, 1]} : vector<8x324xf32> to vector<8x16xf32>
    %c0_71 = arith.constant 0 : index
    %c0_72 = arith.constant 0 : index
    %c128 = arith.constant 128 : index
    %149 = vector.load %arg8[%c0_71, %c0_72, %c128] : memref<1x8x256xf32, #tpu.memory_space<vmem>>, vector<1x8x16xf32>
    %150 = vector.shape_cast %149 : vector<1x8x16xf32> to vector<8x16xf32>
    %151 = vector.shape_cast %148 : vector<8x16xf32> to vector<1x8x16xf32>
    tpu.vector_store %arg8[%c0_71, %c0_72, %c128], %151 {strides = array<i32>} : memref<1x8x256xf32, #tpu.memory_space<vmem>>, vector<1x8x16xf32>,
    %152 = vector.extract_strided_slice %115 {offsets = [0, 181], sizes = [8, 16], strides = [1, 1]} : vector<8x324xf32> to vector<8x16xf32>
    %c0_73 = arith.constant 0 : index
    %c0_74 = arith.constant 0 : index
    %c144 = arith.constant 144 : index
    %153 = vector.load %arg8[%c0_73, %c0_74, %c144] : memref<1x8x256xf32, #tpu.memory_space<vmem>>, vector<1x8x16xf32>
    %154 = vector.shape_cast %153 : vector<1x8x16xf32> to vector<8x16xf32>
    %155 = vector.shape_cast %152 : vector<8x16xf32> to vector<1x8x16xf32>
    tpu.vector_store %arg8[%c0_73, %c0_74, %c144], %155 {strides = array<i32>} : memref<1x8x256xf32, #tpu.memory_space<vmem>>, vector<1x8x16xf32>,
    %156 = vector.extract_strided_slice %115 {offsets = [0, 199], sizes = [8, 16], strides = [1, 1]} : vector<8x324xf32> to vector<8x16xf32>
    %c0_75 = arith.constant 0 : index
    %c0_76 = arith.constant 0 : index
    %c160 = arith.constant 160 : index
    %157 = vector.load %arg8[%c0_75, %c0_76, %c160] : memref<1x8x256xf32, #tpu.memory_space<vmem>>, vector<1x8x16xf32>
    %158 = vector.shape_cast %157 : vector<1x8x16xf32> to vector<8x16xf32>
    %159 = vector.shape_cast %156 : vector<8x16xf32> to vector<1x8x16xf32>
    tpu.vector_store %arg8[%c0_75, %c0_76, %c160], %159 {strides = array<i32>} : memref<1x8x256xf32, #tpu.memory_space<vmem>>, vector<1x8x16xf32>,
    %160 = vector.extract_strided_slice %115 {offsets = [0, 217], sizes = [8, 16], strides = [1, 1]} : vector<8x324xf32> to vector<8x16xf32>
    %c0_77 = arith.constant 0 : index
    %c0_78 = arith.constant 0 : index
    %c176 = arith.constant 176 : index
    %161 = vector.load %arg8[%c0_77, %c0_78, %c176] : memref<1x8x256xf32, #tpu.memory_space<vmem>>, vector<1x8x16xf32>
    %162 = vector.shape_cast %161 : vector<1x8x16xf32> to vector<8x16xf32>
    %163 = vector.shape_cast %160 : vector<8x16xf32> to vector<1x8x16xf32>
    tpu.vector_store %arg8[%c0_77, %c0_78, %c176], %163 {strides = array<i32>} : memref<1x8x256xf32, #tpu.memory_space<vmem>>, vector<1x8x16xf32>,
    %164 = vector.extract_strided_slice %115 {offsets = [0, 235], sizes = [8, 16], strides = [1, 1]} : vector<8x324xf32> to vector<8x16xf32>
    %c0_79 = arith.constant 0 : index
    %c0_80 = arith.constant 0 : index
    %c192 = arith.constant 192 : index
    %165 = vector.load %arg8[%c0_79, %c0_80, %c192] : memref<1x8x256xf32, #tpu.memory_space<vmem>>, vector<1x8x16xf32>
    %166 = vector.shape_cast %165 : vector<1x8x16xf32> to vector<8x16xf32>
    %167 = vector.shape_cast %164 : vector<8x16xf32> to vector<1x8x16xf32>
    tpu.vector_store %arg8[%c0_79, %c0_80, %c192], %167 {strides = array<i32>} : memref<1x8x256xf32, #tpu.memory_space<vmem>>, vector<1x8x16xf32>,
    %168 = vector.extract_strided_slice %115 {offsets = [0, 253], sizes = [8, 16], strides = [1, 1]} : vector<8x324xf32> to vector<8x16xf32>
    %c0_81 = arith.constant 0 : index
    %c0_82 = arith.constant 0 : index
    %c208 = arith.constant 208 : index
    %169 = vector.load %arg8[%c0_81, %c0_82, %c208] : memref<1x8x256xf32, #tpu.memory_space<vmem>>, vector<1x8x16xf32>
    %170 = vector.shape_cast %169 : vector<1x8x16xf32> to vector<8x16xf32>
    %171 = vector.shape_cast %168 : vector<8x16xf32> to vector<1x8x16xf32>
    tpu.vector_store %arg8[%c0_81, %c0_82, %c208], %171 {strides = array<i32>} : memref<1x8x256xf32, #tpu.memory_space<vmem>>, vector<1x8x16xf32>,
    %172 = vector.extract_strided_slice %115 {offsets = [0, 271], sizes = [8, 16], strides = [1, 1]} : vector<8x324xf32> to vector<8x16xf32>
    %c0_83 = arith.constant 0 : index
    %c0_84 = arith.constant 0 : index
    %c224 = arith.constant 224 : index
    %173 = vector.load %arg8[%c0_83, %c0_84, %c224] : memref<1x8x256xf32, #tpu.memory_space<vmem>>, vector<1x8x16xf32>
    %174 = vector.shape_cast %173 : vector<1x8x16xf32> to vector<8x16xf32>
    %175 = vector.shape_cast %172 : vector<8x16xf32> to vector<1x8x16xf32>
    tpu.vector_store %arg8[%c0_83, %c0_84, %c224], %175 {strides = array<i32>} : memref<1x8x256xf32, #tpu.memory_space<vmem>>, vector<1x8x16xf32>,
    %176 = vector.extract_strided_slice %115 {offsets = [0, 289], sizes = [8, 16], strides = [1, 1]} : vector<8x324xf32> to vector<8x16xf32>
    %c0_85 = arith.constant 0 : index
    %c0_86 = arith.constant 0 : index
    %c240 = arith.constant 240 : index
    %177 = vector.load %arg8[%c0_85, %c0_86, %c240] : memref<1x8x256xf32, #tpu.memory_space<vmem>>, vector<1x8x16xf32>
    %178 = vector.shape_cast %177 : vector<1x8x16xf32> to vector<8x16xf32>
    %179 = vector.shape_cast %176 : vector<8x16xf32> to vector<1x8x16xf32>
    tpu.vector_store %arg8[%c0_85, %c0_86, %c240], %179 {strides = array<i32>} : memref<1x8x256xf32, #tpu.memory_space<vmem>>, vector<1x8x16xf32>,
    return
  }
  func.func @transform_0(%arg0: i32) -> (i32, i32, i32) {
    %c0_i32 = arith.constant 0 : i32
    %c0_i32_0 = arith.constant 0 : i32
    %c0_i32_1 = arith.constant 0 : i32
    return %arg0, %c0_i32, %c0_i32_0 : i32, i32, i32
  }
  func.func @transform_1(%arg0: i32) -> (i32, i32, i32) {
    %c0_i32 = arith.constant 0 : i32
    %c0_i32_0 = arith.constant 0 : i32
    %c0_i32_1 = arith.constant 0 : i32
    %c0_i32_2 = arith.constant 0 : i32
    return %c0_i32, %c0_i32_0, %c0_i32_1 : i32, i32, i32
  }
  func.func @transform_2(%arg0: i32) -> (i32, i32) {
    %c0_i32 = arith.constant 0 : i32
    %c0_i32_0 = arith.constant 0 : i32
    %c0_i32_1 = arith.constant 0 : i32
    return %c0_i32, %c0_i32_0 : i32, i32
  }
  func.func @transform_3(%arg0: i32) -> (i32, i32, i32) {
    %c0_i32 = arith.constant 0 : i32
    %c0_i32_0 = arith.constant 0 : i32
    %c0_i32_1 = arith.constant 0 : i32
    %c0_i32_2 = arith.constant 0 : i32
    return %c0_i32, %c0_i32_0, %c0_i32_1 : i32, i32, i32
  }
  func.func @transform_4(%arg0: i32) -> (i32, i32) {
    %c0_i32 = arith.constant 0 : i32
    %c0_i32_0 = arith.constant 0 : i32
    %c0_i32_1 = arith.constant 0 : i32
    return %c0_i32, %c0_i32_0 : i32, i32
  }
  func.func @transform_5(%arg0: i32) -> (i32, i32) {
    %c0_i32 = arith.constant 0 : i32
    %c0_i32_0 = arith.constant 0 : i32
    %c0_i32_1 = arith.constant 0 : i32
    return %c0_i32, %c0_i32_0 : i32, i32
  }
  func.func @transform_6(%arg0: i32) -> (i32, i32) {
    %c0_i32 = arith.constant 0 : i32
    %c0_i32_0 = arith.constant 0 : i32
    %c0_i32_1 = arith.constant 0 : i32
    return %c0_i32, %c0_i32_0 : i32, i32
  }
  func.func @transform_7(%arg0: i32) -> (i32, i32, i32) {
    %c0_i32 = arith.constant 0 : i32
    %c0_i32_0 = arith.constant 0 : i32
    %c0_i32_1 = arith.constant 0 : i32
    return %arg0, %c0_i32, %c0_i32_0 : i32, i32, i32
  }
}

</mosaic_0001>

<llo_original>
// kernel: structure_encoder_block.1
$region0: #{structure_encoder_block.1}
  #allocation0 [shape = 'u32[]', space=smem, size = 0x4, offset = 0x4, fixed_abs, tag = 'smem constant byte address 0x4 - core index']
  #allocation1 [shape = 'u32[144,128]{1,0:T(1,128)}', space=vmem, size = 0x12000, scoped, tag = 'internal scratch']
  #allocation2 [shape = 'f32[8,362]{1,0:T(8,128)}', space=vmem, size = 0x3000, scoped, tag = 'scratch operand']
  %s0 = inlined_call_operand.vmem [shape: f32[2,4,362], index: 0, kind: input, shape index: {}]
  %s1 = inlined_call_operand.vmem [shape: f32[9,8,4], index: 1, kind: input, shape index: {}]
  %s2 = inlined_call_operand.vmem [shape: f32[8,1], index: 2, kind: input, shape index: {}]
  %s3 = inlined_call_operand.vmem [shape: f32[9,8,8], index: 3, kind: input, shape index: {}]
  %s4 = inlined_call_operand.vmem [shape: f32[8,4], index: 4, kind: input, shape index: {}]
  %s5 = inlined_call_operand.vmem [shape: f32[8,1], index: 5, kind: input, shape index: {}]
  %s6 = inlined_call_operand.vmem [shape: f32[1,324], index: 6, kind: input, shape index: {}]
  %s7 = inlined_call_operand.vmem [shape: f32[2,8,256], index: 7, kind: output, shape index: {}]
  %s8 = sld [smem:[#allocation0]]
  $region61: #{structure_encoder_block.1} parent=0
    _
  %s10 = ssub.s32 1, %s8
  %s11 = scalar_select 0, %s10, %s8
  loop: start=0, step=1, limit=4
  $region2: #{structure_encoder_block.1} parent=0 // loop_pre_header
    _
  $region3: #{structure_encoder_block.1} parent=0 // loop_header
    %s13 = sphi 0, %s17
    %p14 = scmp.ge.s32.totalorder %s13, 4
    %s23 = sphi 0, %s25
    %s26 = sphi 0, %s23
    %s27 = sphi 0, %s26
    %s43 = sphi 0, %s27
    %s47 = sphi 0, %s47
    %s49 = sphi 0, %s47
    %s50 = sphi 0, %s49
    %s64 = sphi 0, %s50
    %s68 = sphi 0, %s68
    %s70 = sphi 0, %s68
    %s71 = sphi 0, %s70
    %s85 = sphi 0, %s71
    %s89 = sphi 0, %s89
    %s91 = sphi 0, %s89
    %s92 = sphi 0, %s91
    %s106 = sphi 0, %s92
    %s110 = sphi 0, %s110
    %s112 = sphi 0, %s110
    %s113 = sphi 0, %s112
    %s127 = sphi 0, %s113
    %s131 = sphi 0, %s131
    %s133 = sphi 0, %s131
    %s134 = sphi 0, %s133
    %s148 = sphi 0, %s134
    %s152 = sphi 0, %s152
    %s154 = sphi 0, %s152
    %s155 = sphi 0, %s154
    %s169 = sphi 0, %s155
    %s175 = sphi 0, %s177
    %s178 = sphi 0, %s175
    %s179 = sphi 0, %s178
    %s195 = sphi 0, %s179
  $region4: #{structure_encoder_block.1} parent=0 // loop_header_branch
    %16 = sbr.rel (%p14) target = $region8
  $region5: #{structure_encoder_block.1} parent=0 // loop_body
    %s18 = ssub.s32 %s13, 1
    %s19 = ssub.s32 %s13, 2
    %s20 = sadd.s32 %s13, 1
    %s21 = ssub.s32 %s13, %s20
    %p22 = scmp.eq.s32.totalorder %s21, 0
    %s24 = sadd.s32 %s23, 1
    %s25 = scalar_select %p22, %s23, %s24
    %p28 = pneg %p22
    %p29 = scmp.eq.s32.totalorder %s13, 1
    %p30 = por %p28, %p29
    %p31 = scmp.ne.s32.totalorder %s23, %s26
    %p32 = scmp.eq.s32.totalorder %s13, 0
    %p33 = por %p31, %p32
    %p34 = scmp.ne.s32.totalorder %s23, %s26
    %p35 = scmp.eq.s32.totalorder %s18, 1
    %p36 = por %p34, %p35
    %p37 = scmp.ne.s32.totalorder %s26, %s27
    %p38 = scmp.eq.s32.totalorder %s18, 0
    %p39 = por %p37, %p38
    %p40 = scmp.ne.s32.totalorder %s26, %s27
    %p41 = scmp.eq.s32.totalorder %s19, 1
    %p42 = por %p40, %p41
    %p44 = scmp.ne.s32.totalorder %s27, %s43
    %p45 = scmp.eq.s32.totalorder %s19, 0
    %p46 = por %p44, %p45
    %s48 = sadd.s32 %s47, 1
    %p51 = scmp.eq.s32.totalorder %s13, 1
    %p52 = scmp.ne.s32.totalorder %s47, %s49
    %p53 = scmp.eq.s32.totalorder %s13, 0
    %p54 = por %p52, %p53
    %p55 = scmp.ne.s32.totalorder %s47, %s49
    %p56 = scmp.eq.s32.totalorder %s18, 1
    %p57 = por %p55, %p56
    %p58 = scmp.ne.s32.totalorder %s49, %s50
    %p59 = scmp.eq.s32.totalorder %s18, 0
    %p60 = por %p58, %p59
    %p61 = scmp.ne.s32.totalorder %s49, %s50
    %p62 = scmp.eq.s32.totalorder %s19, 1
    %p63 = por %p61, %p62
    %p65 = scmp.ne.s32.totalorder %s50, %s64
    %p66 = scmp.eq.s32.totalorder %s19, 0
    %p67 = por %p65, %p66
    %s69 = sadd.s32 %s68, 1
    %p72 = scmp.eq.s32.totalorder %s13, 1
    %p73 = scmp.ne.s32.totalorder %s68, %s70
    %p74 = scmp.eq.s32.totalorder %s13, 0
    %p75 = por %p73, %p74
    %p76 = scmp.ne.s32.totalorder %s68, %s70
    %p77 = scmp.eq.s32.totalorder %s18, 1
    %p78 = por %p76, %p77
    %p79 = scmp.ne.s32.totalorder %s70, %s71
    %p80 = scmp.eq.s32.totalorder %s18, 0
    %p81 = por %p79, %p80
    %p82 = scmp.ne.s32.totalorder %s70, %s71
    %p83 = scmp.eq.s32.totalorder %s19, 1
    %p84 = por %p82, %p83
    %p86 = scmp.ne.s32.totalorder %s71, %s85
    %p87 = scmp.eq.s32.totalorder %s19, 0
    %p88 = por %p86, %p87
    %s90 = sadd.s32 %s89, 1
    %p93 = scmp.eq.s32.totalorder %s13, 1
    %p94 = scmp.ne.s32.totalorder %s89, %s91
    %p95 = scmp.eq.s32.totalorder %s13, 0
    %p96 = por %p94, %p95
    %p97 = scmp.ne.s32.totalorder %s89, %s91
    %p98 = scmp.eq.s32.totalorder %s18, 1
    %p99 = por %p97, %p98
    %p100 = scmp.ne.s32.totalorder %s91, %s92
    %p101 = scmp.eq.s32.totalorder %s18, 0
    %p102 = por %p100, %p101
    %p103 = scmp.ne.s32.totalorder %s91, %s92
    %p104 = scmp.eq.s32.totalorder %s19, 1
    %p105 = por %p103, %p104
    %p107 = scmp.ne.s32.totalorder %s92, %s106
    %p108 = scmp.eq.s32.totalorder %s19, 0
    %p109 = por %p107, %p108
    %s111 = sadd.s32 %s110, 1
    %p114 = scmp.eq.s32.totalorder %s13, 1
    %p115 = scmp.ne.s32.totalorder %s110, %s112
    %p116 = scmp.eq.s32.totalorder %s13, 0
    %p117 = por %p115, %p116
    %p118 = scmp.ne.s32.totalorder %s110, %s112
    %p119 = scmp.eq.s32.totalorder %s18, 1
    %p120 = por %p118, %p119
    %p121 = scmp.ne.s32.totalorder %s112, %s113
    %p122 = scmp.eq.s32.totalorder %s18, 0
    %p123 = por %p121, %p122
    %p124 = scmp.ne.s32.totalorder %s112, %s113
    %p125 = scmp.eq.s32.totalorder %s19, 1
    %p126 = por %p124, %p125
    %p128 = scmp.ne.s32.totalorder %s113, %s127
    %p129 = scmp.eq.s32.totalorder %s19, 0
    %p130 = por %p128, %p129
    %s132 = sadd.s32 %s131, 1
    %p135 = scmp.eq.s32.totalorder %s13, 1
    %p136 = scmp.ne.s32.totalorder %s131, %s133
    %p137 = scmp.eq.s32.totalorder %s13, 0
    %p138 = por %p136, %p137
    %p139 = scmp.ne.s32.totalorder %s131, %s133
    %p140 = scmp.eq.s32.totalorder %s18, 1
    %p141 = por %p139, %p140
    %p142 = scmp.ne.s32.totalorder %s133, %s134
    %p143 = scmp.eq.s32.totalorder %s18, 0
    %p144 = por %p142, %p143
    %p145 = scmp.ne.s32.totalorder %s133, %s134
    %p146 = scmp.eq.s32.totalorder %s19, 1
    %p147 = por %p145, %p146
    %p149 = scmp.ne.s32.totalorder %s134, %s148
    %p150 = scmp.eq.s32.totalorder %s19, 0
    %p151 = por %p149, %p150
    %s153 = sadd.s32 %s152, 1
    %p156 = scmp.eq.s32.totalorder %s13, 1
    %p157 = scmp.ne.s32.totalorder %s152, %s154
    %p158 = scmp.eq.s32.totalorder %s13, 0
    %p159 = por %p157, %p158
    %p160 = scmp.ne.s32.totalorder %s152, %s154
    %p161 = scmp.eq.s32.totalorder %s18, 1
    %p162 = por %p160, %p161
    %p163 = scmp.ne.s32.totalorder %s154, %s155
    %p164 = scmp.eq.s32.totalorder %s18, 0
    %p165 = por %p163, %p164
    %p166 = scmp.ne.s32.totalorder %s154, %s155
    %p167 = scmp.eq.s32.totalorder %s19, 1
    %p168 = por %p166, %p167
    %p170 = scmp.ne.s32.totalorder %s155, %s169
    %p171 = scmp.eq.s32.totalorder %s19, 0
    %p172 = por %p170, %p171
    %s173 = ssub.s32 %s13, %s20
    %p174 = scmp.eq.s32.totalorder %s173, 0
    %s176 = sadd.s32 %s175, 1
    %s177 = scalar_select %p174, %s175, %s176
    %p180 = pneg %p174
    %p181 = scmp.eq.s32.totalorder %s13, 1
    %p182 = por %p180, %p181
    %p183 = scmp.ne.s32.totalorder %s175, %s178
    %p184 = scmp.eq.s32.totalorder %s13, 0
    %p185 = por %p183, %p184
    %p186 = scmp.ne.s32.totalorder %s175, %s178
    %p187 = scmp.eq.s32.totalorder %s18, 1
    %p188 = por %p186, %p187
    %p189 = scmp.ne.s32.totalorder %s178, %s179
    %p190 = scmp.eq.s32.totalorder %s18, 0
    %p191 = por %p189, %p190
    %p192 = scmp.ne.s32.totalorder %s178, %s179
    %p193 = scmp.eq.s32.totalorder %s19, 1
    %p194 = por %p192, %p193
    %p196 = scmp.ne.s32.totalorder %s179, %s195
    %p197 = scmp.eq.s32.totalorder %s19, 0
    %p198 = por %p196, %p197
    %p199 = scmp.le.s32.totalorder 1, %s13
    %p200 = scmp.lt.s32.totalorder %s13, 3
    %p201 = pnand %p199, %p200
    %p202 = pneg %p201
    // Predicated region
    $region9: #{structure_encoder_block.1} parent=5 // pred_check
      _
    $region10: #{structure_encoder_block.1} parent=5 // pred_check_branch
      %204 = sbr.rel (%p201) target = $region12
    $region11: #{structure_encoder_block.1} parent=5 // pred_region
      %s205 = ssub.s32 %s13, 1
      // Predicated region
      $region13: #{structure_encoder_block.1} parent=11 // pred_check
        %p206 = pneg %p60
      $region14: #{structure_encoder_block.1} parent=11 // pred_check_branch
        %208 = sbr.rel (%p206) target = $region16
      $region15: #{structure_encoder_block.1} parent=11 // pred_region
        _
      $region16: #{structure_encoder_block.1} parent=11 // pred_fallthru
        _
      // Predicated region
      $region17: #{structure_encoder_block.1} parent=11 // pred_check
        %p209 = pneg %p81
      $region18: #{structure_encoder_block.1} parent=11 // pred_check_branch
        %211 = sbr.rel (%p209) target = $region20
      $region19: #{structure_encoder_block.1} parent=11 // pred_region
        _
      $region20: #{structure_encoder_block.1} parent=11 // pred_fallthru
        _
      // Predicated region
      $region21: #{structure_encoder_block.1} parent=11 // pred_check
        %p212 = pneg %p102
      $region22: #{structure_encoder_block.1} parent=11 // pred_check_branch
        %214 = sbr.rel (%p212) target = $region24
      $region23: #{structure_encoder_block.1} parent=11 // pred_region
        _
      $region24: #{structure_encoder_block.1} parent=11 // pred_fallthru
        _
      // Predicated region
      $region25: #{structure_encoder_block.1} parent=11 // pred_check
        %p215 = pneg %p123
      $region26: #{structure_encoder_block.1} parent=11 // pred_check_branch
        %217 = sbr.rel (%p215) target = $region28
      $region27: #{structure_encoder_block.1} parent=11 // pred_region
        _
      $region28: #{structure_encoder_block.1} parent=11 // pred_fallthru
        _
      // Predicated region
      $region29: #{structure_encoder_block.1} parent=11 // pred_check
        %p218 = pneg %p144
      $region30: #{structure_encoder_block.1} parent=11 // pred_check_branch
        %220 = sbr.rel (%p218) target = $region32
      $region31: #{structure_encoder_block.1} parent=11 // pred_region
        _
      $region32: #{structure_encoder_block.1} parent=11 // pred_fallthru
        _
      // Predicated region
      $region33: #{structure_encoder_block.1} parent=11 // pred_check
        %p221 = pneg %p165
      $region34: #{structure_encoder_block.1} parent=11 // pred_check_branch
        %223 = sbr.rel (%p221) target = $region36
      $region35: #{structure_encoder_block.1} parent=11 // pred_region
        _
      $region36: #{structure_encoder_block.1} parent=11 // pred_fallthru
        _
    $region12: #{structure_encoder_block.1} parent=5 // pred_fallthru
      _
    %p224 = scmp.lt.s32.totalorder %s13, 2
    // Predicated region
    $region37: #{structure_encoder_block.1} parent=5 // pred_check
      %p225 = pneg %p224
    $region38: #{structure_encoder_block.1} parent=5 // pred_check_branch
      %227 = sbr.rel (%p225) target = $region40
    $region39: #{structure_encoder_block.1} parent=5 // pred_region
      // Predicated region
      $region41: #{structure_encoder_block.1} parent=39 // pred_check
        %p228 = pneg %p33
      $region42: #{structure_encoder_block.1} parent=39 // pred_check_branch
        %230 = sbr.rel (%p228) target = $region44
      $region43: #{structure_encoder_block.1} parent=39 // pred_region
        %p231 = scmp.lt.s32.totalorder %s13, 1
        %s232 = scalar_select %p231, %s13, 1
        %s233 = smul.addr %s232, 3
        %s234 = smul.addr %s233, 4
        %s235 = scalar_lea.vmem %s0, %s234
      $region44: #{structure_encoder_block.1} parent=39 // pred_fallthru
        _
    $region40: #{structure_encoder_block.1} parent=5 // pred_fallthru
      _
    %p236 = scmp.le.s32.totalorder 1, %s13
    %p237 = scmp.lt.s32.totalorder %s13, 3
    %p238 = pnand %p236, %p237
    %p239 = pneg %p238
    // Predicated region
    $region45: #{structure_encoder_block.1} parent=5 // pred_check
      _
    $region46: #{structure_encoder_block.1} parent=5 // pred_check_branch
      %241 = sbr.rel (%p238) target = $region48
    $region47: #{structure_encoder_block.1} parent=5 // pred_region
      %s242 = ssub.s32 %s13, 1
      %p243 = scmp.lt.s32.totalorder %s18, 1
      %s244 = scalar_select %p243, %s18, 1
      %s245 = smul.addr %s244, 3
      %s246 = smul.addr %s245, 4
      %s247 = scalar_lea.vmem %s0, %s246
      %p248 = pneg %p39
      %p249 = pneg %p36
      %p250 = pneg %p60
      %p251 = pneg %p57
      %p252 = pneg %p81
      %p253 = pneg %p78
      %p254 = pneg %p102
      %p255 = pneg %p99
      %p256 = pneg %p123
      %p257 = pneg %p120
      %p258 = pneg %p144
      %p259 = pneg %p141
      %p260 = pneg %p165
      %p261 = pneg %p162
      %p262 = pneg %p191
      %p263 = pneg %p188
      %p264 = scmp.lt.s32.totalorder %s18, 1
      %s265 = scalar_select %p264, %s18, 1
      %s266 = smul.addr %s265, 2
      %s267 = smul.addr %s266, 8
      %s268 = scalar_lea.vmem %s7, %s267
      %p269 = scmp.lt.s32.totalorder %s18, 1
      %s270 = scalar_select %p269, %s18, 1
      %s271 = smul.addr %s270, 3
      %s272 = smul.addr %s271, 4
      %s273 = scalar_lea.vmem %s0, %s272
      %p274 = scmp.lt.s32.totalorder %s18, 1
      %s275 = scalar_select %p274, %s18, 1
      %s276 = smul.addr %s275, 2
      %s277 = smul.addr %s276, 8
      %s278 = scalar_lea.vmem %s7, %s277
      %v279 = vld [vmem:[%s273] sm:$0xff]
      %v280 = vld [vmem:[%s273 + $0x8] sm:$0xf]
      %v281 = vld [vmem:[%s1] sm:$0xff]
      %v282 = vld [vmem:[%s1 + $0x8] sm:$0xff]
      %v283 = vld [vmem:[%s1 + $0x10] sm:$0xff]
      %v284 = vld [vmem:[%s1 + $0x18] sm:$0xff]
      %v285 = vld [vmem:[%s1 + $0x20] sm:$0xff]
      %v286 = vld [vmem:[%s1 + $0x28] sm:$0xff]
      %v287 = vld [vmem:[%s1 + $0x30] sm:$0xff]
      %v288 = vld [vmem:[%s1 + $0x38] sm:$0xff]
      %v289 = vld [vmem:[%s1 + $0x40] sm:$0xff]
      %v290 = vld [vmem:[%s3] sm:$0xff]
      %v291 = vld [vmem:[%s3 + $0x8] sm:$0xff]
      %v292 = vld [vmem:[%s3 + $0x10] sm:$0xff]
      %v293 = vld [vmem:[%s3 + $0x18] sm:$0xff]
      %v294 = vld [vmem:[%s3 + $0x20] sm:$0xff]
      %v295 = vld [vmem:[%s3 + $0x28] sm:$0xff]
      %v296 = vld [vmem:[%s3 + $0x30] sm:$0xff]
      %v297 = vld [vmem:[%s3 + $0x38] sm:$0xff]
      %v298 = vld [vmem:[%s3 + $0x40] sm:$0xff]
      %v301 = vcombine.high %v279, %v279
      %302 = vrot.lane.b32.xlu0 %v279, 127
      %v303 = vpop.permute.xlu0 %302
      %304 = vrot.lane.b32.xlu0 %v301, 127
      %v305 = vpop.permute.xlu0 %304
      %306 = vrot.lane.b32.xlu0 %v280, 127
      %v307 = vpop.permute.xlu0 %306
      %vm308 = vcmask 1039360
      %v309 = vsel %vm308, %v303, %v305
      %v310 = vsel %vm308, %v305, %v307
      %vm311 = vcmask 31744
      %v313 = vsel %vm311, %v282, 0
      %vm315 = vcmask 1043456
      %v316 = vsel %vm315, %v309, 0
      %v318 = vsel %vm315, %v310, 0
      %v320 = vsel %vm315, %v307, 0
      %322 = vmatprep.subr.mxu0 %v318
      %323 = vmatpush1.msra.mxu0 %v316
      %324 = vmatprep.subr.mxu0 0.0
      %325 = vmatpush1.msra.mxu0 0.0
      %326 = vmatprep.subr.mxu0 0.0
      %327 = vmatpush1.msra.mxu0 0.0
      %328 = vmatprep.subr.mxu0 0.0
      %329 = vmatpush1.msra.mxu0 0.0
      %330 = vmatprep.subr.mxu0 0.0
      %331 = vmatpush1.msra.mxu0 0.0
      %332 = vmatprep.subr.mxu0 0.0
      %333 = vmatpush1.msra.mxu0 0.0
      %334 = vmatprep.subr.mxu0 0.0
      %335 = vmatpush1.msra.mxu0 0.0
      %336 = vmatprep.subr.mxu0 0.0
      %337 = vmatpush1.msra.mxu0 0.0
      %338 = vmatprep.subr.mxu0 0.0
      %339 = vmatpush1.msra.mxu0 0.0
      %340 = vmatprep.subr.mxu0 0.0
      %341 = vmatpush1.msra.mxu0 0.0
      %342 = vmatprep.subr.mxu0 0.0
      %343 = vmatpush1.msra.mxu0 0.0
      %344 = vmatprep.subr.mxu0 0.0
      %345 = vmatpush1.msra.mxu0 0.0
      %346 = vmatprep.subr.mxu0 0.0
      %347 = vmatpush1.msra.mxu0 0.0
      %348 = vmatprep.subr.mxu0 0.0
      %349 = vmatpush1.msra.mxu0 0.0
      %350 = vmatprep.subr.mxu0 0.0
      %351 = vmatpush1.msra.mxu0 0.0
      %352 = vmatprep.subr.mxu0 0.0
      %353 = vmatpush1.msra.mxu0 0.0
      %354 = vmatprep.subr.mxu0 0.0
      %355 = vmatpush1.msra.mxu0 0.0
      %356 = vmatprep.subr.mxu0 0.0
      %357 = vmatpush1.msra.mxu0 0.0
      %358 = vmatprep.subr.mxu0 0.0
      %359 = vmatpush1.msra.mxu0 0.0
      %360 = vmatprep.subr.mxu0 0.0
      %361 = vmatpush1.msra.mxu0 0.0
      %362 = vmatprep.subr.mxu0 0.0
      %363 = vmatpush1.msra.mxu0 0.0
      %364 = vmatprep.subr.mxu0 0.0
      %365 = vmatpush1.msra.mxu0 0.0
      %366 = vmatprep.subr.mxu0 0.0
      %367 = vmatpush1.msra.mxu0 0.0
      %368 = vmatprep.subr.mxu0 0.0
      %369 = vmatpush1.msra.mxu0 0.0
      %370 = vmatprep.subr.mxu0 0.0
      %371 = vmatpush1.msra.mxu0 0.0
      %372 = vmatprep.subr.mxu0 0.0
      %373 = vmatpush1.msra.mxu0 0.0
      %374 = vmatprep.subr.mxu0 0.0
      %375 = vmatpush1.msra.mxu0 0.0
      %376 = vmatprep.subr.mxu0 0.0
      %377 = vmatpush1.msra.mxu0 0.0
      %378 = vmatprep.subr.mxu0 0.0
      %379 = vmatpush1.msra.mxu0 0.0
      %380 = vmatprep.subr.mxu0 0.0
      %381 = vmatpush1.msra.mxu0 0.0
      %382 = vmatprep.subr.mxu0 0.0
      %383 = vmatpush1.msra.mxu0 0.0
      %384 = vmatprep.subr.mxu0 0.0
      %385 = vmatpush1.msra.mxu0 0.0
      %386 = vmatprep.mubr.f32.mxu0 0.0
      %387 = vmatmul.mubr.f32.gmra.mrb[0].mxu0 %v313
      %v388 = vpop.f32.mrb[0].mxu0
      %v389 = vadd.f32 0.0, %v388
      %v390 = vpop.f32.mrb[0].mxu0
      %v391 = vadd.f32 0.0, %v390
      %392 = vdwg.mxu0
      %393 = vmatprep.subr.mxu0 0.0
      %394 = vmatpush1.msra.mxu0 %v320
      %395 = vmatprep.subr.mxu0 0.0
      %396 = vmatpush1.msra.mxu0 0.0
      %397 = vmatprep.subr.mxu0 0.0
      %398 = vmatpush1.msra.mxu0 0.0
      %399 = vmatprep.subr.mxu0 0.0
      %400 = vmatpush1.msra.mxu0 0.0
      %401 = vmatprep.subr.mxu0 0.0
      %402 = vmatpush1.msra.mxu0 0.0
      %403 = vmatprep.subr.mxu0 0.0
      %404 = vmatpush1.msra.mxu0 0.0
      %405 = vmatprep.subr.mxu0 0.0
      %406 = vmatpush1.msra.mxu0 0.0
      %407 = vmatprep.subr.mxu0 0.0
      %408 = vmatpush1.msra.mxu0 0.0
      %409 = vmatprep.subr.mxu0 0.0
      %410 = vmatpush1.msra.mxu0 0.0
      %411 = vmatprep.subr.mxu0 0.0
      %412 = vmatpush1.msra.mxu0 0.0
      %413 = vmatprep.subr.mxu0 0.0
      %414 = vmatpush1.msra.mxu0 0.0
      %415 = vmatprep.subr.mxu0 0.0
      %416 = vmatpush1.msra.mxu0 0.0
      %417 = vmatprep.subr.mxu0 0.0
      %418 = vmatpush1.msra.mxu0 0.0
      %419 = vmatprep.subr.mxu0 0.0
      %420 = vmatpush1.msra.mxu0 0.0
      %421 = vmatprep.subr.mxu0 0.0
      %422 = vmatpush1.msra.mxu0 0.0
      %423 = vmatprep.subr.mxu0 0.0
      %424 = vmatpush1.msra.mxu0 0.0
      %425 = vmatprep.subr.mxu0 0.0
      %426 = vmatpush1.msra.mxu0 0.0
      %427 = vmatprep.subr.mxu0 0.0
      %428 = vmatpush1.msra.mxu0 0.0
      %429 = vmatprep.subr.mxu0 0.0
      %430 = vmatpush1.msra.mxu0 0.0
      %431 = vmatprep.subr.mxu0 0.0
      %432 = vmatpush1.msra.mxu0 0.0
      %433 = vmatprep.subr.mxu0 0.0
      %434 = vmatpush1.msra.mxu0 0.0
      %435 = vmatprep.subr.mxu0 0.0
      %436 = vmatpush1.msra.mxu0 0.0
      %437 = vmatprep.subr.mxu0 0.0
      %438 = vmatpush1.msra.mxu0 0.0
      %439 = vmatprep.subr.mxu0 0.0
      %440 = vmatpush1.msra.mxu0 0.0
      %441 = vmatprep.subr.mxu0 0.0
      %442 = vmatpush1.msra.mxu0 0.0
      %443 = vmatprep.subr.mxu0 0.0
      %444 = vmatpush1.msra.mxu0 0.0
      %445 = vmatprep.subr.mxu0 0.0
      %446 = vmatpush1.msra.mxu0 0.0
      %447 = vmatprep.subr.mxu0 0.0
      %448 = vmatpush1.msra.mxu0 0.0
      %449 = vmatprep.subr.mxu0 0.0
      %450 = vmatpush1.msra.mxu0 0.0
      %451 = vmatprep.subr.mxu0 0.0
      %452 = vmatpush1.msra.mxu0 0.0
      %453 = vmatprep.subr.mxu0 0.0
      %454 = vmatpush1.msra.mxu0 0.0
      %455 = vmatprep.subr.mxu0 0.0
      %456 = vmatpush1.msra.mxu0 0.0
      %457 = vmatprep.mubr.f32.mxu0 0.0
      %458 = vmatmul.mubr.f32.gmra.mrb[0].mxu0 %v313
      %v459 = vpop.f32.mrb[0].mxu0
      %v460 = vadd.f32 0.0, %v459
      %v461 = vpop.f32.mrb[0].mxu0
      %462 = vdwg.mxu0
      %v464 = vsel %vm311, %v281, 0
      %v466 = vsel %vm315, %v279, 0
      %v468 = vsel %vm315, %v301, 0
      %v470 = vsel %vm315, %v280, 0
      %472 = vmatprep.subr.mxu0 %v468
      %473 = vmatpush1.msra.mxu0 %v466
      %474 = vmatprep.subr.mxu0 0.0
      %475 = vmatpush1.msra.mxu0 0.0
      %476 = vmatprep.subr.mxu0 0.0
      %477 = vmatpush1.msra.mxu0 0.0
      %478 = vmatprep.subr.mxu0 0.0
      %479 = vmatpush1.msra.mxu0 0.0
      %480 = vmatprep.subr.mxu0 0.0
      %481 = vmatpush1.msra.mxu0 0.0
      %482 = vmatprep.subr.mxu0 0.0
      %483 = vmatpush1.msra.mxu0 0.0
      %484 = vmatprep.subr.mxu0 0.0
      %485 = vmatpush1.msra.mxu0 0.0
      %486 = vmatprep.subr.mxu0 0.0
      %487 = vmatpush1.msra.mxu0 0.0
      %488 = vmatprep.subr.mxu0 0.0
      %489 = vmatpush1.msra.mxu0 0.0
      %490 = vmatprep.subr.mxu0 0.0
      %491 = vmatpush1.msra.mxu0 0.0
      %492 = vmatprep.subr.mxu0 0.0
      %493 = vmatpush1.msra.mxu0 0.0
      %494 = vmatprep.subr.mxu0 0.0
      %495 = vmatpush1.msra.mxu0 0.0
      %496 = vmatprep.subr.mxu0 0.0
      %497 = vmatpush1.msra.mxu0 0.0
      %498 = vmatprep.subr.mxu0 0.0
      %499 = vmatpush1.msra.mxu0 0.0
      %500 = vmatprep.subr.mxu0 0.0
      %501 = vmatpush1.msra.mxu0 0.0
      %502 = vmatprep.subr.mxu0 0.0
      %503 = vmatpush1.msra.mxu0 0.0
      %504 = vmatprep.subr.mxu0 0.0
      %505 = vmatpush1.msra.mxu0 0.0
      %506 = vmatprep.subr.mxu0 0.0
      %507 = vmatpush1.msra.mxu0 0.0
      %508 = vmatprep.subr.mxu0 0.0
      %509 = vmatpush1.msra.mxu0 0.0
      %510 = vmatprep.subr.mxu0 0.0
      %511 = vmatpush1.msra.mxu0 0.0
      %512 = vmatprep.subr.mxu0 0.0
      %513 = vmatpush1.msra.mxu0 0.0
      %514 = vmatprep.subr.mxu0 0.0
      %515 = vmatpush1.msra.mxu0 0.0
      %516 = vmatprep.subr.mxu0 0.0
      %517 = vmatpush1.msra.mxu0 0.0
      %518 = vmatprep.subr.mxu0 0.0
      %519 = vmatpush1.msra.mxu0 0.0
      %520 = vmatprep.subr.mxu0 0.0
      %521 = vmatpush1.msra.mxu0 0.0
      %522 = vmatprep.subr.mxu0 0.0
      %523 = vmatpush1.msra.mxu0 0.0
      %524 = vmatprep.subr.mxu0 0.0
      %525 = vmatpush1.msra.mxu0 0.0
      %526 = vmatprep.subr.mxu0 0.0
      %527 = vmatpush1.msra.mxu0 0.0
      %528 = vmatprep.subr.mxu0 0.0
      %529 = vmatpush1.msra.mxu0 0.0
      %530 = vmatprep.subr.mxu0 0.0
      %531 = vmatpush1.msra.mxu0 0.0
      %532 = vmatprep.subr.mxu0 0.0
      %533 = vmatpush1.msra.mxu0 0.0
      %534 = vmatprep.subr.mxu0 0.0
      %535 = vmatpush1.msra.mxu0 0.0
      %536 = vmatprep.mubr.f32.mxu0 0.0
      %537 = vmatmul.mubr.f32.gmra.mrb[0].mxu0 %v464
      %v538 = vpop.f32.mrb[0].mxu0
      %v539 = vadd.f32 %v389, %v538
      %v540 = vpop.f32.mrb[0].mxu0
      %v541 = vadd.f32 %v391, %v540
      %542 = vdwg.mxu0
      %543 = vmatprep.subr.mxu0 0.0
      %544 = vmatpush1.msra.mxu0 %v470
      %545 = vmatprep.subr.mxu0 0.0
      %546 = vmatpush1.msra.mxu0 0.0
      %547 = vmatprep.subr.mxu0 0.0
      %548 = vmatpush1.msra.mxu0 0.0
      %549 = vmatprep.subr.mxu0 0.0
      %550 = vmatpush1.msra.mxu0 0.0
      %551 = vmatprep.subr.mxu0 0.0
      %552 = vmatpush1.msra.mxu0 0.0
      %553 = vmatprep.subr.mxu0 0.0
      %554 = vmatpush1.msra.mxu0 0.0
      %555 = vmatprep.subr.mxu0 0.0
      %556 = vmatpush1.msra.mxu0 0.0
      %557 = vmatprep.subr.mxu0 0.0
      %558 = vmatpush1.msra.mxu0 0.0
      %559 = vmatprep.subr.mxu0 0.0
      %560 = vmatpush1.msra.mxu0 0.0
      %561 = vmatprep.subr.mxu0 0.0
      %562 = vmatpush1.msra.mxu0 0.0
      %563 = vmatprep.subr.mxu0 0.0
      %564 = vmatpush1.msra.mxu0 0.0
      %565 = vmatprep.subr.mxu0 0.0
      %566 = vmatpush1.msra.mxu0 0.0
      %567 = vmatprep.subr.mxu0 0.0
      %568 = vmatpush1.msra.mxu0 0.0
      %569 = vmatprep.subr.mxu0 0.0
      %570 = vmatpush1.msra.mxu0 0.0
      %571 = vmatprep.subr.mxu0 0.0
      %572 = vmatpush1.msra.mxu0 0.0
      %573 = vmatprep.subr.mxu0 0.0
      %574 = vmatpush1.msra.mxu0 0.0
      %575 = vmatprep.subr.mxu0 0.0
      %576 = vmatpush1.msra.mxu0 0.0
      %577 = vmatprep.subr.mxu0 0.0
      %578 = vmatpush1.msra.mxu0 0.0
      %579 = vmatprep.subr.mxu0 0.0
      %580 = vmatpush1.msra.mxu0 0.0
      %581 = vmatprep.subr.mxu0 0.0
      %582 = vmatpush1.msra.mxu0 0.0
      %583 = vmatprep.subr.mxu0 0.0
      %584 = vmatpush1.msra.mxu0 0.0
      %585 = vmatprep.subr.mxu0 0.0
      %586 = vmatpush1.msra.mxu0 0.0
      %587 = vmatprep.subr.mxu0 0.0
      %588 = vmatpush1.msra.mxu0 0.0
      %589 = vmatprep.subr.mxu0 0.0
      %590 = vmatpush1.msra.mxu0 0.0
      %591 = vmatprep.subr.mxu0 0.0
      %592 = vmatpush1.msra.mxu0 0.0
      %593 = vmatprep.subr.mxu0 0.0
      %594 = vmatpush1.msra.mxu0 0.0
      %595 = vmatprep.subr.mxu0 0.0
      %596 = vmatpush1.msra.mxu0 0.0
      %597 = vmatprep.subr.mxu0 0.0
      %598 = vmatpush1.msra.mxu0 0.0
      %599 = vmatprep.subr.mxu0 0.0
      %600 = vmatpush1.msra.mxu0 0.0
      %601 = vmatprep.subr.mxu0 0.0
      %602 = vmatpush1.msra.mxu0 0.0
      %603 = vmatprep.subr.mxu0 0.0
      %604 = vmatpush1.msra.mxu0 0.0
      %605 = vmatprep.subr.mxu0 0.0
      %606 = vmatpush1.msra.mxu0 0.0
      %607 = vmatprep.mubr.f32.mxu0 0.0
      %608 = vmatmul.mubr.f32.gmra.mrb[0].mxu0 %v464
      %v609 = vpop.f32.mrb[0].mxu0
      %v610 = vadd.f32 %v460, %v609
      %v611 = vpop.f32.mrb[0].mxu0
      %612 = vdwg.mxu0
      %613 = vrot.lane.b32.xlu0 %v279, 126
      %v614 = vpop.permute.xlu0 %613
      %615 = vrot.lane.b32.xlu0 %v301, 126
      %v616 = vpop.permute.xlu0 %615
      %617 = vrot.lane.b32.xlu0 %v280, 126
      %v618 = vpop.permute.xlu0 %617
      %vm619 = vcmask 1031168
      %v620 = vsel %vm619, %v614, %v616
      %v621 = vsel %vm619, %v616, %v618
      %v623 = vsel %vm311, %v283, 0
      %v625 = vsel %vm315, %v620, 0
      %v627 = vsel %vm315, %v621, 0
      %v629 = vsel %vm315, %v618, 0
      %631 = vmatprep.subr.mxu0 %v627
      %632 = vmatpush1.msra.mxu0 %v625
      %633 = vmatprep.subr.mxu0 0.0
      %634 = vmatpush1.msra.mxu0 0.0
      %635 = vmatprep.subr.mxu0 0.0
      %636 = vmatpush1.msra.mxu0 0.0
      %637 = vmatprep.subr.mxu0 0.0
      %638 = vmatpush1.msra.mxu0 0.0
      %639 = vmatprep.subr.mxu0 0.0
      %640 = vmatpush1.msra.mxu0 0.0
      %641 = vmatprep.subr.mxu0 0.0
      %642 = vmatpush1.msra.mxu0 0.0
      %643 = vmatprep.subr.mxu0 0.0
      %644 = vmatpush1.msra.mxu0 0.0
      %645 = vmatprep.subr.mxu0 0.0
      %646 = vmatpush1.msra.mxu0 0.0
      %647 = vmatprep.subr.mxu0 0.0
      %648 = vmatpush1.msra.mxu0 0.0
      %649 = vmatprep.subr.mxu0 0.0
      %650 = vmatpush1.msra.mxu0 0.0
      %651 = vmatprep.subr.mxu0 0.0
      %652 = vmatpush1.msra.mxu0 0.0
      %653 = vmatprep.subr.mxu0 0.0
      %654 = vmatpush1.msra.mxu0 0.0
      %655 = vmatprep.subr.mxu0 0.0
      %656 = vmatpush1.msra.mxu0 0.0
      %657 = vmatprep.subr.mxu0 0.0
      %658 = vmatpush1.msra.mxu0 0.0
      %659 = vmatprep.subr.mxu0 0.0
      %660 = vmatpush1.msra.mxu0 0.0
      %661 = vmatprep.subr.mxu0 0.0
      %662 = vmatpush1.msra.mxu0 0.0
      %663 = vmatprep.subr.mxu0 0.0
      %664 = vmatpush1.msra.mxu0 0.0
      %665 = vmatprep.subr.mxu0 0.0
      %666 = vmatpush1.msra.mxu0 0.0
      %667 = vmatprep.subr.mxu0 0.0
      %668 = vmatpush1.msra.mxu0 0.0
      %669 = vmatprep.subr.mxu0 0.0
      %670 = vmatpush1.msra.mxu0 0.0
      %671 = vmatprep.subr.mxu0 0.0
      %672 = vmatpush1.msra.mxu0 0.0
      %673 = vmatprep.subr.mxu0 0.0
      %674 = vmatpush1.msra.mxu0 0.0
      %675 = vmatprep.subr.mxu0 0.0
      %676 = vmatpush1.msra.mxu0 0.0
      %677 = vmatprep.subr.mxu0 0.0
      %678 = vmatpush1.msra.mxu0 0.0
      %679 = vmatprep.subr.mxu0 0.0
      %680 = vmatpush1.msra.mxu0 0.0
      %681 = vmatprep.subr.mxu0 0.0
      %682 = vmatpush1.msra.mxu0 0.0
      %683 = vmatprep.subr.mxu0 0.0
      %684 = vmatpush1.msra.mxu0 0.0
      %685 = vmatprep.subr.mxu0 0.0
      %686 = vmatpush1.msra.mxu0 0.0
      %687 = vmatprep.subr.mxu0 0.0
      %688 = vmatpush1.msra.mxu0 0.0
      %689 = vmatprep.subr.mxu0 0.0
      %690 = vmatpush1.msra.mxu0 0.0
      %691 = vmatprep.subr.mxu0 0.0
      %692 = vmatpush1.msra.mxu0 0.0
      %693 = vmatprep.subr.mxu0 0.0
      %694 = vmatpush1.msra.mxu0 0.0
      %695 = vmatprep.mubr.f32.mxu0 0.0
      %696 = vmatmul.mubr.f32.gmra.mrb[0].mxu0 %v623
      %v697 = vpop.f32.mrb[0].mxu0
      %v698 = vadd.f32 0.0, %v697
      %v699 = vpop.f32.mrb[0].mxu0
      %v700 = vadd.f32 0.0, %v699
      %701 = vdwg.mxu0
      %702 = vmatprep.subr.mxu0 0.0
      %703 = vmatpush1.msra.mxu0 %v629
      %704 = vmatprep.subr.mxu0 0.0
      %705 = vmatpush1.msra.mxu0 0.0
      %706 = vmatprep.subr.mxu0 0.0
      %707 = vmatpush1.msra.mxu0 0.0
      %708 = vmatprep.subr.mxu0 0.0
      %709 = vmatpush1.msra.mxu0 0.0
      %710 = vmatprep.subr.mxu0 0.0
      %711 = vmatpush1.msra.mxu0 0.0
      %712 = vmatprep.subr.mxu0 0.0
      %713 = vmatpush1.msra.mxu0 0.0
      %714 = vmatprep.subr.mxu0 0.0
      %715 = vmatpush1.msra.mxu0 0.0
      %716 = vmatprep.subr.mxu0 0.0
      %717 = vmatpush1.msra.mxu0 0.0
      %718 = vmatprep.subr.mxu0 0.0
      %719 = vmatpush1.msra.mxu0 0.0
      %720 = vmatprep.subr.mxu0 0.0
      %721 = vmatpush1.msra.mxu0 0.0
      %722 = vmatprep.subr.mxu0 0.0
      %723 = vmatpush1.msra.mxu0 0.0
      %724 = vmatprep.subr.mxu0 0.0
      %725 = vmatpush1.msra.mxu0 0.0
      %726 = vmatprep.subr.mxu0 0.0
      %727 = vmatpush1.msra.mxu0 0.0
      %728 = vmatprep.subr.mxu0 0.0
      %729 = vmatpush1.msra.mxu0 0.0
      %730 = vmatprep.subr.mxu0 0.0
      %731 = vmatpush1.msra.mxu0 0.0
      %732 = vmatprep.subr.mxu0 0.0
      %733 = vmatpush1.msra.mxu0 0.0
      %734 = vmatprep.subr.mxu0 0.0
      %735 = vmatpush1.msra.mxu0 0.0
      %736 = vmatprep.subr.mxu0 0.0
      %737 = vmatpush1.msra.mxu0 0.0
      %738 = vmatprep.subr.mxu0 0.0
      %739 = vmatpush1.msra.mxu0 0.0
      %740 = vmatprep.subr.mxu0 0.0
      %741 = vmatpush1.msra.mxu0 0.0
      %742 = vmatprep.subr.mxu0 0.0
      %743 = vmatpush1.msra.mxu0 0.0
      %744 = vmatprep.subr.mxu0 0.0
      %745 = vmatpush1.msra.mxu0 0.0
      %746 = vmatprep.subr.mxu0 0.0
      %747 = vmatpush1.msra.mxu0 0.0
      %748 = vmatprep.subr.mxu0 0.0
      %749 = vmatpush1.msra.mxu0 0.0
      %750 = vmatprep.subr.mxu0 0.0
      %751 = vmatpush1.msra.mxu0 0.0
      %752 = vmatprep.subr.mxu0 0.0
      %753 = vmatpush1.msra.mxu0 0.0
      %754 = vmatprep.subr.mxu0 0.0
      %755 = vmatpush1.msra.mxu0 0.0
      %756 = vmatprep.subr.mxu0 0.0
      %757 = vmatpush1.msra.mxu0 0.0
      %758 = vmatprep.subr.mxu0 0.0
      %759 = vmatpush1.msra.mxu0 0.0
      %760 = vmatprep.subr.mxu0 0.0
      %761 = vmatpush1.msra.mxu0 0.0
      %762 = vmatprep.subr.mxu0 0.0
      %763 = vmatpush1.msra.mxu0 0.0
      %764 = vmatprep.subr.mxu0 0.0
      %765 = vmatpush1.msra.mxu0 0.0
      %766 = vmatprep.mubr.f32.mxu0 0.0
      %767 = vmatmul.mubr.f32.gmra.mrb[0].mxu0 %v623
      %v768 = vpop.f32.mrb[0].mxu0
      %v769 = vadd.f32 0.0, %v768
      %v770 = vpop.f32.mrb[0].mxu0
      %771 = vdwg.mxu0
      %v772 = vadd.f32 %v539, %v698
      %v773 = vadd.f32 %v541, %v700
      %v774 = vadd.f32 %v610, %v769
      %775 = vrot.lane.b32.xlu0 %v279, 110
      %v776 = vpop.permute.xlu0 %775
      %777 = vrot.lane.b32.xlu0 %v301, 110
      %v778 = vpop.permute.xlu0 %777
      %779 = vrot.lane.b32.xlu0 %v280, 110
      %v780 = vpop.permute.xlu0 %779
      %vm781 = vcmask 900096
      %v782 = vsel %vm781, %v776, %v778
      %v783 = vsel %vm781, %v778, %v780
      %v785 = vsel %vm311, %v284, 0
      %v787 = vsel %vm315, %v782, 0
      %v789 = vsel %vm315, %v783, 0
      %v791 = vsel %vm315, %v780, 0
      %793 = vmatprep.subr.mxu0 %v789
      %794 = vmatpush1.msra.mxu0 %v787
      %795 = vmatprep.subr.mxu0 0.0
      %796 = vmatpush1.msra.mxu0 0.0
      %797 = vmatprep.subr.mxu0 0.0
      %798 = vmatpush1.msra.mxu0 0.0
      %799 = vmatprep.subr.mxu0 0.0
      %800 = vmatpush1.msra.mxu0 0.0
      %801 = vmatprep.subr.mxu0 0.0
      %802 = vmatpush1.msra.mxu0 0.0
      %803 = vmatprep.subr.mxu0 0.0
      %804 = vmatpush1.msra.mxu0 0.0
      %805 = vmatprep.subr.mxu0 0.0
      %806 = vmatpush1.msra.mxu0 0.0
      %807 = vmatprep.subr.mxu0 0.0
      %808 = vmatpush1.msra.mxu0 0.0
      %809 = vmatprep.subr.mxu0 0.0
      %810 = vmatpush1.msra.mxu0 0.0
      %811 = vmatprep.subr.mxu0 0.0
      %812 = vmatpush1.msra.mxu0 0.0
      %813 = vmatprep.subr.mxu0 0.0
      %814 = vmatpush1.msra.mxu0 0.0
      %815 = vmatprep.subr.mxu0 0.0
      %816 = vmatpush1.msra.mxu0 0.0
      %817 = vmatprep.subr.mxu0 0.0
      %818 = vmatpush1.msra.mxu0 0.0
      %819 = vmatprep.subr.mxu0 0.0
      %820 = vmatpush1.msra.mxu0 0.0
      %821 = vmatprep.subr.mxu0 0.0
      %822 = vmatpush1.msra.mxu0 0.0
      %823 = vmatprep.subr.mxu0 0.0
      %824 = vmatpush1.msra.mxu0 0.0
      %825 = vmatprep.subr.mxu0 0.0
      %826 = vmatpush1.msra.mxu0 0.0
      %827 = vmatprep.subr.mxu0 0.0
      %828 = vmatpush1.msra.mxu0 0.0
      %829 = vmatprep.subr.mxu0 0.0
      %830 = vmatpush1.msra.mxu0 0.0
      %831 = vmatprep.subr.mxu0 0.0
      %832 = vmatpush1.msra.mxu0 0.0
      %833 = vmatprep.subr.mxu0 0.0
      %834 = vmatpush1.msra.mxu0 0.0
      %835 = vmatprep.subr.mxu0 0.0
      %836 = vmatpush1.msra.mxu0 0.0
      %837 = vmatprep.subr.mxu0 0.0
      %838 = vmatpush1.msra.mxu0 0.0
      %839 = vmatprep.subr.mxu0 0.0
      %840 = vmatpush1.msra.mxu0 0.0
      %841 = vmatprep.subr.mxu0 0.0
      %842 = vmatpush1.msra.mxu0 0.0
      %843 = vmatprep.subr.mxu0 0.0
      %844 = vmatpush1.msra.mxu0 0.0
      %845 = vmatprep.subr.mxu0 0.0
      %846 = vmatpush1.msra.mxu0 0.0
      %847 = vmatprep.subr.mxu0 0.0
      %848 = vmatpush1.msra.mxu0 0.0
      %849 = vmatprep.subr.mxu0 0.0
      %850 = vmatpush1.msra.mxu0 0.0
      %851 = vmatprep.subr.mxu0 0.0
      %852 = vmatpush1.msra.mxu0 0.0
      %853 = vmatprep.subr.mxu0 0.0
      %854 = vmatpush1.msra.mxu0 0.0
      %855 = vmatprep.subr.mxu0 0.0
      %856 = vmatpush1.msra.mxu0 0.0
      %857 = vmatprep.mubr.f32.mxu0 0.0
      %858 = vmatmul.mubr.f32.gmra.mrb[0].mxu0 %v785
      %v859 = vpop.f32.mrb[0].mxu0
      %v860 = vadd.f32 0.0, %v859
      %v861 = vpop.f32.mrb[0].mxu0
      %v862 = vadd.f32 0.0, %v861
      %863 = vdwg.mxu0
      %864 = vmatprep.subr.mxu0 0.0
      %865 = vmatpush1.msra.mxu0 %v791
      %866 = vmatprep.subr.mxu0 0.0
      %867 = vmatpush1.msra.mxu0 0.0
      %868 = vmatprep.subr.mxu0 0.0
      %869 = vmatpush1.msra.mxu0 0.0
      %870 = vmatprep.subr.mxu0 0.0
      %871 = vmatpush1.msra.mxu0 0.0
      %872 = vmatprep.subr.mxu0 0.0
      %873 = vmatpush1.msra.mxu0 0.0
      %874 = vmatprep.subr.mxu0 0.0
      %875 = vmatpush1.msra.mxu0 0.0
      %876 = vmatprep.subr.mxu0 0.0
      %877 = vmatpush1.msra.mxu0 0.0
      %878 = vmatprep.subr.mxu0 0.0
      %879 = vmatpush1.msra.mxu0 0.0
      %880 = vmatprep.subr.mxu0 0.0
      %881 = vmatpush1.msra.mxu0 0.0
      %882 = vmatprep.subr.mxu0 0.0
      %883 = vmatpush1.msra.mxu0 0.0
      %884 = vmatprep.subr.mxu0 0.0
      %885 = vmatpush1.msra.mxu0 0.0
      %886 = vmatprep.subr.mxu0 0.0
      %887 = vmatpush1.msra.mxu0 0.0
      %888 = vmatprep.subr.mxu0 0.0
      %889 = vmatpush1.msra.mxu0 0.0
      %890 = vmatprep.subr.mxu0 0.0
      %891 = vmatpush1.msra.mxu0 0.0
      %892 = vmatprep.subr.mxu0 0.0
      %893 = vmatpush1.msra.mxu0 0.0
      %894 = vmatprep.subr.mxu0 0.0
      %895 = vmatpush1.msra.mxu0 0.0
      %896 = vmatprep.subr.mxu0 0.0
      %897 = vmatpush1.msra.mxu0 0.0
      %898 = vmatprep.subr.mxu0 0.0
      %899 = vmatpush1.msra.mxu0 0.0
      %900 = vmatprep.subr.mxu0 0.0
      %901 = vmatpush1.msra.mxu0 0.0
      %902 = vmatprep.subr.mxu0 0.0
      %903 = vmatpush1.msra.mxu0 0.0
      %904 = vmatprep.subr.mxu0 0.0
      %905 = vmatpush1.msra.mxu0 0.0
      %906 = vmatprep.subr.mxu0 0.0
      %907 = vmatpush1.msra.mxu0 0.0
      %908 = vmatprep.subr.mxu0 0.0
      %909 = vmatpush1.msra.mxu0 0.0
      %910 = vmatprep.subr.mxu0 0.0
      %911 = vmatpush1.msra.mxu0 0.0
      %912 = vmatprep.subr.mxu0 0.0
      %913 = vmatpush1.msra.mxu0 0.0
      %914 = vmatprep.subr.mxu0 0.0
      %915 = vmatpush1.msra.mxu0 0.0
      %916 = vmatprep.subr.mxu0 0.0
      %917 = vmatpush1.msra.mxu0 0.0
      %918 = vmatprep.subr.mxu0 0.0
      %919 = vmatpush1.msra.mxu0 0.0
      %920 = vmatprep.subr.mxu0 0.0
      %921 = vmatpush1.msra.mxu0 0.0
      %922 = vmatprep.subr.mxu0 0.0
      %923 = vmatpush1.msra.mxu0 0.0
      %924 = vmatprep.subr.mxu0 0.0
      %925 = vmatpush1.msra.mxu0 0.0
      %926 = vmatprep.subr.mxu0 0.0
      %927 = vmatpush1.msra.mxu0 0.0
      %928 = vmatprep.mubr.f32.mxu0 0.0
      %929 = vmatmul.mubr.f32.gmra.mrb[0].mxu0 %v785
      %v930 = vpop.f32.mrb[0].mxu0
      %v931 = vadd.f32 0.0, %v930
      %v932 = vpop.f32.mrb[0].mxu0
      %933 = vdwg.mxu0
      %v934 = vadd.f32 %v772, %v860
      %v935 = vadd.f32 %v773, %v862
      %v936 = vadd.f32 %v774, %v931
      %937 = vrot.lane.b32.xlu0 %v279, 109
      %v938 = vpop.permute.xlu0 %937
      %939 = vrot.lane.b32.xlu0 %v301, 109
      %v940 = vpop.permute.xlu0 %939
      %941 = vrot.lane.b32.xlu0 %v280, 109
      %v942 = vpop.permute.xlu0 %941
      %vm943 = vcmask 891904
      %v944 = vsel %vm943, %v938, %v940
      %v945 = vsel %vm943, %v940, %v942
      %v947 = vsel %vm311, %v285, 0
      %v949 = vsel %vm315, %v944, 0
      %v951 = vsel %vm315, %v945, 0
      %v953 = vsel %vm315, %v942, 0
      %955 = vmatprep.subr.mxu0 %v951
      %956 = vmatpush1.msra.mxu0 %v949
      %957 = vmatprep.subr.mxu0 0.0
      %958 = vmatpush1.msra.mxu0 0.0
      %959 = vmatprep.subr.mxu0 0.0
      %960 = vmatpush1.msra.mxu0 0.0
      %961 = vmatprep.subr.mxu0 0.0
      %962 = vmatpush1.msra.mxu0 0.0
      %963 = vmatprep.subr.mxu0 0.0
      %964 = vmatpush1.msra.mxu0 0.0
      %965 = vmatprep.subr.mxu0 0.0
      %966 = vmatpush1.msra.mxu0 0.0
      %967 = vmatprep.subr.mxu0 0.0
      %968 = vmatpush1.msra.mxu0 0.0
      %969 = vmatprep.subr.mxu0 0.0
      %970 = vmatpush1.msra.mxu0 0.0
      %971 = vmatprep.subr.mxu0 0.0
      %972 = vmatpush1.msra.mxu0 0.0
      %973 = vmatprep.subr.mxu0 0.0
      %974 = vmatpush1.msra.mxu0 0.0
      %975 = vmatprep.subr.mxu0 0.0
      %976 = vmatpush1.msra.mxu0 0.0
      %977 = vmatprep.subr.mxu0 0.0
      %978 = vmatpush1.msra.mxu0 0.0
      %979 = vmatprep.subr.mxu0 0.0
      %980 = vmatpush1.msra.mxu0 0.0
      %981 = vmatprep.subr.mxu0 0.0
      %982 = vmatpush1.msra.mxu0 0.0
      %983 = vmatprep.subr.mxu0 0.0
      %984 = vmatpush1.msra.mxu0 0.0
      %985 = vmatprep.subr.mxu0 0.0
      %986 = vmatpush1.msra.mxu0 0.0
      %987 = vmatprep.subr.mxu0 0.0
      %988 = vmatpush1.msra.mxu0 0.0
      %989 = vmatprep.subr.mxu0 0.0
      %990 = vmatpush1.msra.mxu0 0.0
      %991 = vmatprep.subr.mxu0 0.0
      %992 = vmatpush1.msra.mxu0 0.0
      %993 = vmatprep.subr.mxu0 0.0
      %994 = vmatpush1.msra.mxu0 0.0
      %995 = vmatprep.subr.mxu0 0.0
      %996 = vmatpush1.msra.mxu0 0.0
      %997 = vmatprep.subr.mxu0 0.0
      %998 = vmatpush1.msra.mxu0 0.0
      %999 = vmatprep.subr.mxu0 0.0
      %1000 = vmatpush1.msra.mxu0 0.0
      %1001 = vmatprep.subr.mxu0 0.0
      %1002 = vmatpush1.msra.mxu0 0.0
      %1003 = vmatprep.subr.mxu0 0.0
      %1004 = vmatpush1.msra.mxu0 0.0
      %1005 = vmatprep.subr.mxu0 0.0
      %1006 = vmatpush1.msra.mxu0 0.0
      %1007 = vmatprep.subr.mxu0 0.0
      %1008 = vmatpush1.msra.mxu0 0.0
      %1009 = vmatprep.subr.mxu0 0.0
      %1010 = vmatpush1.msra.mxu0 0.0
      %1011 = vmatprep.subr.mxu0 0.0
      %1012 = vmatpush1.msra.mxu0 0.0
      %1013 = vmatprep.subr.mxu0 0.0
      %1014 = vmatpush1.msra.mxu0 0.0
      %1015 = vmatprep.subr.mxu0 0.0
      %1016 = vmatpush1.msra.mxu0 0.0
      %1017 = vmatprep.subr.mxu0 0.0
      %1018 = vmatpush1.msra.mxu0 0.0
      %1019 = vmatprep.mubr.f32.mxu0 0.0
      %1020 = vmatmul.mubr.f32.gmra.mrb[0].mxu0 %v947
      %v1021 = vpop.f32.mrb[0].mxu0
      %v1022 = vadd.f32 0.0, %v1021
      %v1023 = vpop.f32.mrb[0].mxu0
      %v1024 = vadd.f32 0.0, %v1023
      %1025 = vdwg.mxu0
      %1026 = vmatprep.subr.mxu0 0.0
      %1027 = vmatpush1.msra.mxu0 %v953
      %1028 = vmatprep.subr.mxu0 0.0
      %1029 = vmatpush1.msra.mxu0 0.0
      %1030 = vmatprep.subr.mxu0 0.0
      %1031 = vmatpush1.msra.mxu0 0.0
      %1032 = vmatprep.subr.mxu0 0.0
      %1033 = vmatpush1.msra.mxu0 0.0
      %1034 = vmatprep.subr.mxu0 0.0
      %1035 = vmatpush1.msra.mxu0 0.0
      %1036 = vmatprep.subr.mxu0 0.0
      %1037 = vmatpush1.msra.mxu0 0.0
      %1038 = vmatprep.subr.mxu0 0.0
      %1039 = vmatpush1.msra.mxu0 0.0
      %1040 = vmatprep.subr.mxu0 0.0
      %1041 = vmatpush1.msra.mxu0 0.0
      %1042 = vmatprep.subr.mxu0 0.0
      %1043 = vmatpush1.msra.mxu0 0.0
      %1044 = vmatprep.subr.mxu0 0.0
      %1045 = vmatpush1.msra.mxu0 0.0
      %1046 = vmatprep.subr.mxu0 0.0
      %1047 = vmatpush1.msra.mxu0 0.0
      %1048 = vmatprep.subr.mxu0 0.0
      %1049 = vmatpush1.msra.mxu0 0.0
      %1050 = vmatprep.subr.mxu0 0.0
      %1051 = vmatpush1.msra.mxu0 0.0
      %1052 = vmatprep.subr.mxu0 0.0
      %1053 = vmatpush1.msra.mxu0 0.0
      %1054 = vmatprep.subr.mxu0 0.0
      %1055 = vmatpush1.msra.mxu0 0.0
      %1056 = vmatprep.subr.mxu0 0.0
      %1057 = vmatpush1.msra.mxu0 0.0
      %1058 = vmatprep.subr.mxu0 0.0
      %1059 = vmatpush1.msra.mxu0 0.0
      %1060 = vmatprep.subr.mxu0 0.0
      %1061 = vmatpush1.msra.mxu0 0.0
      %1062 = vmatprep.subr.mxu0 0.0
      %1063 = vmatpush1.msra.mxu0 0.0
      %1064 = vmatprep.subr.mxu0 0.0
      %1065 = vmatpush1.msra.mxu0 0.0
      %1066 = vmatprep.subr.mxu0 0.0
      %1067 = vmatpush1.msra.mxu0 0.0
      %1068 = vmatprep.subr.mxu0 0.0
      %1069 = vmatpush1.msra.mxu0 0.0
      %1070 = vmatprep.subr.mxu0 0.0
      %1071 = vmatpush1.msra.mxu0 0.0
      %1072 = vmatprep.subr.mxu0 0.0
      %1073 = vmatpush1.msra.mxu0 0.0
      %1074 = vmatprep.subr.mxu0 0.0
      %1075 = vmatpush1.msra.mxu0 0.0
      %1076 = vmatprep.subr.mxu0 0.0
      %1077 = vmatpush1.msra.mxu0 0.0
      %1078 = vmatprep.subr.mxu0 0.0
      %1079 = vmatpush1.msra.mxu0 0.0
      %1080 = vmatprep.subr.mxu0 0.0
      %1081 = vmatpush1.msra.mxu0 0.0
      %1082 = vmatprep.subr.mxu0 0.0
      %1083 = vmatpush1.msra.mxu0 0.0
      %1084 = vmatprep.subr.mxu0 0.0
      %1085 = vmatpush1.msra.mxu0 0.0
      %1086 = vmatprep.subr.mxu0 0.0
      %1087 = vmatpush1.msra.mxu0 0.0
      %1088 = vmatprep.subr.mxu0 0.0
      %1089 = vmatpush1.msra.mxu0 0.0
      %1090 = vmatprep.mubr.f32.mxu0 0.0
      %1091 = vmatmul.mubr.f32.gmra.mrb[0].mxu0 %v947
      %v1092 = vpop.f32.mrb[0].mxu0
      %v1093 = vadd.f32 0.0, %v1092
      %v1094 = vpop.f32.mrb[0].mxu0
      %1095 = vdwg.mxu0
      %v1096 = vadd.f32 %v934, %v1022
      %v1097 = vadd.f32 %v935, %v1024
      %v1098 = vadd.f32 %v936, %v1093
      %1099 = vrot.lane.b32.xlu0 %v279, 108
      %v1100 = vpop.permute.xlu0 %1099
      %1101 = vrot.lane.b32.xlu0 %v301, 108
      %v1102 = vpop.permute.xlu0 %1101
      %1103 = vrot.lane.b32.xlu0 %v280, 108
      %v1104 = vpop.permute.xlu0 %1103
      %vm1105 = vcmask 883712
      %v1106 = vsel %vm1105, %v1100, %v1102
      %v1107 = vsel %vm1105, %v1102, %v1104
      %v1109 = vsel %vm311, %v286, 0
      %v1111 = vsel %vm315, %v1106, 0
      %v1113 = vsel %vm315, %v1107, 0
      %v1115 = vsel %vm315, %v1104, 0
      %1117 = vmatprep.subr.mxu0 %v1113
      %1118 = vmatpush1.msra.mxu0 %v1111
      %1119 = vmatprep.subr.mxu0 0.0
      %1120 = vmatpush1.msra.mxu0 0.0
      %1121 = vmatprep.subr.mxu0 0.0
      %1122 = vmatpush1.msra.mxu0 0.0
      %1123 = vmatprep.subr.mxu0 0.0
      %1124 = vmatpush1.msra.mxu0 0.0
      %1125 = vmatprep.subr.mxu0 0.0
      %1126 = vmatpush1.msra.mxu0 0.0
      %1127 = vmatprep.subr.mxu0 0.0
      %1128 = vmatpush1.msra.mxu0 0.0
      %1129 = vmatprep.subr.mxu0 0.0
      %1130 = vmatpush1.msra.mxu0 0.0
      %1131 = vmatprep.subr.mxu0 0.0
      %1132 = vmatpush1.msra.mxu0 0.0
      %1133 = vmatprep.subr.mxu0 0.0
      %1134 = vmatpush1.msra.mxu0 0.0
      %1135 = vmatprep.subr.mxu0 0.0
      %1136 = vmatpush1.msra.mxu0 0.0
      %1137 = vmatprep.subr.mxu0 0.0
      %1138 = vmatpush1.msra.mxu0 0.0
      %1139 = vmatprep.subr.mxu0 0.0
      %1140 = vmatpush1.msra.mxu0 0.0
      %1141 = vmatprep.subr.mxu0 0.0
      %1142 = vmatpush1.msra.mxu0 0.0
      %1143 = vmatprep.subr.mxu0 0.0
      %1144 = vmatpush1.msra.mxu0 0.0
      %1145 = vmatprep.subr.mxu0 0.0
      %1146 = vmatpush1.msra.mxu0 0.0
      %1147 = vmatprep.subr.mxu0 0.0
      %1148 = vmatpush1.msra.mxu0 0.0
      %1149 = vmatprep.subr.mxu0 0.0
      %1150 = vmatpush1.msra.mxu0 0.0
      %1151 = vmatprep.subr.mxu0 0.0
      %1152 = vmatpush1.msra.mxu0 0.0
      %1153 = vmatprep.subr.mxu0 0.0
      %1154 = vmatpush1.msra.mxu0 0.0
      %1155 = vmatprep.subr.mxu0 0.0
      %1156 = vmatpush1.msra.mxu0 0.0
      %1157 = vmatprep.subr.mxu0 0.0
      %1158 = vmatpush1.msra.mxu0 0.0
      %1159 = vmatprep.subr.mxu0 0.0
      %1160 = vmatpush1.msra.mxu0 0.0
      %1161 = vmatprep.subr.mxu0 0.0
      %1162 = vmatpush1.msra.mxu0 0.0
      %1163 = vmatprep.subr.mxu0 0.0
      %1164 = vmatpush1.msra.mxu0 0.0
      %1165 = vmatprep.subr.mxu0 0.0
      %1166 = vmatpush1.msra.mxu0 0.0
      %1167 = vmatprep.subr.mxu0 0.0
      %1168 = vmatpush1.msra.mxu0 0.0
      %1169 = vmatprep.subr.mxu0 0.0
      %1170 = vmatpush1.msra.mxu0 0.0
      %1171 = vmatprep.subr.mxu0 0.0
      %1172 = vmatpush1.msra.mxu0 0.0
      %1173 = vmatprep.subr.mxu0 0.0
      %1174 = vmatpush1.msra.mxu0 0.0
      %1175 = vmatprep.subr.mxu0 0.0
      %1176 = vmatpush1.msra.mxu0 0.0
      %1177 = vmatprep.subr.mxu0 0.0
      %1178 = vmatpush1.msra.mxu0 0.0
      %1179 = vmatprep.subr.mxu0 0.0
      %1180 = vmatpush1.msra.mxu0 0.0
      %1181 = vmatprep.mubr.f32.mxu0 0.0
      %1182 = vmatmul.mubr.f32.gmra.mrb[0].mxu0 %v1109
      %v1183 = vpop.f32.mrb[0].mxu0
      %v1184 = vadd.f32 0.0, %v1183
      %v1185 = vpop.f32.mrb[0].mxu0
      %v1186 = vadd.f32 0.0, %v1185
      %1187 = vdwg.mxu0
      %1188 = vmatprep.subr.mxu0 0.0
      %1189 = vmatpush1.msra.mxu0 %v1115
      %1190 = vmatprep.subr.mxu0 0.0
      %1191 = vmatpush1.msra.mxu0 0.0
      %1192 = vmatprep.subr.mxu0 0.0
      %1193 = vmatpush1.msra.mxu0 0.0
      %1194 = vmatprep.subr.mxu0 0.0
      %1195 = vmatpush1.msra.mxu0 0.0
      %1196 = vmatprep.subr.mxu0 0.0
      %1197 = vmatpush1.msra.mxu0 0.0
      %1198 = vmatprep.subr.mxu0 0.0
      %1199 = vmatpush1.msra.mxu0 0.0
      %1200 = vmatprep.subr.mxu0 0.0
      %1201 = vmatpush1.msra.mxu0 0.0
      %1202 = vmatprep.subr.mxu0 0.0
      %1203 = vmatpush1.msra.mxu0 0.0
      %1204 = vmatprep.subr.mxu0 0.0
      %1205 = vmatpush1.msra.mxu0 0.0
      %1206 = vmatprep.subr.mxu0 0.0
      %1207 = vmatpush1.msra.mxu0 0.0
      %1208 = vmatprep.subr.mxu0 0.0
      %1209 = vmatpush1.msra.mxu0 0.0
      %1210 = vmatprep.subr.mxu0 0.0
      %1211 = vmatpush1.msra.mxu0 0.0
      %1212 = vmatprep.subr.mxu0 0.0
      %1213 = vmatpush1.msra.mxu0 0.0
      %1214 = vmatprep.subr.mxu0 0.0
      %1215 = vmatpush1.msra.mxu0 0.0
      %1216 = vmatprep.subr.mxu0 0.0
      %1217 = vmatpush1.msra.mxu0 0.0
      %1218 = vmatprep.subr.mxu0 0.0
      %1219 = vmatpush1.msra.mxu0 0.0
      %1220 = vmatprep.subr.mxu0 0.0
      %1221 = vmatpush1.msra.mxu0 0.0
      %1222 = vmatprep.subr.mxu0 0.0
      %1223 = vmatpush1.msra.mxu0 0.0
      %1224 = vmatprep.subr.mxu0 0.0
      %1225 = vmatpush1.msra.mxu0 0.0
      %1226 = vmatprep.subr.mxu0 0.0
      %1227 = vmatpush1.msra.mxu0 0.0
      %1228 = vmatprep.subr.mxu0 0.0
      %1229 = vmatpush1.msra.mxu0 0.0
      %1230 = vmatprep.subr.mxu0 0.0
      %1231 = vmatpush1.msra.mxu0 0.0
      %1232 = vmatprep.subr.mxu0 0.0
      %1233 = vmatpush1.msra.mxu0 0.0
      %1234 = vmatprep.subr.mxu0 0.0
      %1235 = vmatpush1.msra.mxu0 0.0
      %1236 = vmatprep.subr.mxu0 0.0
      %1237 = vmatpush1.msra.mxu0 0.0
      %1238 = vmatprep.subr.mxu0 0.0
      %1239 = vmatpush1.msra.mxu0 0.0
      %1240 = vmatprep.subr.mxu0 0.0
      %1241 = vmatpush1.msra.mxu0 0.0
      %1242 = vmatprep.subr.mxu0 0.0
      %1243 = vmatpush1.msra.mxu0 0.0
      %1244 = vmatprep.subr.mxu0 0.0
      %1245 = vmatpush1.msra.mxu0 0.0
      %1246 = vmatprep.subr.mxu0 0.0
      %1247 = vmatpush1.msra.mxu0 0.0
      %1248 = vmatprep.subr.mxu0 0.0
      %1249 = vmatpush1.msra.mxu0 0.0
      %1250 = vmatprep.subr.mxu0 0.0
      %1251 = vmatpush1.msra.mxu0 0.0
      %1252 = vmatprep.mubr.f32.mxu0 0.0
      %1253 = vmatmul.mubr.f32.gmra.mrb[0].mxu0 %v1109
      %v1254 = vpop.f32.mrb[0].mxu0
      %v1255 = vadd.f32 0.0, %v1254
      %v1256 = vpop.f32.mrb[0].mxu0
      %1257 = vdwg.mxu0
      %v1258 = vadd.f32 %v1096, %v1184
      %v1259 = vadd.f32 %v1097, %v1186
      %v1260 = vadd.f32 %v1098, %v1255
      %1261 = vrot.lane.b32.xlu0 %v279, 92
      %v1262 = vpop.permute.xlu0 %1261
      %1263 = vrot.lane.b32.xlu0 %v301, 92
      %v1264 = vpop.permute.xlu0 %1263
      %1265 = vrot.lane.b32.xlu0 %v280, 92
      %v1266 = vpop.permute.xlu0 %1265
      %vm1267 = vcmask 752640
      %v1268 = vsel %vm1267, %v1262, %v1264
      %v1269 = vsel %vm1267, %v1264, %v1266
      %v1271 = vsel %vm311, %v287, 0
      %v1273 = vsel %vm315, %v1268, 0
      %v1275 = vsel %vm315, %v1269, 0
      %v1277 = vsel %vm315, %v1266, 0
      %1279 = vmatprep.subr.mxu0 %v1275
      %1280 = vmatpush1.msra.mxu0 %v1273
      %1281 = vmatprep.subr.mxu0 0.0
      %1282 = vmatpush1.msra.mxu0 0.0
      %1283 = vmatprep.subr.mxu0 0.0
      %1284 = vmatpush1.msra.mxu0 0.0
      %1285 = vmatprep.subr.mxu0 0.0
      %1286 = vmatpush1.msra.mxu0 0.0
      %1287 = vmatprep.subr.mxu0 0.0
      %1288 = vmatpush1.msra.mxu0 0.0
      %1289 = vmatprep.subr.mxu0 0.0
      %1290 = vmatpush1.msra.mxu0 0.0
      %1291 = vmatprep.subr.mxu0 0.0
      %1292 = vmatpush1.msra.mxu0 0.0
      %1293 = vmatprep.subr.mxu0 0.0
      %1294 = vmatpush1.msra.mxu0 0.0
      %1295 = vmatprep.subr.mxu0 0.0
      %1296 = vmatpush1.msra.mxu0 0.0
      %1297 = vmatprep.subr.mxu0 0.0
      %1298 = vmatpush1.msra.mxu0 0.0
      %1299 = vmatprep.subr.mxu0 0.0
      %1300 = vmatpush1.msra.mxu0 0.0
      %1301 = vmatprep.subr.mxu0 0.0
      %1302 = vmatpush1.msra.mxu0 0.0
      %1303 = vmatprep.subr.mxu0 0.0
      %1304 = vmatpush1.msra.mxu0 0.0
      %1305 = vmatprep.subr.mxu0 0.0
      %1306 = vmatpush1.msra.mxu0 0.0
      %1307 = vmatprep.subr.mxu0 0.0
      %1308 = vmatpush1.msra.mxu0 0.0
      %1309 = vmatprep.subr.mxu0 0.0
      %1310 = vmatpush1.msra.mxu0 0.0
      %1311 = vmatprep.subr.mxu0 0.0
      %1312 = vmatpush1.msra.mxu0 0.0
      %1313 = vmatprep.subr.mxu0 0.0
      %1314 = vmatpush1.msra.mxu0 0.0
      %1315 = vmatprep.subr.mxu0 0.0
      %1316 = vmatpush1.msra.mxu0 0.0
      %1317 = vmatprep.subr.mxu0 0.0
      %1318 = vmatpush1.msra.mxu0 0.0
      %1319 = vmatprep.subr.mxu0 0.0
      %1320 = vmatpush1.msra.mxu0 0.0
      %1321 = vmatprep.subr.mxu0 0.0
      %1322 = vmatpush1.msra.mxu0 0.0
      %1323 = vmatprep.subr.mxu0 0.0
      %1324 = vmatpush1.msra.mxu0 0.0
      %1325 = vmatprep.subr.mxu0 0.0
      %1326 = vmatpush1.msra.mxu0 0.0
      %1327 = vmatprep.subr.mxu0 0.0
      %1328 = vmatpush1.msra.mxu0 0.0
      %1329 = vmatprep.subr.mxu0 0.0
      %1330 = vmatpush1.msra.mxu0 0.0
      %1331 = vmatprep.subr.mxu0 0.0
      %1332 = vmatpush1.msra.mxu0 0.0
      %1333 = vmatprep.subr.mxu0 0.0
      %1334 = vmatpush1.msra.mxu0 0.0
      %1335 = vmatprep.subr.mxu0 0.0
      %1336 = vmatpush1.msra.mxu0 0.0
      %1337 = vmatprep.subr.mxu0 0.0
      %1338 = vmatpush1.msra.mxu0 0.0
      %1339 = vmatprep.subr.mxu0 0.0
      %1340 = vmatpush1.msra.mxu0 0.0
      %1341 = vmatprep.subr.mxu0 0.0
      %1342 = vmatpush1.msra.mxu0 0.0
      %1343 = vmatprep.mubr.f32.mxu0 0.0
      %1344 = vmatmul.mubr.f32.gmra.mrb[0].mxu0 %v1271
      %v1345 = vpop.f32.mrb[0].mxu0
      %v1346 = vadd.f32 0.0, %v1345
      %v1347 = vpop.f32.mrb[0].mxu0
      %v1348 = vadd.f32 0.0, %v1347
      %1349 = vdwg.mxu0
      %1350 = vmatprep.subr.mxu0 0.0
      %1351 = vmatpush1.msra.mxu0 %v1277
      %1352 = vmatprep.subr.mxu0 0.0
      %1353 = vmatpush1.msra.mxu0 0.0
      %1354 = vmatprep.subr.mxu0 0.0
      %1355 = vmatpush1.msra.mxu0 0.0
      %1356 = vmatprep.subr.mxu0 0.0
      %1357 = vmatpush1.msra.mxu0 0.0
      %1358 = vmatprep.subr.mxu0 0.0
      %1359 = vmatpush1.msra.mxu0 0.0
      %1360 = vmatprep.subr.mxu0 0.0
      %1361 = vmatpush1.msra.mxu0 0.0
      %1362 = vmatprep.subr.mxu0 0.0
      %1363 = vmatpush1.msra.mxu0 0.0
      %1364 = vmatprep.subr.mxu0 0.0
      %1365 = vmatpush1.msra.mxu0 0.0
      %1366 = vmatprep.subr.mxu0 0.0
      %1367 = vmatpush1.msra.mxu0 0.0
      %1368 = vmatprep.subr.mxu0 0.0
      %1369 = vmatpush1.msra.mxu0 0.0
      %1370 = vmatprep.subr.mxu0 0.0
      %1371 = vmatpush1.msra.mxu0 0.0
      %1372 = vmatprep.subr.mxu0 0.0
      %1373 = vmatpush1.msra.mxu0 0.0
      %1374 = vmatprep.subr.mxu0 0.0
      %1375 = vmatpush1.msra.mxu0 0.0
      %1376 = vmatprep.subr.mxu0 0.0
      %1377 = vmatpush1.msra.mxu0 0.0
      %1378 = vmatprep.subr.mxu0 0.0
      %1379 = vmatpush1.msra.mxu0 0.0
      %1380 = vmatprep.subr.mxu0 0.0
      %1381 = vmatpush1.msra.mxu0 0.0
      %1382 = vmatprep.subr.mxu0 0.0
      %1383 = vmatpush1.msra.mxu0 0.0
      %1384 = vmatprep.subr.mxu0 0.0
      %1385 = vmatpush1.msra.mxu0 0.0
      %1386 = vmatprep.subr.mxu0 0.0
      %1387 = vmatpush1.msra.mxu0 0.0
      %1388 = vmatprep.subr.mxu0 0.0
      %1389 = vmatpush1.msra.mxu0 0.0
      %1390 = vmatprep.subr.mxu0 0.0
      %1391 = vmatpush1.msra.mxu0 0.0
      %1392 = vmatprep.subr.mxu0 0.0
      %1393 = vmatpush1.msra.mxu0 0.0
      %1394 = vmatprep.subr.mxu0 0.0
      %1395 = vmatpush1.msra.mxu0 0.0
      %1396 = vmatprep.subr.mxu0 0.0
      %1397 = vmatpush1.msra.mxu0 0.0
      %1398 = vmatprep.subr.mxu0 0.0
      %1399 = vmatpush1.msra.mxu0 0.0
      %1400 = vmatprep.subr.mxu0 0.0
      %1401 = vmatpush1.msra.mxu0 0.0
      %1402 = vmatprep.subr.mxu0 0.0
      %1403 = vmatpush1.msra.mxu0 0.0
      %1404 = vmatprep.subr.mxu0 0.0
      %1405 = vmatpush1.msra.mxu0 0.0
      %1406 = vmatprep.subr.mxu0 0.0
      %1407 = vmatpush1.msra.mxu0 0.0
      %1408 = vmatprep.subr.mxu0 0.0
      %1409 = vmatpush1.msra.mxu0 0.0
      %1410 = vmatprep.subr.mxu0 0.0
      %1411 = vmatpush1.msra.mxu0 0.0
      %1412 = vmatprep.subr.mxu0 0.0
      %1413 = vmatpush1.msra.mxu0 0.0
      %1414 = vmatprep.mubr.f32.mxu0 0.0
      %1415 = vmatmul.mubr.f32.gmra.mrb[0].mxu0 %v1271
      %v1416 = vpop.f32.mrb[0].mxu0
      %v1417 = vadd.f32 0.0, %v1416
      %v1418 = vpop.f32.mrb[0].mxu0
      %1419 = vdwg.mxu0
      %v1420 = vadd.f32 %v1258, %v1346
      %v1421 = vadd.f32 %v1259, %v1348
      %v1422 = vadd.f32 %v1260, %v1417
      %1423 = vrot.lane.b32.xlu0 %v279, 91
      %v1424 = vpop.permute.xlu0 %1423
      %1425 = vrot.lane.b32.xlu0 %v301, 91
      %v1426 = vpop.permute.xlu0 %1425
      %1427 = vrot.lane.b32.xlu0 %v280, 91
      %v1428 = vpop.permute.xlu0 %1427
      %vm1429 = vcmask 744448
      %v1430 = vsel %vm1429, %v1424, %v1426
      %v1431 = vsel %vm1429, %v1426, %v1428
      %v1433 = vsel %vm311, %v288, 0
      %v1435 = vsel %vm315, %v1430, 0
      %v1437 = vsel %vm315, %v1431, 0
      %v1439 = vsel %vm315, %v1428, 0
      %1441 = vmatprep.subr.mxu0 %v1437
      %1442 = vmatpush1.msra.mxu0 %v1435
      %1443 = vmatprep.subr.mxu0 0.0
      %1444 = vmatpush1.msra.mxu0 0.0
      %1445 = vmatprep.subr.mxu0 0.0
      %1446 = vmatpush1.msra.mxu0 0.0
      %1447 = vmatprep.subr.mxu0 0.0
      %1448 = vmatpush1.msra.mxu0 0.0
      %1449 = vmatprep.subr.mxu0 0.0
      %1450 = vmatpush1.msra.mxu0 0.0
      %1451 = vmatprep.subr.mxu0 0.0
      %1452 = vmatpush1.msra.mxu0 0.0
      %1453 = vmatprep.subr.mxu0 0.0
      %1454 = vmatpush1.msra.mxu0 0.0
      %1455 = vmatprep.subr.mxu0 0.0
      %1456 = vmatpush1.msra.mxu0 0.0
      %1457 = vmatprep.subr.mxu0 0.0
      %1458 = vmatpush1.msra.mxu0 0.0
      %1459 = vmatprep.subr.mxu0 0.0
      %1460 = vmatpush1.msra.mxu0 0.0
      %1461 = vmatprep.subr.mxu0 0.0
      %1462 = vmatpush1.msra.mxu0 0.0
      %1463 = vmatprep.subr.mxu0 0.0
      %1464 = vmatpush1.msra.mxu0 0.0
      %1465 = vmatprep.subr.mxu0 0.0
      %1466 = vmatpush1.msra.mxu0 0.0
      %1467 = vmatprep.subr.mxu0 0.0
      %1468 = vmatpush1.msra.mxu0 0.0
      %1469 = vmatprep.subr.mxu0 0.0
      %1470 = vmatpush1.msra.mxu0 0.0
      %1471 = vmatprep.subr.mxu0 0.0
      %1472 = vmatpush1.msra.mxu0 0.0
      %1473 = vmatprep.subr.mxu0 0.0
      %1474 = vmatpush1.msra.mxu0 0.0
      %1475 = vmatprep.subr.mxu0 0.0
      %1476 = vmatpush1.msra.mxu0 0.0
      %1477 = vmatprep.subr.mxu0 0.0
      %1478 = vmatpush1.msra.mxu0 0.0
      %1479 = vmatprep.subr.mxu0 0.0
      %1480 = vmatpush1.msra.mxu0 0.0
      %1481 = vmatprep.subr.mxu0 0.0
      %1482 = vmatpush1.msra.mxu0 0.0
      %1483 = vmatprep.subr.mxu0 0.0
      %1484 = vmatpush1.msra.mxu0 0.0
      %1485 = vmatprep.subr.mxu0 0.0
      %1486 = vmatpush1.msra.mxu0 0.0
      %1487 = vmatprep.subr.mxu0 0.0
      %1488 = vmatpush1.msra.mxu0 0.0
      %1489 = vmatprep.subr.mxu0 0.0
      %1490 = vmatpush1.msra.mxu0 0.0
      %1491 = vmatprep.subr.mxu0 0.0
      %1492 = vmatpush1.msra.mxu0 0.0
      %1493 = vmatprep.subr.mxu0 0.0
      %1494 = vmatpush1.msra.mxu0 0.0
      %1495 = vmatprep.subr.mxu0 0.0
      %1496 = vmatpush1.msra.mxu0 0.0
      %1497 = vmatprep.subr.mxu0 0.0
      %1498 = vmatpush1.msra.mxu0 0.0
      %1499 = vmatprep.subr.mxu0 0.0
      %1500 = vmatpush1.msra.mxu0 0.0
      %1501 = vmatprep.subr.mxu0 0.0
      %1502 = vmatpush1.msra.mxu0 0.0
      %1503 = vmatprep.subr.mxu0 0.0
      %1504 = vmatpush1.msra.mxu0 0.0
      %1505 = vmatprep.mubr.f32.mxu0 0.0
      %1506 = vmatmul.mubr.f32.gmra.mrb[0].mxu0 %v1433
      %v1507 = vpop.f32.mrb[0].mxu0
      %v1508 = vadd.f32 0.0, %v1507
      %v1509 = vpop.f32.mrb[0].mxu0
      %v1510 = vadd.f32 0.0, %v1509
      %1511 = vdwg.mxu0
      %1512 = vmatprep.subr.mxu0 0.0
      %1513 = vmatpush1.msra.mxu0 %v1439
      %1514 = vmatprep.subr.mxu0 0.0
      %1515 = vmatpush1.msra.mxu0 0.0
      %1516 = vmatprep.subr.mxu0 0.0
      %1517 = vmatpush1.msra.mxu0 0.0
      %1518 = vmatprep.subr.mxu0 0.0
      %1519 = vmatpush1.msra.mxu0 0.0
      %1520 = vmatprep.subr.mxu0 0.0
      %1521 = vmatpush1.msra.mxu0 0.0
      %1522 = vmatprep.subr.mxu0 0.0
      %1523 = vmatpush1.msra.mxu0 0.0
      %1524 = vmatprep.subr.mxu0 0.0
      %1525 = vmatpush1.msra.mxu0 0.0
      %1526 = vmatprep.subr.mxu0 0.0
      %1527 = vmatpush1.msra.mxu0 0.0
      %1528 = vmatprep.subr.mxu0 0.0
      %1529 = vmatpush1.msra.mxu0 0.0
      %1530 = vmatprep.subr.mxu0 0.0
      %1531 = vmatpush1.msra.mxu0 0.0
      %1532 = vmatprep.subr.mxu0 0.0
      %1533 = vmatpush1.msra.mxu0 0.0
      %1534 = vmatprep.subr.mxu0 0.0
      %1535 = vmatpush1.msra.mxu0 0.0
      %1536 = vmatprep.subr.mxu0 0.0
      %1537 = vmatpush1.msra.mxu0 0.0
      %1538 = vmatprep.subr.mxu0 0.0
      %1539 = vmatpush1.msra.mxu0 0.0
      %1540 = vmatprep.subr.mxu0 0.0
      %1541 = vmatpush1.msra.mxu0 0.0
      %1542 = vmatprep.subr.mxu0 0.0
      %1543 = vmatpush1.msra.mxu0 0.0
      %1544 = vmatprep.subr.mxu0 0.0
      %1545 = vmatpush1.msra.mxu0 0.0
      %1546 = vmatprep.subr.mxu0 0.0
      %1547 = vmatpush1.msra.mxu0 0.0
      %1548 = vmatprep.subr.mxu0 0.0
      %1549 = vmatpush1.msra.mxu0 0.0
      %1550 = vmatprep.subr.mxu0 0.0
      %1551 = vmatpush1.msra.mxu0 0.0
      %1552 = vmatprep.subr.mxu0 0.0
      %1553 = vmatpush1.msra.mxu0 0.0
      %1554 = vmatprep.subr.mxu0 0.0
      %1555 = vmatpush1.msra.mxu0 0.0
      %1556 = vmatprep.subr.mxu0 0.0
      %1557 = vmatpush1.msra.mxu0 0.0
      %1558 = vmatprep.subr.mxu0 0.0
      %1559 = vmatpush1.msra.mxu0 0.0
      %1560 = vmatprep.subr.mxu0 0.0
      %1561 = vmatpush1.msra.mxu0 0.0
      %1562 = vmatprep.subr.mxu0 0.0
      %1563 = vmatpush1.msra.mxu0 0.0
      %1564 = vmatprep.subr.mxu0 0.0
      %1565 = vmatpush1.msra.mxu0 0.0
      %1566 = vmatprep.subr.mxu0 0.0
      %1567 = vmatpush1.msra.mxu0 0.0
      %1568 = vmatprep.subr.mxu0 0.0
      %1569 = vmatpush1.msra.mxu0 0.0
      %1570 = vmatprep.subr.mxu0 0.0
      %1571 = vmatpush1.msra.mxu0 0.0
      %1572 = vmatprep.subr.mxu0 0.0
      %1573 = vmatpush1.msra.mxu0 0.0
      %1574 = vmatprep.subr.mxu0 0.0
      %1575 = vmatpush1.msra.mxu0 0.0
      %1576 = vmatprep.mubr.f32.mxu0 0.0
      %1577 = vmatmul.mubr.f32.gmra.mrb[0].mxu0 %v1433
      %v1578 = vpop.f32.mrb[0].mxu0
      %v1579 = vadd.f32 0.0, %v1578
      %v1580 = vpop.f32.mrb[0].mxu0
      %1581 = vdwg.mxu0
      %v1582 = vadd.f32 %v1420, %v1508
      %v1583 = vadd.f32 %v1421, %v1510
      %v1584 = vadd.f32 %v1422, %v1579
      %1585 = vrot.lane.b32.xlu0 %v279, 90
      %v1586 = vpop.permute.xlu0 %1585
      %1587 = vrot.lane.b32.xlu0 %v301, 90
      %v1588 = vpop.permute.xlu0 %1587
      %1589 = vrot.lane.b32.xlu0 %v280, 90
      %v1590 = vpop.permute.xlu0 %1589
      %vm1591 = vcmask 736256
      %v1592 = vsel %vm1591, %v1586, %v1588
      %v1593 = vsel %vm1591, %v1588, %v1590
      %v1595 = vsel %vm311, %v289, 0
      %v1597 = vsel %vm315, %v1592, 0
      %v1599 = vsel %vm315, %v1593, 0
      %v1601 = vsel %vm315, %v1590, 0
      %1603 = vmatprep.subr.mxu0 %v1599
      %1604 = vmatpush1.msra.mxu0 %v1597
      %1605 = vmatprep.subr.mxu0 0.0
      %1606 = vmatpush1.msra.mxu0 0.0
      %1607 = vmatprep.subr.mxu0 0.0
      %1608 = vmatpush1.msra.mxu0 0.0
      %1609 = vmatprep.subr.mxu0 0.0
      %1610 = vmatpush1.msra.mxu0 0.0
      %1611 = vmatprep.subr.mxu0 0.0
      %1612 = vmatpush1.msra.mxu0 0.0
      %1613 = vmatprep.subr.mxu0 0.0
      %1614 = vmatpush1.msra.mxu0 0.0
      %1615 = vmatprep.subr.mxu0 0.0
      %1616 = vmatpush1.msra.mxu0 0.0
      %1617 = vmatprep.subr.mxu0 0.0
      %1618 = vmatpush1.msra.mxu0 0.0
      %1619 = vmatprep.subr.mxu0 0.0
      %1620 = vmatpush1.msra.mxu0 0.0
      %1621 = vmatprep.subr.mxu0 0.0
      %1622 = vmatpush1.msra.mxu0 0.0
      %1623 = vmatprep.subr.mxu0 0.0
      %1624 = vmatpush1.msra.mxu0 0.0
      %1625 = vmatprep.subr.mxu0 0.0
      %1626 = vmatpush1.msra.mxu0 0.0
      %1627 = vmatprep.subr.mxu0 0.0
      %1628 = vmatpush1.msra.mxu0 0.0
      %1629 = vmatprep.subr.mxu0 0.0
      %1630 = vmatpush1.msra.mxu0 0.0
      %1631 = vmatprep.subr.mxu0 0.0
      %1632 = vmatpush1.msra.mxu0 0.0
      %1633 = vmatprep.subr.mxu0 0.0
      %1634 = vmatpush1.msra.mxu0 0.0
      %1635 = vmatprep.subr.mxu0 0.0
      %1636 = vmatpush1.msra.mxu0 0.0
      %1637 = vmatprep.subr.mxu0 0.0
      %1638 = vmatpush1.msra.mxu0 0.0
      %1639 = vmatprep.subr.mxu0 0.0
      %1640 = vmatpush1.msra.mxu0 0.0
      %1641 = vmatprep.subr.mxu0 0.0
      %1642 = vmatpush1.msra.mxu0 0.0
      %1643 = vmatprep.subr.mxu0 0.0
      %1644 = vmatpush1.msra.mxu0 0.0
      %1645 = vmatprep.subr.mxu0 0.0
      %1646 = vmatpush1.msra.mxu0 0.0
      %1647 = vmatprep.subr.mxu0 0.0
      %1648 = vmatpush1.msra.mxu0 0.0
      %1649 = vmatprep.subr.mxu0 0.0
      %1650 = vmatpush1.msra.mxu0 0.0
      %1651 = vmatprep.subr.mxu0 0.0
      %1652 = vmatpush1.msra.mxu0 0.0
      %1653 = vmatprep.subr.mxu0 0.0
      %1654 = vmatpush1.msra.mxu0 0.0
      %1655 = vmatprep.subr.mxu0 0.0
      %1656 = vmatpush1.msra.mxu0 0.0
      %1657 = vmatprep.subr.mxu0 0.0
      %1658 = vmatpush1.msra.mxu0 0.0
      %1659 = vmatprep.subr.mxu0 0.0
      %1660 = vmatpush1.msra.mxu0 0.0
      %1661 = vmatprep.subr.mxu0 0.0
      %1662 = vmatpush1.msra.mxu0 0.0
      %1663 = vmatprep.subr.mxu0 0.0
      %1664 = vmatpush1.msra.mxu0 0.0
      %1665 = vmatprep.subr.mxu0 0.0
      %1666 = vmatpush1.msra.mxu0 0.0
      %1667 = vmatprep.mubr.f32.mxu0 0.0
      %1668 = vmatmul.mubr.f32.gmra.mrb[0].mxu0 %v1595
      %v1669 = vpop.f32.mrb[0].mxu0
      %v1670 = vadd.f32 0.0, %v1669
      %v1671 = vpop.f32.mrb[0].mxu0
      %v1672 = vadd.f32 0.0, %v1671
      %1673 = vdwg.mxu0
      %1674 = vmatprep.subr.mxu0 0.0
      %1675 = vmatpush1.msra.mxu0 %v1601
      %1676 = vmatprep.subr.mxu0 0.0
      %1677 = vmatpush1.msra.mxu0 0.0
      %1678 = vmatprep.subr.mxu0 0.0
      %1679 = vmatpush1.msra.mxu0 0.0
      %1680 = vmatprep.subr.mxu0 0.0
      %1681 = vmatpush1.msra.mxu0 0.0
      %1682 = vmatprep.subr.mxu0 0.0
      %1683 = vmatpush1.msra.mxu0 0.0
      %1684 = vmatprep.subr.mxu0 0.0
      %1685 = vmatpush1.msra.mxu0 0.0
      %1686 = vmatprep.subr.mxu0 0.0
      %1687 = vmatpush1.msra.mxu0 0.0
      %1688 = vmatprep.subr.mxu0 0.0
      %1689 = vmatpush1.msra.mxu0 0.0
      %1690 = vmatprep.subr.mxu0 0.0
      %1691 = vmatpush1.msra.mxu0 0.0
      %1692 = vmatprep.subr.mxu0 0.0
      %1693 = vmatpush1.msra.mxu0 0.0
      %1694 = vmatprep.subr.mxu0 0.0
      %1695 = vmatpush1.msra.mxu0 0.0
      %1696 = vmatprep.subr.mxu0 0.0
      %1697 = vmatpush1.msra.mxu0 0.0
      %1698 = vmatprep.subr.mxu0 0.0
      %1699 = vmatpush1.msra.mxu0 0.0
      %1700 = vmatprep.subr.mxu0 0.0
      %1701 = vmatpush1.msra.mxu0 0.0
      %1702 = vmatprep.subr.mxu0 0.0
      %1703 = vmatpush1.msra.mxu0 0.0
      %1704 = vmatprep.subr.mxu0 0.0
      %1705 = vmatpush1.msra.mxu0 0.0
      %1706 = vmatprep.subr.mxu0 0.0
      %1707 = vmatpush1.msra.mxu0 0.0
      %1708 = vmatprep.subr.mxu0 0.0
      %1709 = vmatpush1.msra.mxu0 0.0
      %1710 = vmatprep.subr.mxu0 0.0
      %1711 = vmatpush1.msra.mxu0 0.0
      %1712 = vmatprep.subr.mxu0 0.0
      %1713 = vmatpush1.msra.mxu0 0.0
      %1714 = vmatprep.subr.mxu0 0.0
      %1715 = vmatpush1.msra.mxu0 0.0
      %1716 = vmatprep.subr.mxu0 0.0
      %1717 = vmatpush1.msra.mxu0 0.0
      %1718 = vmatprep.subr.mxu0 0.0
      %1719 = vmatpush1.msra.mxu0 0.0
      %1720 = vmatprep.subr.mxu0 0.0
      %1721 = vmatpush1.msra.mxu0 0.0
      %1722 = vmatprep.subr.mxu0 0.0
      %1723 = vmatpush1.msra.mxu0 0.0
      %1724 = vmatprep.subr.mxu0 0.0
      %1725 = vmatpush1.msra.mxu0 0.0
      %1726 = vmatprep.subr.mxu0 0.0
      %1727 = vmatpush1.msra.mxu0 0.0
      %1728 = vmatprep.subr.mxu0 0.0
      %1729 = vmatpush1.msra.mxu0 0.0
      %1730 = vmatprep.subr.mxu0 0.0
      %1731 = vmatpush1.msra.mxu0 0.0
      %1732 = vmatprep.subr.mxu0 0.0
      %1733 = vmatpush1.msra.mxu0 0.0
      %1734 = vmatprep.subr.mxu0 0.0
      %1735 = vmatpush1.msra.mxu0 0.0
      %1736 = vmatprep.subr.mxu0 0.0
      %1737 = vmatpush1.msra.mxu0 0.0
      %1738 = vmatprep.mubr.f32.mxu0 0.0
      %1739 = vmatmul.mubr.f32.gmra.mrb[0].mxu0 %v1595
      %v1740 = vpop.f32.mrb[0].mxu0
      %v1741 = vadd.f32 0.0, %v1740
      %v1742 = vpop.f32.mrb[0].mxu0
      %1743 = vdwg.mxu0
      %v1744 = vadd.f32 %v1582, %v1670
      %v1745 = vadd.f32 %v1583, %v1672
      %v1746 = vadd.f32 %v1584, %v1741
      %v1747 = vld [vmem:[%s2] sm:$0xff]
      %1749 = vset.pattern.permute.xlu0 0
      %1750 = vperm.xlu0 %1749, %v1747
      %v1751 = vpop.permute.xlu0 %1750
      %v1753 = vadd.f32 %v1744, %v1751
      %v1754 = vadd.f32 %v1745, %v1751
      %v1755 = vadd.f32 %v1746, %v1751
      %v1756 = vmax.f32 %v1753, 0.0
      %v1757 = vmax.f32 %v1754, 0.0
      %v1758 = vmax.f32 %v1755, 0.0
      %v1759 = vld [vmem:[%s6] sm:$0x7]
      %v1761 = vlaneseq
      %v1762 = vshrl.u32 %v1761, 7
      %v1763 = vsub.s32 0, %v1762
      %v1764 = vrot.slane %v1759, %v1763
      %v1765 = vlaneseq
      %v1766 = vshrl.u32 %v1765, 7
      %v1767 = vsub.s32 1, %v1766
      %v1768 = vrot.slane %v1759, %v1767
      %v1769 = vlaneseq
      %v1770 = vshrl.u32 %v1769, 7
      %v1771 = vsub.s32 2, %v1770
      %v1772 = vrot.slane %v1759, %v1771
      %v1776 = vmul.f32 %v1756, %v1764
      %v1777 = vmul.f32 %v1757, %v1768
      %v1778 = vmul.f32 %v1758, %v1772
      %vm1779 = vcmask 154624
      %1780 = vst.msk [vmem:[#allocation2] sm:$0xff] %vm1779, 0.0
      %vm1781 = vcmask 868024
      %1782 = vst.msk [vmem:[#allocation2 + $0x10] sm:$0xff] %vm1781, 0.0
      %1786 = vrot.lane.b32.xlu0 %v1776, 19
      %v1787 = vpop.permute.xlu0 %1786
      %1788 = vrot.lane.b32.xlu0 %v1777, 19
      %v1789 = vpop.permute.xlu0 %1788
      %1790 = vrot.lane.b32.xlu0 %v1778, 19
      %v1791 = vpop.permute.xlu0 %1790
      %v1792 = vsel %vm1779, %v1787, %v1789
      %v1793 = vsel %vm1779, %v1789, %v1791
      %vm1797 = vcmask 1047704
      %1798 = vst.msk [vmem:[#allocation2] sm:$0xff] %vm1797, %v1787
      %1799 = vst [vmem:[#allocation2 + $0x8] sm:$0xff] %v1792
      %vm1800 = vcmask 711680
      %1801 = vst.msk [vmem:[#allocation2 + $0x10] sm:$0xff] %vm1800, %v1793
      %v1802 = vld [vmem:[%s4] sm:$0xff]
      %v1803 = vld [vmem:[#allocation2] sm:$0xff]
      %v1804 = vld [vmem:[#allocation2 + $0x8] sm:$0xff]
      %v1805 = vld [vmem:[#allocation2 + $0x10] sm:$0xff]
      %vm1806 = vcmask 64512
      %v1808 = vsel %vm1806, %v290, 0
      %1810 = vmatprep.subr.mxu0 %v1804
      %1811 = vmatpush1.msra.mxu0 %v1803
      %1812 = vmatprep.subr.mxu0 0.0
      %1813 = vmatpush1.msra.mxu0 0.0
      %1814 = vmatprep.subr.mxu0 0.0
      %1815 = vmatpush1.msra.mxu0 0.0
      %1816 = vmatprep.subr.mxu0 0.0
      %1817 = vmatpush1.msra.mxu0 0.0
      %1818 = vmatprep.subr.mxu0 0.0
      %1819 = vmatpush1.msra.mxu0 0.0
      %1820 = vmatprep.subr.mxu0 0.0
      %1821 = vmatpush1.msra.mxu0 0.0
      %1822 = vmatprep.subr.mxu0 0.0
      %1823 = vmatpush1.msra.mxu0 0.0
      %1824 = vmatprep.subr.mxu0 0.0
      %1825 = vmatpush1.msra.mxu0 0.0
      %1826 = vmatprep.subr.mxu0 0.0
      %1827 = vmatpush1.msra.mxu0 0.0
      %1828 = vmatprep.subr.mxu0 0.0
      %1829 = vmatpush1.msra.mxu0 0.0
      %1830 = vmatprep.subr.mxu0 0.0
      %1831 = vmatpush1.msra.mxu0 0.0
      %1832 = vmatprep.subr.mxu0 0.0
      %1833 = vmatpush1.msra.mxu0 0.0
      %1834 = vmatprep.subr.mxu0 0.0
      %1835 = vmatpush1.msra.mxu0 0.0
      %1836 = vmatprep.subr.mxu0 0.0
      %1837 = vmatpush1.msra.mxu0 0.0
      %1838 = vmatprep.subr.mxu0 0.0
      %1839 = vmatpush1.msra.mxu0 0.0
      %1840 = vmatprep.subr.mxu0 0.0
      %1841 = vmatpush1.msra.mxu0 0.0
      %1842 = vmatprep.subr.mxu0 0.0
      %1843 = vmatpush1.msra.mxu0 0.0
      %1844 = vmatprep.subr.mxu0 0.0
      %1845 = vmatpush1.msra.mxu0 0.0
      %1846 = vmatprep.subr.mxu0 0.0
      %1847 = vmatpush1.msra.mxu0 0.0
      %1848 = vmatprep.subr.mxu0 0.0
      %1849 = vmatpush1.msra.mxu0 0.0
      %1850 = vmatprep.subr.mxu0 0.0
      %1851 = vmatpush1.msra.mxu0 0.0
      %1852 = vmatprep.subr.mxu0 0.0
      %1853 = vmatpush1.msra.mxu0 0.0
      %1854 = vmatprep.subr.mxu0 0.0
      %1855 = vmatpush1.msra.mxu0 0.0
      %1856 = vmatprep.subr.mxu0 0.0
      %1857 = vmatpush1.msra.mxu0 0.0
      %1858 = vmatprep.subr.mxu0 0.0
      %1859 = vmatpush1.msra.mxu0 0.0
      %1860 = vmatprep.subr.mxu0 0.0
      %1861 = vmatpush1.msra.mxu0 0.0
      %1862 = vmatprep.subr.mxu0 0.0
      %1863 = vmatpush1.msra.mxu0 0.0
      %1864 = vmatprep.subr.mxu0 0.0
      %1865 = vmatpush1.msra.mxu0 0.0
      %1866 = vmatprep.subr.mxu0 0.0
      %1867 = vmatpush1.msra.mxu0 0.0
      %1868 = vmatprep.subr.mxu0 0.0
      %1869 = vmatpush1.msra.mxu0 0.0
      %1870 = vmatprep.subr.mxu0 0.0
      %1871 = vmatpush1.msra.mxu0 0.0
      %1872 = vmatprep.subr.mxu0 0.0
      %1873 = vmatpush1.msra.mxu0 0.0
      %1874 = vmatprep.mubr.f32.mxu0 0.0
      %1875 = vmatmul.mubr.f32.gmra.mrb[0].mxu0 %v1808
      %v1876 = vpop.f32.mrb[0].mxu0
      %v1877 = vadd.f32 0.0, %v1876
      %v1878 = vpop.f32.mrb[0].mxu0
      %v1879 = vadd.f32 0.0, %v1878
      %1880 = vdwg.mxu0
      %1881 = vmatprep.subr.mxu0 0.0
      %1882 = vmatpush1.msra.mxu0 %v1805
      %1883 = vmatprep.subr.mxu0 0.0
      %1884 = vmatpush1.msra.mxu0 0.0
      %1885 = vmatprep.subr.mxu0 0.0
      %1886 = vmatpush1.msra.mxu0 0.0
      %1887 = vmatprep.subr.mxu0 0.0
      %1888 = vmatpush1.msra.mxu0 0.0
      %1889 = vmatprep.subr.mxu0 0.0
      %1890 = vmatpush1.msra.mxu0 0.0
      %1891 = vmatprep.subr.mxu0 0.0
      %1892 = vmatpush1.msra.mxu0 0.0
      %1893 = vmatprep.subr.mxu0 0.0
      %1894 = vmatpush1.msra.mxu0 0.0
      %1895 = vmatprep.subr.mxu0 0.0
      %1896 = vmatpush1.msra.mxu0 0.0
      %1897 = vmatprep.subr.mxu0 0.0
      %1898 = vmatpush1.msra.mxu0 0.0
      %1899 = vmatprep.subr.mxu0 0.0
      %1900 = vmatpush1.msra.mxu0 0.0
      %1901 = vmatprep.subr.mxu0 0.0
      %1902 = vmatpush1.msra.mxu0 0.0
      %1903 = vmatprep.subr.mxu0 0.0
      %1904 = vmatpush1.msra.mxu0 0.0
      %1905 = vmatprep.subr.mxu0 0.0
      %1906 = vmatpush1.msra.mxu0 0.0
      %1907 = vmatprep.subr.mxu0 0.0
      %1908 = vmatpush1.msra.mxu0 0.0
      %1909 = vmatprep.subr.mxu0 0.0
      %1910 = vmatpush1.msra.mxu0 0.0
      %1911 = vmatprep.subr.mxu0 0.0
      %1912 = vmatpush1.msra.mxu0 0.0
      %1913 = vmatprep.subr.mxu0 0.0
      %1914 = vmatpush1.msra.mxu0 0.0
      %1915 = vmatprep.subr.mxu0 0.0
      %1916 = vmatpush1.msra.mxu0 0.0
      %1917 = vmatprep.subr.mxu0 0.0
      %1918 = vmatpush1.msra.mxu0 0.0
      %1919 = vmatprep.subr.mxu0 0.0
      %1920 = vmatpush1.msra.mxu0 0.0
      %1921 = vmatprep.subr.mxu0 0.0
      %1922 = vmatpush1.msra.mxu0 0.0
      %1923 = vmatprep.subr.mxu0 0.0
      %1924 = vmatpush1.msra.mxu0 0.0
      %1925 = vmatprep.subr.mxu0 0.0
      %1926 = vmatpush1.msra.mxu0 0.0
      %1927 = vmatprep.subr.mxu0 0.0
      %1928 = vmatpush1.msra.mxu0 0.0
      %1929 = vmatprep.subr.mxu0 0.0
      %1930 = vmatpush1.msra.mxu0 0.0
      %1931 = vmatprep.subr.mxu0 0.0
      %1932 = vmatpush1.msra.mxu0 0.0
      %1933 = vmatprep.subr.mxu0 0.0
      %1934 = vmatpush1.msra.mxu0 0.0
      %1935 = vmatprep.subr.mxu0 0.0
      %1936 = vmatpush1.msra.mxu0 0.0
      %1937 = vmatprep.subr.mxu0 0.0
      %1938 = vmatpush1.msra.mxu0 0.0
      %1939 = vmatprep.subr.mxu0 0.0
      %1940 = vmatpush1.msra.mxu0 0.0
      %1941 = vmatprep.subr.mxu0 0.0
      %1942 = vmatpush1.msra.mxu0 0.0
      %1943 = vmatprep.subr.mxu0 0.0
      %1944 = vmatpush1.msra.mxu0 0.0
      %1945 = vmatprep.mubr.f32.mxu0 0.0
      %1946 = vmatmul.mubr.f32.gmra.mrb[0].mxu0 %v1808
      %v1947 = vpop.f32.mrb[0].mxu0
      %v1948 = vadd.f32 0.0, %v1947
      %v1949 = vpop.f32.mrb[0].mxu0
      %1950 = vdwg.mxu0
      %v1952 = vsel %vm311, %v1802, 0
      %1954 = vmatprep.subr.mxu0 %v951
      %1955 = vmatpush1.msra.mxu0 %v949
      %1956 = vmatprep.subr.mxu0 0.0
      %1957 = vmatpush1.msra.mxu0 0.0
      %1958 = vmatprep.subr.mxu0 0.0
      %1959 = vmatpush1.msra.mxu0 0.0
      %1960 = vmatprep.subr.mxu0 0.0
      %1961 = vmatpush1.msra.mxu0 0.0
      %1962 = vmatprep.subr.mxu0 0.0
      %1963 = vmatpush1.msra.mxu0 0.0
      %1964 = vmatprep.subr.mxu0 0.0
      %1965 = vmatpush1.msra.mxu0 0.0
      %1966 = vmatprep.subr.mxu0 0.0
      %1967 = vmatpush1.msra.mxu0 0.0
      %1968 = vmatprep.subr.mxu0 0.0
      %1969 = vmatpush1.msra.mxu0 0.0
      %1970 = vmatprep.subr.mxu0 0.0
      %1971 = vmatpush1.msra.mxu0 0.0
      %1972 = vmatprep.subr.mxu0 0.0
      %1973 = vmatpush1.msra.mxu0 0.0
      %1974 = vmatprep.subr.mxu0 0.0
      %1975 = vmatpush1.msra.mxu0 0.0
      %1976 = vmatprep.subr.mxu0 0.0
      %1977 = vmatpush1.msra.mxu0 0.0
      %1978 = vmatprep.subr.mxu0 0.0
      %1979 = vmatpush1.msra.mxu0 0.0
      %1980 = vmatprep.subr.mxu0 0.0
      %1981 = vmatpush1.msra.mxu0 0.0
      %1982 = vmatprep.subr.mxu0 0.0
      %1983 = vmatpush1.msra.mxu0 0.0
      %1984 = vmatprep.subr.mxu0 0.0
      %1985 = vmatpush1.msra.mxu0 0.0
      %1986 = vmatprep.subr.mxu0 0.0
      %1987 = vmatpush1.msra.mxu0 0.0
      %1988 = vmatprep.subr.mxu0 0.0
      %1989 = vmatpush1.msra.mxu0 0.0
      %1990 = vmatprep.subr.mxu0 0.0
      %1991 = vmatpush1.msra.mxu0 0.0
      %1992 = vmatprep.subr.mxu0 0.0
      %1993 = vmatpush1.msra.mxu0 0.0
      %1994 = vmatprep.subr.mxu0 0.0
      %1995 = vmatpush1.msra.mxu0 0.0
      %1996 = vmatprep.subr.mxu0 0.0
      %1997 = vmatpush1.msra.mxu0 0.0
      %1998 = vmatprep.subr.mxu0 0.0
      %1999 = vmatpush1.msra.mxu0 0.0
      %2000 = vmatprep.subr.mxu0 0.0
      %2001 = vmatpush1.msra.mxu0 0.0
      %2002 = vmatprep.subr.mxu0 0.0
      %2003 = vmatpush1.msra.mxu0 0.0
      %2004 = vmatprep.subr.mxu0 0.0
      %2005 = vmatpush1.msra.mxu0 0.0
      %2006 = vmatprep.subr.mxu0 0.0
      %2007 = vmatpush1.msra.mxu0 0.0
      %2008 = vmatprep.subr.mxu0 0.0
      %2009 = vmatpush1.msra.mxu0 0.0
      %2010 = vmatprep.subr.mxu0 0.0
      %2011 = vmatpush1.msra.mxu0 0.0
      %2012 = vmatprep.subr.mxu0 0.0
      %2013 = vmatpush1.msra.mxu0 0.0
      %2014 = vmatprep.subr.mxu0 0.0
      %2015 = vmatpush1.msra.mxu0 0.0
      %2016 = vmatprep.subr.mxu0 0.0
      %2017 = vmatpush1.msra.mxu0 0.0
      %2018 = vmatprep.mubr.f32.mxu0 0.0
      %2019 = vmatmul.mubr.f32.gmra.mrb[0].mxu0 %v1952
      %v2020 = vpop.f32.mrb[0].mxu0
      %v2021 = vadd.f32 %v1877, %v2020
      %v2022 = vpop.f32.mrb[0].mxu0
      %v2023 = vadd.f32 %v1879, %v2022
      %2024 = vdwg.mxu0
      %2025 = vmatprep.subr.mxu0 0.0
      %2026 = vmatpush1.msra.mxu0 %v953
      %2027 = vmatprep.subr.mxu0 0.0
      %2028 = vmatpush1.msra.mxu0 0.0
      %2029 = vmatprep.subr.mxu0 0.0
      %2030 = vmatpush1.msra.mxu0 0.0
      %2031 = vmatprep.subr.mxu0 0.0
      %2032 = vmatpush1.msra.mxu0 0.0
      %2033 = vmatprep.subr.mxu0 0.0
      %2034 = vmatpush1.msra.mxu0 0.0
      %2035 = vmatprep.subr.mxu0 0.0
      %2036 = vmatpush1.msra.mxu0 0.0
      %2037 = vmatprep.subr.mxu0 0.0
      %2038 = vmatpush1.msra.mxu0 0.0
      %2039 = vmatprep.subr.mxu0 0.0
      %2040 = vmatpush1.msra.mxu0 0.0
      %2041 = vmatprep.subr.mxu0 0.0
      %2042 = vmatpush1.msra.mxu0 0.0
      %2043 = vmatprep.subr.mxu0 0.0
      %2044 = vmatpush1.msra.mxu0 0.0
      %2045 = vmatprep.subr.mxu0 0.0
      %2046 = vmatpush1.msra.mxu0 0.0
      %2047 = vmatprep.subr.mxu0 0.0
      %2048 = vmatpush1.msra.mxu0 0.0
      %2049 = vmatprep.subr.mxu0 0.0
      %2050 = vmatpush1.msra.mxu0 0.0
      %2051 = vmatprep.subr.mxu0 0.0
      %2052 = vmatpush1.msra.mxu0 0.0
      %2053 = vmatprep.subr.mxu0 0.0
      %2054 = vmatpush1.msra.mxu0 0.0
      %2055 = vmatprep.subr.mxu0 0.0
      %2056 = vmatpush1.msra.mxu0 0.0
      %2057 = vmatprep.subr.mxu0 0.0
      %2058 = vmatpush1.msra.mxu0 0.0
      %2059 = vmatprep.subr.mxu0 0.0
      %2060 = vmatpush1.msra.mxu0 0.0
      %2061 = vmatprep.subr.mxu0 0.0
      %2062 = vmatpush1.msra.mxu0 0.0
      %2063 = vmatprep.subr.mxu0 0.0
      %2064 = vmatpush1.msra.mxu0 0.0
      %2065 = vmatprep.subr.mxu0 0.0
      %2066 = vmatpush1.msra.mxu0 0.0
      %2067 = vmatprep.subr.mxu0 0.0
      %2068 = vmatpush1.msra.mxu0 0.0
      %2069 = vmatprep.subr.mxu0 0.0
      %2070 = vmatpush1.msra.mxu0 0.0
      %2071 = vmatprep.subr.mxu0 0.0
      %2072 = vmatpush1.msra.mxu0 0.0
      %2073 = vmatprep.subr.mxu0 0.0
      %2074 = vmatpush1.msra.mxu0 0.0
      %2075 = vmatprep.subr.mxu0 0.0
      %2076 = vmatpush1.msra.mxu0 0.0
      %2077 = vmatprep.subr.mxu0 0.0
      %2078 = vmatpush1.msra.mxu0 0.0
      %2079 = vmatprep.subr.mxu0 0.0
      %2080 = vmatpush1.msra.mxu0 0.0
      %2081 = vmatprep.subr.mxu0 0.0
      %2082 = vmatpush1.msra.mxu0 0.0
      %2083 = vmatprep.subr.mxu0 0.0
      %2084 = vmatpush1.msra.mxu0 0.0
      %2085 = vmatprep.subr.mxu0 0.0
      %2086 = vmatpush1.msra.mxu0 0.0
      %2087 = vmatprep.subr.mxu0 0.0
      %2088 = vmatpush1.msra.mxu0 0.0
      %2089 = vmatprep.mubr.f32.mxu0 0.0
      %2090 = vmatmul.mubr.f32.gmra.mrb[0].mxu0 %v1952
      %v2091 = vpop.f32.mrb[0].mxu0
      %v2092 = vadd.f32 %v1948, %v2091
      %v2093 = vpop.f32.mrb[0].mxu0
      %2094 = vdwg.mxu0
      %v2095 = vld [vmem:[#allocation2] sm:$0xff]
      %v2096 = vld [vmem:[#allocation2 + $0x8] sm:$0xff]
      %v2097 = vld [vmem:[#allocation2 + $0x10] sm:$0xff]
      %2101 = vrot.lane.b32.xlu0 %v2095, 127
      %v2102 = vpop.permute.xlu0 %2101
      %2103 = vrot.lane.b32.xlu0 %v2096, 127
      %v2104 = vpop.permute.xlu0 %2103
      %2105 = vrot.lane.b32.xlu0 %v2097, 127
      %v2106 = vpop.permute.xlu0 %2105
      %v2107 = vsel %vm308, %v2102, %v2104
      %v2108 = vsel %vm308, %v2104, %v2106
      %v2113 = vsel %vm1806, %v291, 0
      %2115 = vmatprep.subr.mxu0 %v2108
      %2116 = vmatpush1.msra.mxu0 %v2107
      %2117 = vmatprep.subr.mxu0 0.0
      %2118 = vmatpush1.msra.mxu0 0.0
      %2119 = vmatprep.subr.mxu0 0.0
      %2120 = vmatpush1.msra.mxu0 0.0
      %2121 = vmatprep.subr.mxu0 0.0
      %2122 = vmatpush1.msra.mxu0 0.0
      %2123 = vmatprep.subr.mxu0 0.0
      %2124 = vmatpush1.msra.mxu0 0.0
      %2125 = vmatprep.subr.mxu0 0.0
      %2126 = vmatpush1.msra.mxu0 0.0
      %2127 = vmatprep.subr.mxu0 0.0
      %2128 = vmatpush1.msra.mxu0 0.0
      %2129 = vmatprep.subr.mxu0 0.0
      %2130 = vmatpush1.msra.mxu0 0.0
      %2131 = vmatprep.subr.mxu0 0.0
      %2132 = vmatpush1.msra.mxu0 0.0
      %2133 = vmatprep.subr.mxu0 0.0
      %2134 = vmatpush1.msra.mxu0 0.0
      %2135 = vmatprep.subr.mxu0 0.0
      %2136 = vmatpush1.msra.mxu0 0.0
      %2137 = vmatprep.subr.mxu0 0.0
      %2138 = vmatpush1.msra.mxu0 0.0
      %2139 = vmatprep.subr.mxu0 0.0
      %2140 = vmatpush1.msra.mxu0 0.0
      %2141 = vmatprep.subr.mxu0 0.0
      %2142 = vmatpush1.msra.mxu0 0.0
      %2143 = vmatprep.subr.mxu0 0.0
      %2144 = vmatpush1.msra.mxu0 0.0
      %2145 = vmatprep.subr.mxu0 0.0
      %2146 = vmatpush1.msra.mxu0 0.0
      %2147 = vmatprep.subr.mxu0 0.0
      %2148 = vmatpush1.msra.mxu0 0.0
      %2149 = vmatprep.subr.mxu0 0.0
      %2150 = vmatpush1.msra.mxu0 0.0
      %2151 = vmatprep.subr.mxu0 0.0
      %2152 = vmatpush1.msra.mxu0 0.0
      %2153 = vmatprep.subr.mxu0 0.0
      %2154 = vmatpush1.msra.mxu0 0.0
      %2155 = vmatprep.subr.mxu0 0.0
      %2156 = vmatpush1.msra.mxu0 0.0
      %2157 = vmatprep.subr.mxu0 0.0
      %2158 = vmatpush1.msra.mxu0 0.0
      %2159 = vmatprep.subr.mxu0 0.0
      %2160 = vmatpush1.msra.mxu0 0.0
      %2161 = vmatprep.subr.mxu0 0.0
      %2162 = vmatpush1.msra.mxu0 0.0
      %2163 = vmatprep.subr.mxu0 0.0
      %2164 = vmatpush1.msra.mxu0 0.0
      %2165 = vmatprep.subr.mxu0 0.0
      %2166 = vmatpush1.msra.mxu0 0.0
      %2167 = vmatprep.subr.mxu0 0.0
      %2168 = vmatpush1.msra.mxu0 0.0
      %2169 = vmatprep.subr.mxu0 0.0
      %2170 = vmatpush1.msra.mxu0 0.0
      %2171 = vmatprep.subr.mxu0 0.0
      %2172 = vmatpush1.msra.mxu0 0.0
      %2173 = vmatprep.subr.mxu0 0.0
      %2174 = vmatpush1.msra.mxu0 0.0
      %2175 = vmatprep.subr.mxu0 0.0
      %2176 = vmatpush1.msra.mxu0 0.0
      %2177 = vmatprep.subr.mxu0 0.0
      %2178 = vmatpush1.msra.mxu0 0.0
      %2179 = vmatprep.mubr.f32.mxu0 0.0
      %2180 = vmatmul.mubr.f32.gmra.mrb[0].mxu0 %v2113
      %v2181 = vpop.f32.mrb[0].mxu0
      %v2182 = vadd.f32 0.0, %v2181
      %v2183 = vpop.f32.mrb[0].mxu0
      %v2184 = vadd.f32 0.0, %v2183
      %2185 = vdwg.mxu0
      %2186 = vmatprep.subr.mxu0 0.0
      %2187 = vmatpush1.msra.mxu0 %v2106
      %2188 = vmatprep.subr.mxu0 0.0
      %2189 = vmatpush1.msra.mxu0 0.0
      %2190 = vmatprep.subr.mxu0 0.0
      %2191 = vmatpush1.msra.mxu0 0.0
      %2192 = vmatprep.subr.mxu0 0.0
      %2193 = vmatpush1.msra.mxu0 0.0
      %2194 = vmatprep.subr.mxu0 0.0
      %2195 = vmatpush1.msra.mxu0 0.0
      %2196 = vmatprep.subr.mxu0 0.0
      %2197 = vmatpush1.msra.mxu0 0.0
      %2198 = vmatprep.subr.mxu0 0.0
      %2199 = vmatpush1.msra.mxu0 0.0
      %2200 = vmatprep.subr.mxu0 0.0
      %2201 = vmatpush1.msra.mxu0 0.0
      %2202 = vmatprep.subr.mxu0 0.0
      %2203 = vmatpush1.msra.mxu0 0.0
      %2204 = vmatprep.subr.mxu0 0.0
      %2205 = vmatpush1.msra.mxu0 0.0
      %2206 = vmatprep.subr.mxu0 0.0
      %2207 = vmatpush1.msra.mxu0 0.0
      %2208 = vmatprep.subr.mxu0 0.0
      %2209 = vmatpush1.msra.mxu0 0.0
      %2210 = vmatprep.subr.mxu0 0.0
      %2211 = vmatpush1.msra.mxu0 0.0
      %2212 = vmatprep.subr.mxu0 0.0
      %2213 = vmatpush1.msra.mxu0 0.0
      %2214 = vmatprep.subr.mxu0 0.0
      %2215 = vmatpush1.msra.mxu0 0.0
      %2216 = vmatprep.subr.mxu0 0.0
      %2217 = vmatpush1.msra.mxu0 0.0
      %2218 = vmatprep.subr.mxu0 0.0
      %2219 = vmatpush1.msra.mxu0 0.0
      %2220 = vmatprep.subr.mxu0 0.0
      %2221 = vmatpush1.msra.mxu0 0.0
      %2222 = vmatprep.subr.mxu0 0.0
      %2223 = vmatpush1.msra.mxu0 0.0
      %2224 = vmatprep.subr.mxu0 0.0
      %2225 = vmatpush1.msra.mxu0 0.0
      %2226 = vmatprep.subr.mxu0 0.0
      %2227 = vmatpush1.msra.mxu0 0.0
      %2228 = vmatprep.subr.mxu0 0.0
      %2229 = vmatpush1.msra.mxu0 0.0
      %2230 = vmatprep.subr.mxu0 0.0
      %2231 = vmatpush1.msra.mxu0 0.0
      %2232 = vmatprep.subr.mxu0 0.0
      %2233 = vmatpush1.msra.mxu0 0.0
      %2234 = vmatprep.subr.mxu0 0.0
      %2235 = vmatpush1.msra.mxu0 0.0
      %2236 = vmatprep.subr.mxu0 0.0
      %2237 = vmatpush1.msra.mxu0 0.0
      %2238 = vmatprep.subr.mxu0 0.0
      %2239 = vmatpush1.msra.mxu0 0.0
      %2240 = vmatprep.subr.mxu0 0.0
      %2241 = vmatpush1.msra.mxu0 0.0
      %2242 = vmatprep.subr.mxu0 0.0
      %2243 = vmatpush1.msra.mxu0 0.0
      %2244 = vmatprep.subr.mxu0 0.0
      %2245 = vmatpush1.msra.mxu0 0.0
      %2246 = vmatprep.subr.mxu0 0.0
      %2247 = vmatpush1.msra.mxu0 0.0
      %2248 = vmatprep.subr.mxu0 0.0
      %2249 = vmatpush1.msra.mxu0 0.0
      %2250 = vmatprep.mubr.f32.mxu0 0.0
      %2251 = vmatmul.mubr.f32.gmra.mrb[0].mxu0 %v2113
      %v2252 = vpop.f32.mrb[0].mxu0
      %v2253 = vadd.f32 0.0, %v2252
      %v2254 = vpop.f32.mrb[0].mxu0
      %2255 = vdwg.mxu0
      %v2256 = vadd.f32 %v2021, %v2182
      %v2257 = vadd.f32 %v2023, %v2184
      %v2258 = vadd.f32 %v2092, %v2253
      %2259 = vrot.lane.b32.xlu0 %v2095, 126
      %v2260 = vpop.permute.xlu0 %2259
      %2261 = vrot.lane.b32.xlu0 %v2096, 126
      %v2262 = vpop.permute.xlu0 %2261
      %2263 = vrot.lane.b32.xlu0 %v2097, 126
      %v2264 = vpop.permute.xlu0 %2263
      %v2265 = vsel %vm619, %v2260, %v2262
      %v2266 = vsel %vm619, %v2262, %v2264
      %v2271 = vsel %vm1806, %v292, 0
      %2273 = vmatprep.subr.mxu0 %v2266
      %2274 = vmatpush1.msra.mxu0 %v2265
      %2275 = vmatprep.subr.mxu0 0.0
      %2276 = vmatpush1.msra.mxu0 0.0
      %2277 = vmatprep.subr.mxu0 0.0
      %2278 = vmatpush1.msra.mxu0 0.0
      %2279 = vmatprep.subr.mxu0 0.0
      %2280 = vmatpush1.msra.mxu0 0.0
      %2281 = vmatprep.subr.mxu0 0.0
      %2282 = vmatpush1.msra.mxu0 0.0
      %2283 = vmatprep.subr.mxu0 0.0
      %2284 = vmatpush1.msra.mxu0 0.0
      %2285 = vmatprep.subr.mxu0 0.0
      %2286 = vmatpush1.msra.mxu0 0.0
      %2287 = vmatprep.subr.mxu0 0.0
      %2288 = vmatpush1.msra.mxu0 0.0
      %2289 = vmatprep.subr.mxu0 0.0
      %2290 = vmatpush1.msra.mxu0 0.0
      %2291 = vmatprep.subr.mxu0 0.0
      %2292 = vmatpush1.msra.mxu0 0.0
      %2293 = vmatprep.subr.mxu0 0.0
      %2294 = vmatpush1.msra.mxu0 0.0
      %2295 = vmatprep.subr.mxu0 0.0
      %2296 = vmatpush1.msra.mxu0 0.0
      %2297 = vmatprep.subr.mxu0 0.0
      %2298 = vmatpush1.msra.mxu0 0.0
      %2299 = vmatprep.subr.mxu0 0.0
      %2300 = vmatpush1.msra.mxu0 0.0
      %2301 = vmatprep.subr.mxu0 0.0
      %2302 = vmatpush1.msra.mxu0 0.0
      %2303 = vmatprep.subr.mxu0 0.0
      %2304 = vmatpush1.msra.mxu0 0.0
      %2305 = vmatprep.subr.mxu0 0.0
      %2306 = vmatpush1.msra.mxu0 0.0
      %2307 = vmatprep.subr.mxu0 0.0
      %2308 = vmatpush1.msra.mxu0 0.0
      %2309 = vmatprep.subr.mxu0 0.0
      %2310 = vmatpush1.msra.mxu0 0.0
      %2311 = vmatprep.subr.mxu0 0.0
      %2312 = vmatpush1.msra.mxu0 0.0
      %2313 = vmatprep.subr.mxu0 0.0
      %2314 = vmatpush1.msra.mxu0 0.0
      %2315 = vmatprep.subr.mxu0 0.0
      %2316 = vmatpush1.msra.mxu0 0.0
      %2317 = vmatprep.subr.mxu0 0.0
      %2318 = vmatpush1.msra.mxu0 0.0
      %2319 = vmatprep.subr.mxu0 0.0
      %2320 = vmatpush1.msra.mxu0 0.0
      %2321 = vmatprep.subr.mxu0 0.0
      %2322 = vmatpush1.msra.mxu0 0.0
      %2323 = vmatprep.subr.mxu0 0.0
      %2324 = vmatpush1.msra.mxu0 0.0
      %2325 = vmatprep.subr.mxu0 0.0
      %2326 = vmatpush1.msra.mxu0 0.0
      %2327 = vmatprep.subr.mxu0 0.0
      %2328 = vmatpush1.msra.mxu0 0.0
      %2329 = vmatprep.subr.mxu0 0.0
      %2330 = vmatpush1.msra.mxu0 0.0
      %2331 = vmatprep.subr.mxu0 0.0
      %2332 = vmatpush1.msra.mxu0 0.0
      %2333 = vmatprep.subr.mxu0 0.0
      %2334 = vmatpush1.msra.mxu0 0.0
      %2335 = vmatprep.subr.mxu0 0.0
      %2336 = vmatpush1.msra.mxu0 0.0
      %2337 = vmatprep.mubr.f32.mxu0 0.0
      %2338 = vmatmul.mubr.f32.gmra.mrb[0].mxu0 %v2271
      %v2339 = vpop.f32.mrb[0].mxu0
      %v2340 = vadd.f32 0.0, %v2339
      %v2341 = vpop.f32.mrb[0].mxu0
      %v2342 = vadd.f32 0.0, %v2341
      %2343 = vdwg.mxu0
      %2344 = vmatprep.subr.mxu0 0.0
      %2345 = vmatpush1.msra.mxu0 %v2264
      %2346 = vmatprep.subr.mxu0 0.0
      %2347 = vmatpush1.msra.mxu0 0.0
      %2348 = vmatprep.subr.mxu0 0.0
      %2349 = vmatpush1.msra.mxu0 0.0
      %2350 = vmatprep.subr.mxu0 0.0
      %2351 = vmatpush1.msra.mxu0 0.0
      %2352 = vmatprep.subr.mxu0 0.0
      %2353 = vmatpush1.msra.mxu0 0.0
      %2354 = vmatprep.subr.mxu0 0.0
      %2355 = vmatpush1.msra.mxu0 0.0
      %2356 = vmatprep.subr.mxu0 0.0
      %2357 = vmatpush1.msra.mxu0 0.0
      %2358 = vmatprep.subr.mxu0 0.0
      %2359 = vmatpush1.msra.mxu0 0.0
      %2360 = vmatprep.subr.mxu0 0.0
      %2361 = vmatpush1.msra.mxu0 0.0
      %2362 = vmatprep.subr.mxu0 0.0
      %2363 = vmatpush1.msra.mxu0 0.0
      %2364 = vmatprep.subr.mxu0 0.0
      %2365 = vmatpush1.msra.mxu0 0.0
      %2366 = vmatprep.subr.mxu0 0.0
      %2367 = vmatpush1.msra.mxu0 0.0
      %2368 = vmatprep.subr.mxu0 0.0
      %2369 = vmatpush1.msra.mxu0 0.0
      %2370 = vmatprep.subr.mxu0 0.0
      %2371 = vmatpush1.msra.mxu0 0.0
      %2372 = vmatprep.subr.mxu0 0.0
      %2373 = vmatpush1.msra.mxu0 0.0
      %2374 = vmatprep.subr.mxu0 0.0
      %2375 = vmatpush1.msra.mxu0 0.0
      %2376 = vmatprep.subr.mxu0 0.0
      %2377 = vmatpush1.msra.mxu0 0.0
      %2378 = vmatprep.subr.mxu0 0.0
      %2379 = vmatpush1.msra.mxu0 0.0
      %2380 = vmatprep.subr.mxu0 0.0
      %2381 = vmatpush1.msra.mxu0 0.0
      %2382 = vmatprep.subr.mxu0 0.0
      %2383 = vmatpush1.msra.mxu0 0.0
      %2384 = vmatprep.subr.mxu0 0.0
      %2385 = vmatpush1.msra.mxu0 0.0
      %2386 = vmatprep.subr.mxu0 0.0
      %2387 = vmatpush1.msra.mxu0 0.0
      %2388 = vmatprep.subr.mxu0 0.0
      %2389 = vmatpush1.msra.mxu0 0.0
      %2390 = vmatprep.subr.mxu0 0.0
      %2391 = vmatpush1.msra.mxu0 0.0
      %2392 = vmatprep.subr.mxu0 0.0
      %2393 = vmatpush1.msra.mxu0 0.0
      %2394 = vmatprep.subr.mxu0 0.0
      %2395 = vmatpush1.msra.mxu0 0.0
      %2396 = vmatprep.subr.mxu0 0.0
      %2397 = vmatpush1.msra.mxu0 0.0
      %2398 = vmatprep.subr.mxu0 0.0
      %2399 = vmatpush1.msra.mxu0 0.0
      %2400 = vmatprep.subr.mxu0 0.0
      %2401 = vmatpush1.msra.mxu0 0.0
      %2402 = vmatprep.subr.mxu0 0.0
      %2403 = vmatpush1.msra.mxu0 0.0
      %2404 = vmatprep.subr.mxu0 0.0
      %2405 = vmatpush1.msra.mxu0 0.0
      %2406 = vmatprep.subr.mxu0 0.0
      %2407 = vmatpush1.msra.mxu0 0.0
      %2408 = vmatprep.mubr.f32.mxu0 0.0
      %2409 = vmatmul.mubr.f32.gmra.mrb[0].mxu0 %v2271
      %v2410 = vpop.f32.mrb[0].mxu0
      %v2411 = vadd.f32 0.0, %v2410
      %v2412 = vpop.f32.mrb[0].mxu0
      %2413 = vdwg.mxu0
      %v2414 = vadd.f32 %v2256, %v2340
      %v2415 = vadd.f32 %v2257, %v2342
      %v2416 = vadd.f32 %v2258, %v2411
      %2417 = vrot.lane.b32.xlu0 %v2095, 110
      %v2418 = vpop.permute.xlu0 %2417
      %2419 = vrot.lane.b32.xlu0 %v2096, 110
      %v2420 = vpop.permute.xlu0 %2419
      %2421 = vrot.lane.b32.xlu0 %v2097, 110
      %v2422 = vpop.permute.xlu0 %2421
      %v2423 = vsel %vm781, %v2418, %v2420
      %v2424 = vsel %vm781, %v2420, %v2422
      %v2429 = vsel %vm1806, %v293, 0
      %2431 = vmatprep.subr.mxu0 %v2424
      %2432 = vmatpush1.msra.mxu0 %v2423
      %2433 = vmatprep.subr.mxu0 0.0
      %2434 = vmatpush1.msra.mxu0 0.0
      %2435 = vmatprep.subr.mxu0 0.0
      %2436 = vmatpush1.msra.mxu0 0.0
      %2437 = vmatprep.subr.mxu0 0.0
      %2438 = vmatpush1.msra.mxu0 0.0
      %2439 = vmatprep.subr.mxu0 0.0
      %2440 = vmatpush1.msra.mxu0 0.0
      %2441 = vmatprep.subr.mxu0 0.0
      %2442 = vmatpush1.msra.mxu0 0.0
      %2443 = vmatprep.subr.mxu0 0.0
      %2444 = vmatpush1.msra.mxu0 0.0
      %2445 = vmatprep.subr.mxu0 0.0
      %2446 = vmatpush1.msra.mxu0 0.0
      %2447 = vmatprep.subr.mxu0 0.0
      %2448 = vmatpush1.msra.mxu0 0.0
      %2449 = vmatprep.subr.mxu0 0.0
      %2450 = vmatpush1.msra.mxu0 0.0
      %2451 = vmatprep.subr.mxu0 0.0
      %2452 = vmatpush1.msra.mxu0 0.0
      %2453 = vmatprep.subr.mxu0 0.0
      %2454 = vmatpush1.msra.mxu0 0.0
      %2455 = vmatprep.subr.mxu0 0.0
      %2456 = vmatpush1.msra.mxu0 0.0
      %2457 = vmatprep.subr.mxu0 0.0
      %2458 = vmatpush1.msra.mxu0 0.0
      %2459 = vmatprep.subr.mxu0 0.0
      %2460 = vmatpush1.msra.mxu0 0.0
      %2461 = vmatprep.subr.mxu0 0.0
      %2462 = vmatpush1.msra.mxu0 0.0
      %2463 = vmatprep.subr.mxu0 0.0
      %2464 = vmatpush1.msra.mxu0 0.0
      %2465 = vmatprep.subr.mxu0 0.0
      %2466 = vmatpush1.msra.mxu0 0.0
      %2467 = vmatprep.subr.mxu0 0.0
      %2468 = vmatpush1.msra.mxu0 0.0
      %2469 = vmatprep.subr.mxu0 0.0
      %2470 = vmatpush1.msra.mxu0 0.0
      %2471 = vmatprep.subr.mxu0 0.0
      %2472 = vmatpush1.msra.mxu0 0.0
      %2473 = vmatprep.subr.mxu0 0.0
      %2474 = vmatpush1.msra.mxu0 0.0
      %2475 = vmatprep.subr.mxu0 0.0
      %2476 = vmatpush1.msra.mxu0 0.0
      %2477 = vmatprep.subr.mxu0 0.0
      %2478 = vmatpush1.msra.mxu0 0.0
      %2479 = vmatprep.subr.mxu0 0.0
      %2480 = vmatpush1.msra.mxu0 0.0
      %2481 = vmatprep.subr.mxu0 0.0
      %2482 = vmatpush1.msra.mxu0 0.0
      %2483 = vmatprep.subr.mxu0 0.0
      %2484 = vmatpush1.msra.mxu0 0.0
      %2485 = vmatprep.subr.mxu0 0.0
      %2486 = vmatpush1.msra.mxu0 0.0
      %2487 = vmatprep.subr.mxu0 0.0
      %2488 = vmatpush1.msra.mxu0 0.0
      %2489 = vmatprep.subr.mxu0 0.0
      %2490 = vmatpush1.msra.mxu0 0.0
      %2491 = vmatprep.subr.mxu0 0.0
      %2492 = vmatpush1.msra.mxu0 0.0
      %2493 = vmatprep.subr.mxu0 0.0
      %2494 = vmatpush1.msra.mxu0 0.0
      %2495 = vmatprep.mubr.f32.mxu0 0.0
      %2496 = vmatmul.mubr.f32.gmra.mrb[0].mxu0 %v2429
      %v2497 = vpop.f32.mrb[0].mxu0
      %v2498 = vadd.f32 0.0, %v2497
      %v2499 = vpop.f32.mrb[0].mxu0
      %v2500 = vadd.f32 0.0, %v2499
      %2501 = vdwg.mxu0
      %2502 = vmatprep.subr.mxu0 0.0
      %2503 = vmatpush1.msra.mxu0 %v2422
      %2504 = vmatprep.subr.mxu0 0.0
      %2505 = vmatpush1.msra.mxu0 0.0
      %2506 = vmatprep.subr.mxu0 0.0
      %2507 = vmatpush1.msra.mxu0 0.0
      %2508 = vmatprep.subr.mxu0 0.0
      %2509 = vmatpush1.msra.mxu0 0.0
      %2510 = vmatprep.subr.mxu0 0.0
      %2511 = vmatpush1.msra.mxu0 0.0
      %2512 = vmatprep.subr.mxu0 0.0
      %2513 = vmatpush1.msra.mxu0 0.0
      %2514 = vmatprep.subr.mxu0 0.0
      %2515 = vmatpush1.msra.mxu0 0.0
      %2516 = vmatprep.subr.mxu0 0.0
      %2517 = vmatpush1.msra.mxu0 0.0
      %2518 = vmatprep.subr.mxu0 0.0
      %2519 = vmatpush1.msra.mxu0 0.0
      %2520 = vmatprep.subr.mxu0 0.0
      %2521 = vmatpush1.msra.mxu0 0.0
      %2522 = vmatprep.subr.mxu0 0.0
      %2523 = vmatpush1.msra.mxu0 0.0
      %2524 = vmatprep.subr.mxu0 0.0
      %2525 = vmatpush1.msra.mxu0 0.0
      %2526 = vmatprep.subr.mxu0 0.0
      %2527 = vmatpush1.msra.mxu0 0.0
      %2528 = vmatprep.subr.mxu0 0.0
      %2529 = vmatpush1.msra.mxu0 0.0
      %2530 = vmatprep.subr.mxu0 0.0
      %2531 = vmatpush1.msra.mxu0 0.0
      %2532 = vmatprep.subr.mxu0 0.0
      %2533 = vmatpush1.msra.mxu0 0.0
      %2534 = vmatprep.subr.mxu0 0.0
      %2535 = vmatpush1.msra.mxu0 0.0
      %2536 = vmatprep.subr.mxu0 0.0
      %2537 = vmatpush1.msra.mxu0 0.0
      %2538 = vmatprep.subr.mxu0 0.0
      %2539 = vmatpush1.msra.mxu0 0.0
      %2540 = vmatprep.subr.mxu0 0.0
      %2541 = vmatpush1.msra.mxu0 0.0
      %2542 = vmatprep.subr.mxu0 0.0
      %2543 = vmatpush1.msra.mxu0 0.0
      %2544 = vmatprep.subr.mxu0 0.0
      %2545 = vmatpush1.msra.mxu0 0.0
      %2546 = vmatprep.subr.mxu0 0.0
      %2547 = vmatpush1.msra.mxu0 0.0
      %2548 = vmatprep.subr.mxu0 0.0
      %2549 = vmatpush1.msra.mxu0 0.0
      %2550 = vmatprep.subr.mxu0 0.0
      %2551 = vmatpush1.msra.mxu0 0.0
      %2552 = vmatprep.subr.mxu0 0.0
      %2553 = vmatpush1.msra.mxu0 0.0
      %2554 = vmatprep.subr.mxu0 0.0
      %2555 = vmatpush1.msra.mxu0 0.0
      %2556 = vmatprep.subr.mxu0 0.0
      %2557 = vmatpush1.msra.mxu0 0.0
      %2558 = vmatprep.subr.mxu0 0.0
      %2559 = vmatpush1.msra.mxu0 0.0
      %2560 = vmatprep.subr.mxu0 0.0
      %2561 = vmatpush1.msra.mxu0 0.0
      %2562 = vmatprep.subr.mxu0 0.0
      %2563 = vmatpush1.msra.mxu0 0.0
      %2564 = vmatprep.subr.mxu0 0.0
      %2565 = vmatpush1.msra.mxu0 0.0
      %2566 = vmatprep.mubr.f32.mxu0 0.0
      %2567 = vmatmul.mubr.f32.gmra.mrb[0].mxu0 %v2429
      %v2568 = vpop.f32.mrb[0].mxu0
      %v2569 = vadd.f32 0.0, %v2568
      %v2570 = vpop.f32.mrb[0].mxu0
      %2571 = vdwg.mxu0
      %v2572 = vadd.f32 %v2414, %v2498
      %v2573 = vadd.f32 %v2415, %v2500
      %v2574 = vadd.f32 %v2416, %v2569
      %2575 = vrot.lane.b32.xlu0 %v2095, 109
      %v2576 = vpop.permute.xlu0 %2575
      %2577 = vrot.lane.b32.xlu0 %v2096, 109
      %v2578 = vpop.permute.xlu0 %2577
      %2579 = vrot.lane.b32.xlu0 %v2097, 109
      %v2580 = vpop.permute.xlu0 %2579
      %v2581 = vsel %vm943, %v2576, %v2578
      %v2582 = vsel %vm943, %v2578, %v2580
      %v2587 = vsel %vm1806, %v294, 0
      %2589 = vmatprep.subr.mxu0 %v2582
      %2590 = vmatpush1.msra.mxu0 %v2581
      %2591 = vmatprep.subr.mxu0 0.0
      %2592 = vmatpush1.msra.mxu0 0.0
      %2593 = vmatprep.subr.mxu0 0.0
      %2594 = vmatpush1.msra.mxu0 0.0
      %2595 = vmatprep.subr.mxu0 0.0
      %2596 = vmatpush1.msra.mxu0 0.0
      %2597 = vmatprep.subr.mxu0 0.0
      %2598 = vmatpush1.msra.mxu0 0.0
      %2599 = vmatprep.subr.mxu0 0.0
      %2600 = vmatpush1.msra.mxu0 0.0
      %2601 = vmatprep.subr.mxu0 0.0
      %2602 = vmatpush1.msra.mxu0 0.0
      %2603 = vmatprep.subr.mxu0 0.0
      %2604 = vmatpush1.msra.mxu0 0.0
      %2605 = vmatprep.subr.mxu0 0.0
      %2606 = vmatpush1.msra.mxu0 0.0
      %2607 = vmatprep.subr.mxu0 0.0
      %2608 = vmatpush1.msra.mxu0 0.0
      %2609 = vmatprep.subr.mxu0 0.0
      %2610 = vmatpush1.msra.mxu0 0.0
      %2611 = vmatprep.subr.mxu0 0.0
      %2612 = vmatpush1.msra.mxu0 0.0
      %2613 = vmatprep.subr.mxu0 0.0
      %2614 = vmatpush1.msra.mxu0 0.0
      %2615 = vmatprep.subr.mxu0 0.0
      %2616 = vmatpush1.msra.mxu0 0.0
      %2617 = vmatprep.subr.mxu0 0.0
      %2618 = vmatpush1.msra.mxu0 0.0
      %2619 = vmatprep.subr.mxu0 0.0
      %2620 = vmatpush1.msra.mxu0 0.0
      %2621 = vmatprep.subr.mxu0 0.0
      %2622 = vmatpush1.msra.mxu0 0.0
      %2623 = vmatprep.subr.mxu0 0.0
      %2624 = vmatpush1.msra.mxu0 0.0
      %2625 = vmatprep.subr.mxu0 0.0
      %2626 = vmatpush1.msra.mxu0 0.0
      %2627 = vmatprep.subr.mxu0 0.0
      %2628 = vmatpush1.msra.mxu0 0.0
      %2629 = vmatprep.subr.mxu0 0.0
      %2630 = vmatpush1.msra.mxu0 0.0
      %2631 = vmatprep.subr.mxu0 0.0
      %2632 = vmatpush1.msra.mxu0 0.0
      %2633 = vmatprep.subr.mxu0 0.0
      %2634 = vmatpush1.msra.mxu0 0.0
      %2635 = vmatprep.subr.mxu0 0.0
      %2636 = vmatpush1.msra.mxu0 0.0
      %2637 = vmatprep.subr.mxu0 0.0
      %2638 = vmatpush1.msra.mxu0 0.0
      %2639 = vmatprep.subr.mxu0 0.0
      %2640 = vmatpush1.msra.mxu0 0.0
      %2641 = vmatprep.subr.mxu0 0.0
      %2642 = vmatpush1.msra.mxu0 0.0
      %2643 = vmatprep.subr.mxu0 0.0
      %2644 = vmatpush1.msra.mxu0 0.0
      %2645 = vmatprep.subr.mxu0 0.0
      %2646 = vmatpush1.msra.mxu0 0.0
      %2647 = vmatprep.subr.mxu0 0.0
      %2648 = vmatpush1.msra.mxu0 0.0
      %2649 = vmatprep.subr.mxu0 0.0
      %2650 = vmatpush1.msra.mxu0 0.0
      %2651 = vmatprep.subr.mxu0 0.0
      %2652 = vmatpush1.msra.mxu0 0.0
      %2653 = vmatprep.mubr.f32.mxu0 0.0
      %2654 = vmatmul.mubr.f32.gmra.mrb[0].mxu0 %v2587
      %v2655 = vpop.f32.mrb[0].mxu0
      %v2656 = vadd.f32 0.0, %v2655
      %v2657 = vpop.f32.mrb[0].mxu0
      %v2658 = vadd.f32 0.0, %v2657
      %2659 = vdwg.mxu0
      %2660 = vmatprep.subr.mxu0 0.0
      %2661 = vmatpush1.msra.mxu0 %v2580
      %2662 = vmatprep.subr.mxu0 0.0
      %2663 = vmatpush1.msra.mxu0 0.0
      %2664 = vmatprep.subr.mxu0 0.0
      %2665 = vmatpush1.msra.mxu0 0.0
      %2666 = vmatprep.subr.mxu0 0.0
      %2667 = vmatpush1.msra.mxu0 0.0
      %2668 = vmatprep.subr.mxu0 0.0
      %2669 = vmatpush1.msra.mxu0 0.0
      %2670 = vmatprep.subr.mxu0 0.0
      %2671 = vmatpush1.msra.mxu0 0.0
      %2672 = vmatprep.subr.mxu0 0.0
      %2673 = vmatpush1.msra.mxu0 0.0
      %2674 = vmatprep.subr.mxu0 0.0
      %2675 = vmatpush1.msra.mxu0 0.0
      %2676 = vmatprep.subr.mxu0 0.0
      %2677 = vmatpush1.msra.mxu0 0.0
      %2678 = vmatprep.subr.mxu0 0.0
      %2679 = vmatpush1.msra.mxu0 0.0
      %2680 = vmatprep.subr.mxu0 0.0
      %2681 = vmatpush1.msra.mxu0 0.0
      %2682 = vmatprep.subr.mxu0 0.0
      %2683 = vmatpush1.msra.mxu0 0.0
      %2684 = vmatprep.subr.mxu0 0.0
      %2685 = vmatpush1.msra.mxu0 0.0
      %2686 = vmatprep.subr.mxu0 0.0
      %2687 = vmatpush1.msra.mxu0 0.0
      %2688 = vmatprep.subr.mxu0 0.0
      %2689 = vmatpush1.msra.mxu0 0.0
      %2690 = vmatprep.subr.mxu0 0.0
      %2691 = vmatpush1.msra.mxu0 0.0
      %2692 = vmatprep.subr.mxu0 0.0
      %2693 = vmatpush1.msra.mxu0 0.0
      %2694 = vmatprep.subr.mxu0 0.0
      %2695 = vmatpush1.msra.mxu0 0.0
      %2696 = vmatprep.subr.mxu0 0.0
      %2697 = vmatpush1.msra.mxu0 0.0
      %2698 = vmatprep.subr.mxu0 0.0
      %2699 = vmatpush1.msra.mxu0 0.0
      %2700 = vmatprep.subr.mxu0 0.0
      %2701 = vmatpush1.msra.mxu0 0.0
      %2702 = vmatprep.subr.mxu0 0.0
      %2703 = vmatpush1.msra.mxu0 0.0
      %2704 = vmatprep.subr.mxu0 0.0
      %2705 = vmatpush1.msra.mxu0 0.0
      %2706 = vmatprep.subr.mxu0 0.0
      %2707 = vmatpush1.msra.mxu0 0.0
      %2708 = vmatprep.subr.mxu0 0.0
      %2709 = vmatpush1.msra.mxu0 0.0
      %2710 = vmatprep.subr.mxu0 0.0
      %2711 = vmatpush1.msra.mxu0 0.0
      %2712 = vmatprep.subr.mxu0 0.0
      %2713 = vmatpush1.msra.mxu0 0.0
      %2714 = vmatprep.subr.mxu0 0.0
      %2715 = vmatpush1.msra.mxu0 0.0
      %2716 = vmatprep.subr.mxu0 0.0
      %2717 = vmatpush1.msra.mxu0 0.0
      %2718 = vmatprep.subr.mxu0 0.0
      %2719 = vmatpush1.msra.mxu0 0.0
      %2720 = vmatprep.subr.mxu0 0.0
      %2721 = vmatpush1.msra.mxu0 0.0
      %2722 = vmatprep.subr.mxu0 0.0
      %2723 = vmatpush1.msra.mxu0 0.0
      %2724 = vmatprep.mubr.f32.mxu0 0.0
      %2725 = vmatmul.mubr.f32.gmra.mrb[0].mxu0 %v2587
      %v2726 = vpop.f32.mrb[0].mxu0
      %v2727 = vadd.f32 0.0, %v2726
      %v2728 = vpop.f32.mrb[0].mxu0
      %2729 = vdwg.mxu0
      %v2730 = vadd.f32 %v2572, %v2656
      %v2731 = vadd.f32 %v2573, %v2658
      %v2732 = vadd.f32 %v2574, %v2727
      %2733 = vrot.lane.b32.xlu0 %v2095, 108
      %v2734 = vpop.permute.xlu0 %2733
      %2735 = vrot.lane.b32.xlu0 %v2096, 108
      %v2736 = vpop.permute.xlu0 %2735
      %2737 = vrot.lane.b32.xlu0 %v2097, 108
      %v2738 = vpop.permute.xlu0 %2737
      %v2739 = vsel %vm1105, %v2734, %v2736
      %v2740 = vsel %vm1105, %v2736, %v2738
      %v2745 = vsel %vm1806, %v295, 0
      %2747 = vmatprep.subr.mxu0 %v2740
      %2748 = vmatpush1.msra.mxu0 %v2739
      %2749 = vmatprep.subr.mxu0 0.0
      %2750 = vmatpush1.msra.mxu0 0.0
      %2751 = vmatprep.subr.mxu0 0.0
      %2752 = vmatpush1.msra.mxu0 0.0
      %2753 = vmatprep.subr.mxu0 0.0
      %2754 = vmatpush1.msra.mxu0 0.0
      %2755 = vmatprep.subr.mxu0 0.0
      %2756 = vmatpush1.msra.mxu0 0.0
      %2757 = vmatprep.subr.mxu0 0.0
      %2758 = vmatpush1.msra.mxu0 0.0
      %2759 = vmatprep.subr.mxu0 0.0
      %2760 = vmatpush1.msra.mxu0 0.0
      %2761 = vmatprep.subr.mxu0 0.0
      %2762 = vmatpush1.msra.mxu0 0.0
      %2763 = vmatprep.subr.mxu0 0.0
      %2764 = vmatpush1.msra.mxu0 0.0
      %2765 = vmatprep.subr.mxu0 0.0
      %2766 = vmatpush1.msra.mxu0 0.0
      %2767 = vmatprep.subr.mxu0 0.0
      %2768 = vmatpush1.msra.mxu0 0.0
      %2769 = vmatprep.subr.mxu0 0.0
      %2770 = vmatpush1.msra.mxu0 0.0
      %2771 = vmatprep.subr.mxu0 0.0
      %2772 = vmatpush1.msra.mxu0 0.0
      %2773 = vmatprep.subr.mxu0 0.0
      %2774 = vmatpush1.msra.mxu0 0.0
      %2775 = vmatprep.subr.mxu0 0.0
      %2776 = vmatpush1.msra.mxu0 0.0
      %2777 = vmatprep.subr.mxu0 0.0
      %2778 = vmatpush1.msra.mxu0 0.0
      %2779 = vmatprep.subr.mxu0 0.0
      %2780 = vmatpush1.msra.mxu0 0.0
      %2781 = vmatprep.subr.mxu0 0.0
      %2782 = vmatpush1.msra.mxu0 0.0
      %2783 = vmatprep.subr.mxu0 0.0
      %2784 = vmatpush1.msra.mxu0 0.0
      %2785 = vmatprep.subr.mxu0 0.0
      %2786 = vmatpush1.msra.mxu0 0.0
      %2787 = vmatprep.subr.mxu0 0.0
      %2788 = vmatpush1.msra.mxu0 0.0
      %2789 = vmatprep.subr.mxu0 0.0
      %2790 = vmatpush1.msra.mxu0 0.0
      %2791 = vmatprep.subr.mxu0 0.0
      %2792 = vmatpush1.msra.mxu0 0.0
      %2793 = vmatprep.subr.mxu0 0.0
      %2794 = vmatpush1.msra.mxu0 0.0
      %2795 = vmatprep.subr.mxu0 0.0
      %2796 = vmatpush1.msra.mxu0 0.0
      %2797 = vmatprep.subr.mxu0 0.0
      %2798 = vmatpush1.msra.mxu0 0.0
      %2799 = vmatprep.subr.mxu0 0.0
      %2800 = vmatpush1.msra.mxu0 0.0
      %2801 = vmatprep.subr.mxu0 0.0
      %2802 = vmatpush1.msra.mxu0 0.0
      %2803 = vmatprep.subr.mxu0 0.0
      %2804 = vmatpush1.msra.mxu0 0.0
      %2805 = vmatprep.subr.mxu0 0.0
      %2806 = vmatpush1.msra.mxu0 0.0
      %2807 = vmatprep.subr.mxu0 0.0
      %2808 = vmatpush1.msra.mxu0 0.0
      %2809 = vmatprep.subr.mxu0 0.0
      %2810 = vmatpush1.msra.mxu0 0.0
      %2811 = vmatprep.mubr.f32.mxu0 0.0
      %2812 = vmatmul.mubr.f32.gmra.mrb[0].mxu0 %v2745
      %v2813 = vpop.f32.mrb[0].mxu0
      %v2814 = vadd.f32 0.0, %v2813
      %v2815 = vpop.f32.mrb[0].mxu0
      %v2816 = vadd.f32 0.0, %v2815
      %2817 = vdwg.mxu0
      %2818 = vmatprep.subr.mxu0 0.0
      %2819 = vmatpush1.msra.mxu0 %v2738
      %2820 = vmatprep.subr.mxu0 0.0
      %2821 = vmatpush1.msra.mxu0 0.0
      %2822 = vmatprep.subr.mxu0 0.0
      %2823 = vmatpush1.msra.mxu0 0.0
      %2824 = vmatprep.subr.mxu0 0.0
      %2825 = vmatpush1.msra.mxu0 0.0
      %2826 = vmatprep.subr.mxu0 0.0
      %2827 = vmatpush1.msra.mxu0 0.0
      %2828 = vmatprep.subr.mxu0 0.0
      %2829 = vmatpush1.msra.mxu0 0.0
      %2830 = vmatprep.subr.mxu0 0.0
      %2831 = vmatpush1.msra.mxu0 0.0
      %2832 = vmatprep.subr.mxu0 0.0
      %2833 = vmatpush1.msra.mxu0 0.0
      %2834 = vmatprep.subr.mxu0 0.0
      %2835 = vmatpush1.msra.mxu0 0.0
      %2836 = vmatprep.subr.mxu0 0.0
      %2837 = vmatpush1.msra.mxu0 0.0
      %2838 = vmatprep.subr.mxu0 0.0
      %2839 = vmatpush1.msra.mxu0 0.0
      %2840 = vmatprep.subr.mxu0 0.0
      %2841 = vmatpush1.msra.mxu0 0.0
      %2842 = vmatprep.subr.mxu0 0.0
      %2843 = vmatpush1.msra.mxu0 0.0
      %2844 = vmatprep.subr.mxu0 0.0
      %2845 = vmatpush1.msra.mxu0 0.0
      %2846 = vmatprep.subr.mxu0 0.0
      %2847 = vmatpush1.msra.mxu0 0.0
      %2848 = vmatprep.subr.mxu0 0.0
      %2849 = vmatpush1.msra.mxu0 0.0
      %2850 = vmatprep.subr.mxu0 0.0
      %2851 = vmatpush1.msra.mxu0 0.0
      %2852 = vmatprep.subr.mxu0 0.0
      %2853 = vmatpush1.msra.mxu0 0.0
      %2854 = vmatprep.subr.mxu0 0.0
      %2855 = vmatpush1.msra.mxu0 0.0
      %2856 = vmatprep.subr.mxu0 0.0
      %2857 = vmatpush1.msra.mxu0 0.0
      %2858 = vmatprep.subr.mxu0 0.0
      %2859 = vmatpush1.msra.mxu0 0.0
      %2860 = vmatprep.subr.mxu0 0.0
      %2861 = vmatpush1.msra.mxu0 0.0
      %2862 = vmatprep.subr.mxu0 0.0
      %2863 = vmatpush1.msra.mxu0 0.0
      %2864 = vmatprep.subr.mxu0 0.0
      %2865 = vmatpush1.msra.mxu0 0.0
      %2866 = vmatprep.subr.mxu0 0.0
      %2867 = vmatpush1.msra.mxu0 0.0
      %2868 = vmatprep.subr.mxu0 0.0
      %2869 = vmatpush1.msra.mxu0 0.0
      %2870 = vmatprep.subr.mxu0 0.0
      %2871 = vmatpush1.msra.mxu0 0.0
      %2872 = vmatprep.subr.mxu0 0.0
      %2873 = vmatpush1.msra.mxu0 0.0
      %2874 = vmatprep.subr.mxu0 0.0
      %2875 = vmatpush1.msra.mxu0 0.0
      %2876 = vmatprep.subr.mxu0 0.0
      %2877 = vmatpush1.msra.mxu0 0.0
      %2878 = vmatprep.subr.mxu0 0.0
      %2879 = vmatpush1.msra.mxu0 0.0
      %2880 = vmatprep.subr.mxu0 0.0
      %2881 = vmatpush1.msra.mxu0 0.0
      %2882 = vmatprep.mubr.f32.mxu0 0.0
      %2883 = vmatmul.mubr.f32.gmra.mrb[0].mxu0 %v2745
      %v2884 = vpop.f32.mrb[0].mxu0
      %v2885 = vadd.f32 0.0, %v2884
      %v2886 = vpop.f32.mrb[0].mxu0
      %2887 = vdwg.mxu0
      %v2888 = vadd.f32 %v2730, %v2814
      %v2889 = vadd.f32 %v2731, %v2816
      %v2890 = vadd.f32 %v2732, %v2885
      %2891 = vrot.lane.b32.xlu0 %v2095, 92
      %v2892 = vpop.permute.xlu0 %2891
      %2893 = vrot.lane.b32.xlu0 %v2096, 92
      %v2894 = vpop.permute.xlu0 %2893
      %2895 = vrot.lane.b32.xlu0 %v2097, 92
      %v2896 = vpop.permute.xlu0 %2895
      %v2897 = vsel %vm1267, %v2892, %v2894
      %v2898 = vsel %vm1267, %v2894, %v2896
      %v2903 = vsel %vm1806, %v296, 0
      %2905 = vmatprep.subr.mxu0 %v2898
      %2906 = vmatpush1.msra.mxu0 %v2897
      %2907 = vmatprep.subr.mxu0 0.0
      %2908 = vmatpush1.msra.mxu0 0.0
      %2909 = vmatprep.subr.mxu0 0.0
      %2910 = vmatpush1.msra.mxu0 0.0
      %2911 = vmatprep.subr.mxu0 0.0
      %2912 = vmatpush1.msra.mxu0 0.0
      %2913 = vmatprep.subr.mxu0 0.0
      %2914 = vmatpush1.msra.mxu0 0.0
      %2915 = vmatprep.subr.mxu0 0.0
      %2916 = vmatpush1.msra.mxu0 0.0
      %2917 = vmatprep.subr.mxu0 0.0
      %2918 = vmatpush1.msra.mxu0 0.0
      %2919 = vmatprep.subr.mxu0 0.0
      %2920 = vmatpush1.msra.mxu0 0.0
      %2921 = vmatprep.subr.mxu0 0.0
      %2922 = vmatpush1.msra.mxu0 0.0
      %2923 = vmatprep.subr.mxu0 0.0
      %2924 = vmatpush1.msra.mxu0 0.0
      %2925 = vmatprep.subr.mxu0 0.0
      %2926 = vmatpush1.msra.mxu0 0.0
      %2927 = vmatprep.subr.mxu0 0.0
      %2928 = vmatpush1.msra.mxu0 0.0
      %2929 = vmatprep.subr.mxu0 0.0
      %2930 = vmatpush1.msra.mxu0 0.0
      %2931 = vmatprep.subr.mxu0 0.0
      %2932 = vmatpush1.msra.mxu0 0.0
      %2933 = vmatprep.subr.mxu0 0.0
      %2934 = vmatpush1.msra.mxu0 0.0
      %2935 = vmatprep.subr.mxu0 0.0
      %2936 = vmatpush1.msra.mxu0 0.0
      %2937 = vmatprep.subr.mxu0 0.0
      %2938 = vmatpush1.msra.mxu0 0.0
      %2939 = vmatprep.subr.mxu0 0.0
      %2940 = vmatpush1.msra.mxu0 0.0
      %2941 = vmatprep.subr.mxu0 0.0
      %2942 = vmatpush1.msra.mxu0 0.0
      %2943 = vmatprep.subr.mxu0 0.0
      %2944 = vmatpush1.msra.mxu0 0.0
      %2945 = vmatprep.subr.mxu0 0.0
      %2946 = vmatpush1.msra.mxu0 0.0
      %2947 = vmatprep.subr.mxu0 0.0
      %2948 = vmatpush1.msra.mxu0 0.0
      %2949 = vmatprep.subr.mxu0 0.0
      %2950 = vmatpush1.msra.mxu0 0.0
      %2951 = vmatprep.subr.mxu0 0.0
      %2952 = vmatpush1.msra.mxu0 0.0
      %2953 = vmatprep.subr.mxu0 0.0
      %2954 = vmatpush1.msra.mxu0 0.0
      %2955 = vmatprep.subr.mxu0 0.0
      %2956 = vmatpush1.msra.mxu0 0.0
      %2957 = vmatprep.subr.mxu0 0.0
      %2958 = vmatpush1.msra.mxu0 0.0
      %2959 = vmatprep.subr.mxu0 0.0
      %2960 = vmatpush1.msra.mxu0 0.0
      %2961 = vmatprep.subr.mxu0 0.0
      %2962 = vmatpush1.msra.mxu0 0.0
      %2963 = vmatprep.subr.mxu0 0.0
      %2964 = vmatpush1.msra.mxu0 0.0
      %2965 = vmatprep.subr.mxu0 0.0
      %2966 = vmatpush1.msra.mxu0 0.0
      %2967 = vmatprep.subr.mxu0 0.0
      %2968 = vmatpush1.msra.mxu0 0.0
      %2969 = vmatprep.mubr.f32.mxu0 0.0
      %2970 = vmatmul.mubr.f32.gmra.mrb[0].mxu0 %v2903
      %v2971 = vpop.f32.mrb[0].mxu0
      %v2972 = vadd.f32 0.0, %v2971
      %v2973 = vpop.f32.mrb[0].mxu0
      %v2974 = vadd.f32 0.0, %v2973
      %2975 = vdwg.mxu0
      %2976 = vmatprep.subr.mxu0 0.0
      %2977 = vmatpush1.msra.mxu0 %v2896
      %2978 = vmatprep.subr.mxu0 0.0
      %2979 = vmatpush1.msra.mxu0 0.0
      %2980 = vmatprep.subr.mxu0 0.0
      %2981 = vmatpush1.msra.mxu0 0.0
      %2982 = vmatprep.subr.mxu0 0.0
      %2983 = vmatpush1.msra.mxu0 0.0
      %2984 = vmatprep.subr.mxu0 0.0
      %2985 = vmatpush1.msra.mxu0 0.0
      %2986 = vmatprep.subr.mxu0 0.0
      %2987 = vmatpush1.msra.mxu0 0.0
      %2988 = vmatprep.subr.mxu0 0.0
      %2989 = vmatpush1.msra.mxu0 0.0
      %2990 = vmatprep.subr.mxu0 0.0
      %2991 = vmatpush1.msra.mxu0 0.0
      %2992 = vmatprep.subr.mxu0 0.0
      %2993 = vmatpush1.msra.mxu0 0.0
      %2994 = vmatprep.subr.mxu0 0.0
      %2995 = vmatpush1.msra.mxu0 0.0
      %2996 = vmatprep.subr.mxu0 0.0
      %2997 = vmatpush1.msra.mxu0 0.0
      %2998 = vmatprep.subr.mxu0 0.0
      %2999 = vmatpush1.msra.mxu0 0.0
      %3000 = vmatprep.subr.mxu0 0.0
      %3001 = vmatpush1.msra.mxu0 0.0
      %3002 = vmatprep.subr.mxu0 0.0
      %3003 = vmatpush1.msra.mxu0 0.0
      %3004 = vmatprep.subr.mxu0 0.0
      %3005 = vmatpush1.msra.mxu0 0.0
      %3006 = vmatprep.subr.mxu0 0.0
      %3007 = vmatpush1.msra.mxu0 0.0
      %3008 = vmatprep.subr.mxu0 0.0
      %3009 = vmatpush1.msra.mxu0 0.0
      %3010 = vmatprep.subr.mxu0 0.0
      %3011 = vmatpush1.msra.mxu0 0.0
      %3012 = vmatprep.subr.mxu0 0.0
      %3013 = vmatpush1.msra.mxu0 0.0
      %3014 = vmatprep.subr.mxu0 0.0
      %3015 = vmatpush1.msra.mxu0 0.0
      %3016 = vmatprep.subr.mxu0 0.0
      %3017 = vmatpush1.msra.mxu0 0.0
      %3018 = vmatprep.subr.mxu0 0.0
      %3019 = vmatpush1.msra.mxu0 0.0
      %3020 = vmatprep.subr.mxu0 0.0
      %3021 = vmatpush1.msra.mxu0 0.0
      %3022 = vmatprep.subr.mxu0 0.0
      %3023 = vmatpush1.msra.mxu0 0.0
      %3024 = vmatprep.subr.mxu0 0.0
      %3025 = vmatpush1.msra.mxu0 0.0
      %3026 = vmatprep.subr.mxu0 0.0
      %3027 = vmatpush1.msra.mxu0 0.0
      %3028 = vmatprep.subr.mxu0 0.0
      %3029 = vmatpush1.msra.mxu0 0.0
      %3030 = vmatprep.subr.mxu0 0.0
      %3031 = vmatpush1.msra.mxu0 0.0
      %3032 = vmatprep.subr.mxu0 0.0
      %3033 = vmatpush1.msra.mxu0 0.0
      %3034 = vmatprep.subr.mxu0 0.0
      %3035 = vmatpush1.msra.mxu0 0.0
      %3036 = vmatprep.subr.mxu0 0.0
      %3037 = vmatpush1.msra.mxu0 0.0
      %3038 = vmatprep.subr.mxu0 0.0
      %3039 = vmatpush1.msra.mxu0 0.0
      %3040 = vmatprep.mubr.f32.mxu0 0.0
      %3041 = vmatmul.mubr.f32.gmra.mrb[0].mxu0 %v2903
      %v3042 = vpop.f32.mrb[0].mxu0
      %v3043 = vadd.f32 0.0, %v3042
      %v3044 = vpop.f32.mrb[0].mxu0
      %3045 = vdwg.mxu0
      %v3046 = vadd.f32 %v2888, %v2972
      %v3047 = vadd.f32 %v2889, %v2974
      %v3048 = vadd.f32 %v2890, %v3043
      %3049 = vrot.lane.b32.xlu0 %v2095, 91
      %v3050 = vpop.permute.xlu0 %3049
      %3051 = vrot.lane.b32.xlu0 %v2096, 91
      %v3052 = vpop.permute.xlu0 %3051
      %3053 = vrot.lane.b32.xlu0 %v2097, 91
      %v3054 = vpop.permute.xlu0 %3053
      %v3055 = vsel %vm1429, %v3050, %v3052
      %v3056 = vsel %vm1429, %v3052, %v3054
      %v3061 = vsel %vm1806, %v297, 0
      %3063 = vmatprep.subr.mxu0 %v3056
      %3064 = vmatpush1.msra.mxu0 %v3055
      %3065 = vmatprep.subr.mxu0 0.0
      %3066 = vmatpush1.msra.mxu0 0.0
      %3067 = vmatprep.subr.mxu0 0.0
      %3068 = vmatpush1.msra.mxu0 0.0
      %3069 = vmatprep.subr.mxu0 0.0
      %3070 = vmatpush1.msra.mxu0 0.0
      %3071 = vmatprep.subr.mxu0 0.0
      %3072 = vmatpush1.msra.mxu0 0.0
      %3073 = vmatprep.subr.mxu0 0.0
      %3074 = vmatpush1.msra.mxu0 0.0
      %3075 = vmatprep.subr.mxu0 0.0
      %3076 = vmatpush1.msra.mxu0 0.0
      %3077 = vmatprep.subr.mxu0 0.0
      %3078 = vmatpush1.msra.mxu0 0.0
      %3079 = vmatprep.subr.mxu0 0.0
      %3080 = vmatpush1.msra.mxu0 0.0
      %3081 = vmatprep.subr.mxu0 0.0
      %3082 = vmatpush1.msra.mxu0 0.0
      %3083 = vmatprep.subr.mxu0 0.0
      %3084 = vmatpush1.msra.mxu0 0.0
      %3085 = vmatprep.subr.mxu0 0.0
      %3086 = vmatpush1.msra.mxu0 0.0
      %3087 = vmatprep.subr.mxu0 0.0
      %3088 = vmatpush1.msra.mxu0 0.0
      %3089 = vmatprep.subr.mxu0 0.0
      %3090 = vmatpush1.msra.mxu0 0.0
      %3091 = vmatprep.subr.mxu0 0.0
      %3092 = vmatpush1.msra.mxu0 0.0
      %3093 = vmatprep.subr.mxu0 0.0
      %3094 = vmatpush1.msra.mxu0 0.0
      %3095 = vmatprep.subr.mxu0 0.0
      %3096 = vmatpush1.msra.mxu0 0.0
      %3097 = vmatprep.subr.mxu0 0.0
      %3098 = vmatpush1.msra.mxu0 0.0
      %3099 = vmatprep.subr.mxu0 0.0
      %3100 = vmatpush1.msra.mxu0 0.0
      %3101 = vmatprep.subr.mxu0 0.0
      %3102 = vmatpush1.msra.mxu0 0.0
      %3103 = vmatprep.subr.mxu0 0.0
      %3104 = vmatpush1.msra.mxu0 0.0
      %3105 = vmatprep.subr.mxu0 0.0
      %3106 = vmatpush1.msra.mxu0 0.0
      %3107 = vmatprep.subr.mxu0 0.0
      %3108 = vmatpush1.msra.mxu0 0.0
      %3109 = vmatprep.subr.mxu0 0.0
      %3110 = vmatpush1.msra.mxu0 0.0
      %3111 = vmatprep.subr.mxu0 0.0
      %3112 = vmatpush1.msra.mxu0 0.0
      %3113 = vmatprep.subr.mxu0 0.0
      %3114 = vmatpush1.msra.mxu0 0.0
      %3115 = vmatprep.subr.mxu0 0.0
      %3116 = vmatpush1.msra.mxu0 0.0
      %3117 = vmatprep.subr.mxu0 0.0
      %3118 = vmatpush1.msra.mxu0 0.0
      %3119 = vmatprep.subr.mxu0 0.0
      %3120 = vmatpush1.msra.mxu0 0.0
      %3121 = vmatprep.subr.mxu0 0.0
      %3122 = vmatpush1.msra.mxu0 0.0
      %3123 = vmatprep.subr.mxu0 0.0
      %3124 = vmatpush1.msra.mxu0 0.0
      %3125 = vmatprep.subr.mxu0 0.0
      %3126 = vmatpush1.msra.mxu0 0.0
      %3127 = vmatprep.mubr.f32.mxu0 0.0
      %3128 = vmatmul.mubr.f32.gmra.mrb[0].mxu0 %v3061
      %v3129 = vpop.f32.mrb[0].mxu0
      %v3130 = vadd.f32 0.0, %v3129
      %v3131 = vpop.f32.mrb[0].mxu0
      %v3132 = vadd.f32 0.0, %v3131
      %3133 = vdwg.mxu0
      %3134 = vmatprep.subr.mxu0 0.0
      %3135 = vmatpush1.msra.mxu0 %v3054
      %3136 = vmatprep.subr.mxu0 0.0
      %3137 = vmatpush1.msra.mxu0 0.0
      %3138 = vmatprep.subr.mxu0 0.0
      %3139 = vmatpush1.msra.mxu0 0.0
      %3140 = vmatprep.subr.mxu0 0.0
      %3141 = vmatpush1.msra.mxu0 0.0
      %3142 = vmatprep.subr.mxu0 0.0
      %3143 = vmatpush1.msra.mxu0 0.0
      %3144 = vmatprep.subr.mxu0 0.0
      %3145 = vmatpush1.msra.mxu0 0.0
      %3146 = vmatprep.subr.mxu0 0.0
      %3147 = vmatpush1.msra.mxu0 0.0
      %3148 = vmatprep.subr.mxu0 0.0
      %3149 = vmatpush1.msra.mxu0 0.0
      %3150 = vmatprep.subr.mxu0 0.0
      %3151 = vmatpush1.msra.mxu0 0.0
      %3152 = vmatprep.subr.mxu0 0.0
      %3153 = vmatpush1.msra.mxu0 0.0
      %3154 = vmatprep.subr.mxu0 0.0
      %3155 = vmatpush1.msra.mxu0 0.0
      %3156 = vmatprep.subr.mxu0 0.0
      %3157 = vmatpush1.msra.mxu0 0.0
      %3158 = vmatprep.subr.mxu0 0.0
      %3159 = vmatpush1.msra.mxu0 0.0
      %3160 = vmatprep.subr.mxu0 0.0
      %3161 = vmatpush1.msra.mxu0 0.0
      %3162 = vmatprep.subr.mxu0 0.0
      %3163 = vmatpush1.msra.mxu0 0.0
      %3164 = vmatprep.subr.mxu0 0.0
      %3165 = vmatpush1.msra.mxu0 0.0
      %3166 = vmatprep.subr.mxu0 0.0
      %3167 = vmatpush1.msra.mxu0 0.0
      %3168 = vmatprep.subr.mxu0 0.0
      %3169 = vmatpush1.msra.mxu0 0.0
      %3170 = vmatprep.subr.mxu0 0.0
      %3171 = vmatpush1.msra.mxu0 0.0
      %3172 = vmatprep.subr.mxu0 0.0
      %3173 = vmatpush1.msra.mxu0 0.0
      %3174 = vmatprep.subr.mxu0 0.0
      %3175 = vmatpush1.msra.mxu0 0.0
      %3176 = vmatprep.subr.mxu0 0.0
      %3177 = vmatpush1.msra.mxu0 0.0
      %3178 = vmatprep.subr.mxu0 0.0
      %3179 = vmatpush1.msra.mxu0 0.0
      %3180 = vmatprep.subr.mxu0 0.0
      %3181 = vmatpush1.msra.mxu0 0.0
      %3182 = vmatprep.subr.mxu0 0.0
      %3183 = vmatpush1.msra.mxu0 0.0
      %3184 = vmatprep.subr.mxu0 0.0
      %3185 = vmatpush1.msra.mxu0 0.0
      %3186 = vmatprep.subr.mxu0 0.0
      %3187 = vmatpush1.msra.mxu0 0.0
      %3188 = vmatprep.subr.mxu0 0.0
      %3189 = vmatpush1.msra.mxu0 0.0
      %3190 = vmatprep.subr.mxu0 0.0
      %3191 = vmatpush1.msra.mxu0 0.0
      %3192 = vmatprep.subr.mxu0 0.0
      %3193 = vmatpush1.msra.mxu0 0.0
      %3194 = vmatprep.subr.mxu0 0.0
      %3195 = vmatpush1.msra.mxu0 0.0
      %3196 = vmatprep.subr.mxu0 0.0
      %3197 = vmatpush1.msra.mxu0 0.0
      %3198 = vmatprep.mubr.f32.mxu0 0.0
      %3199 = vmatmul.mubr.f32.gmra.mrb[0].mxu0 %v3061
      %v3200 = vpop.f32.mrb[0].mxu0
      %v3201 = vadd.f32 0.0, %v3200
      %v3202 = vpop.f32.mrb[0].mxu0
      %3203 = vdwg.mxu0
      %v3204 = vadd.f32 %v3046, %v3130
      %v3205 = vadd.f32 %v3047, %v3132
      %v3206 = vadd.f32 %v3048, %v3201
      %3207 = vrot.lane.b32.xlu0 %v2095, 90
      %v3208 = vpop.permute.xlu0 %3207
      %3209 = vrot.lane.b32.xlu0 %v2096, 90
      %v3210 = vpop.permute.xlu0 %3209
      %3211 = vrot.lane.b32.xlu0 %v2097, 90
      %v3212 = vpop.permute.xlu0 %3211
      %v3213 = vsel %vm1591, %v3208, %v3210
      %v3214 = vsel %vm1591, %v3210, %v3212
      %v3219 = vsel %vm1806, %v298, 0
      %3221 = vmatprep.subr.mxu0 %v3214
      %3222 = vmatpush1.msra.mxu0 %v3213
      %3223 = vmatprep.subr.mxu0 0.0
      %3224 = vmatpush1.msra.mxu0 0.0
      %3225 = vmatprep.subr.mxu0 0.0
      %3226 = vmatpush1.msra.mxu0 0.0
      %3227 = vmatprep.subr.mxu0 0.0
      %3228 = vmatpush1.msra.mxu0 0.0
      %3229 = vmatprep.subr.mxu0 0.0
      %3230 = vmatpush1.msra.mxu0 0.0
      %3231 = vmatprep.subr.mxu0 0.0
      %3232 = vmatpush1.msra.mxu0 0.0
      %3233 = vmatprep.subr.mxu0 0.0
      %3234 = vmatpush1.msra.mxu0 0.0
      %3235 = vmatprep.subr.mxu0 0.0
      %3236 = vmatpush1.msra.mxu0 0.0
      %3237 = vmatprep.subr.mxu0 0.0
      %3238 = vmatpush1.msra.mxu0 0.0
      %3239 = vmatprep.subr.mxu0 0.0
      %3240 = vmatpush1.msra.mxu0 0.0
      %3241 = vmatprep.subr.mxu0 0.0
      %3242 = vmatpush1.msra.mxu0 0.0
      %3243 = vmatprep.subr.mxu0 0.0
      %3244 = vmatpush1.msra.mxu0 0.0
      %3245 = vmatprep.subr.mxu0 0.0
      %3246 = vmatpush1.msra.mxu0 0.0
      %3247 = vmatprep.subr.mxu0 0.0
      %3248 = vmatpush1.msra.mxu0 0.0
      %3249 = vmatprep.subr.mxu0 0.0
      %3250 = vmatpush1.msra.mxu0 0.0
      %3251 = vmatprep.subr.mxu0 0.0
      %3252 = vmatpush1.msra.mxu0 0.0
      %3253 = vmatprep.subr.mxu0 0.0
      %3254 = vmatpush1.msra.mxu0 0.0
      %3255 = vmatprep.subr.mxu0 0.0
      %3256 = vmatpush1.msra.mxu0 0.0
      %3257 = vmatprep.subr.mxu0 0.0
      %3258 = vmatpush1.msra.mxu0 0.0
      %3259 = vmatprep.subr.mxu0 0.0
      %3260 = vmatpush1.msra.mxu0 0.0
      %3261 = vmatprep.subr.mxu0 0.0
      %3262 = vmatpush1.msra.mxu0 0.0
      %3263 = vmatprep.subr.mxu0 0.0
      %3264 = vmatpush1.msra.mxu0 0.0
      %3265 = vmatprep.subr.mxu0 0.0
      %3266 = vmatpush1.msra.mxu0 0.0
      %3267 = vmatprep.subr.mxu0 0.0
      %3268 = vmatpush1.msra.mxu0 0.0
      %3269 = vmatprep.subr.mxu0 0.0
      %3270 = vmatpush1.msra.mxu0 0.0
      %3271 = vmatprep.subr.mxu0 0.0
      %3272 = vmatpush1.msra.mxu0 0.0
      %3273 = vmatprep.subr.mxu0 0.0
      %3274 = vmatpush1.msra.mxu0 0.0
      %3275 = vmatprep.subr.mxu0 0.0
      %3276 = vmatpush1.msra.mxu0 0.0
      %3277 = vmatprep.subr.mxu0 0.0
      %3278 = vmatpush1.msra.mxu0 0.0
      %3279 = vmatprep.subr.mxu0 0.0
      %3280 = vmatpush1.msra.mxu0 0.0
      %3281 = vmatprep.subr.mxu0 0.0
      %3282 = vmatpush1.msra.mxu0 0.0
      %3283 = vmatprep.subr.mxu0 0.0
      %3284 = vmatpush1.msra.mxu0 0.0
      %3285 = vmatprep.mubr.f32.mxu0 0.0
      %3286 = vmatmul.mubr.f32.gmra.mrb[0].mxu0 %v3219
      %v3287 = vpop.f32.mrb[0].mxu0
      %v3288 = vadd.f32 0.0, %v3287
      %v3289 = vpop.f32.mrb[0].mxu0
      %v3290 = vadd.f32 0.0, %v3289
      %3291 = vdwg.mxu0
      %3292 = vmatprep.subr.mxu0 0.0
      %3293 = vmatpush1.msra.mxu0 %v3212
      %3294 = vmatprep.subr.mxu0 0.0
      %3295 = vmatpush1.msra.mxu0 0.0
      %3296 = vmatprep.subr.mxu0 0.0
      %3297 = vmatpush1.msra.mxu0 0.0
      %3298 = vmatprep.subr.mxu0 0.0
      %3299 = vmatpush1.msra.mxu0 0.0
      %3300 = vmatprep.subr.mxu0 0.0
      %3301 = vmatpush1.msra.mxu0 0.0
      %3302 = vmatprep.subr.mxu0 0.0
      %3303 = vmatpush1.msra.mxu0 0.0
      %3304 = vmatprep.subr.mxu0 0.0
      %3305 = vmatpush1.msra.mxu0 0.0
      %3306 = vmatprep.subr.mxu0 0.0
      %3307 = vmatpush1.msra.mxu0 0.0
      %3308 = vmatprep.subr.mxu0 0.0
      %3309 = vmatpush1.msra.mxu0 0.0
      %3310 = vmatprep.subr.mxu0 0.0
      %3311 = vmatpush1.msra.mxu0 0.0
      %3312 = vmatprep.subr.mxu0 0.0
      %3313 = vmatpush1.msra.mxu0 0.0
      %3314 = vmatprep.subr.mxu0 0.0
      %3315 = vmatpush1.msra.mxu0 0.0
      %3316 = vmatprep.subr.mxu0 0.0
      %3317 = vmatpush1.msra.mxu0 0.0
      %3318 = vmatprep.subr.mxu0 0.0
      %3319 = vmatpush1.msra.mxu0 0.0
      %3320 = vmatprep.subr.mxu0 0.0
      %3321 = vmatpush1.msra.mxu0 0.0
      %3322 = vmatprep.subr.mxu0 0.0
      %3323 = vmatpush1.msra.mxu0 0.0
      %3324 = vmatprep.subr.mxu0 0.0
      %3325 = vmatpush1.msra.mxu0 0.0
      %3326 = vmatprep.subr.mxu0 0.0
      %3327 = vmatpush1.msra.mxu0 0.0
      %3328 = vmatprep.subr.mxu0 0.0
      %3329 = vmatpush1.msra.mxu0 0.0
      %3330 = vmatprep.subr.mxu0 0.0
      %3331 = vmatpush1.msra.mxu0 0.0
      %3332 = vmatprep.subr.mxu0 0.0
      %3333 = vmatpush1.msra.mxu0 0.0
      %3334 = vmatprep.subr.mxu0 0.0
      %3335 = vmatpush1.msra.mxu0 0.0
      %3336 = vmatprep.subr.mxu0 0.0
      %3337 = vmatpush1.msra.mxu0 0.0
      %3338 = vmatprep.subr.mxu0 0.0
      %3339 = vmatpush1.msra.mxu0 0.0
      %3340 = vmatprep.subr.mxu0 0.0
      %3341 = vmatpush1.msra.mxu0 0.0
      %3342 = vmatprep.subr.mxu0 0.0
      %3343 = vmatpush1.msra.mxu0 0.0
      %3344 = vmatprep.subr.mxu0 0.0
      %3345 = vmatpush1.msra.mxu0 0.0
      %3346 = vmatprep.subr.mxu0 0.0
      %3347 = vmatpush1.msra.mxu0 0.0
      %3348 = vmatprep.subr.mxu0 0.0
      %3349 = vmatpush1.msra.mxu0 0.0
      %3350 = vmatprep.subr.mxu0 0.0
      %3351 = vmatpush1.msra.mxu0 0.0
      %3352 = vmatprep.subr.mxu0 0.0
      %3353 = vmatpush1.msra.mxu0 0.0
      %3354 = vmatprep.subr.mxu0 0.0
      %3355 = vmatpush1.msra.mxu0 0.0
      %3356 = vmatprep.mubr.f32.mxu0 0.0
      %3357 = vmatmul.mubr.f32.gmra.mrb[0].mxu0 %v3219
      %v3358 = vpop.f32.mrb[0].mxu0
      %v3359 = vadd.f32 0.0, %v3358
      %v3360 = vpop.f32.mrb[0].mxu0
      %3361 = vdwg.mxu0
      %v3362 = vadd.f32 %v3204, %v3288
      %v3363 = vadd.f32 %v3205, %v3290
      %v3364 = vadd.f32 %v3206, %v3359
      %v3365 = vld [vmem:[%s5] sm:$0xff]
      %3367 = vset.pattern.permute.xlu0 0
      %3368 = vperm.xlu0 %3367, %v3365
      %v3369 = vpop.permute.xlu0 %3368
      %v3371 = vadd.f32 %v3362, %v3369
      %v3372 = vadd.f32 %v3363, %v3369
      %v3373 = vadd.f32 %v3364, %v3369
      %v3374 = vmax.f32 %v3371, 0.0
      %v3375 = vmax.f32 %v3372, 0.0
      %v3376 = vmax.f32 %v3373, 0.0
      %3378 = vrot.lane.b32.xlu0 %v3374, 109
      %v3379 = vpop.permute.xlu0 %3378
      %vm3381 = vcmask 130048
      %3382 = vst.msk [vmem:[%s278] sm:$0xff] %vm3381, %v3379
      %3383 = vrot.lane.b32.xlu0 %v3374, 107
      %v3384 = vpop.permute.xlu0 %3383
      %vm3386 = vcmask 261248
      %3387 = vst.msk [vmem:[%s278] sm:$0xff] %vm3386, %v3384
      %3388 = vrot.lane.b32.xlu0 %v3374, 105
      %v3389 = vpop.permute.xlu0 %3388
      %vm3391 = vcmask 392448
      %3392 = vst.msk [vmem:[%s278] sm:$0xff] %vm3391, %v3389
      %3393 = vrot.lane.b32.xlu0 %v3374, 103
      %v3394 = vpop.permute.xlu0 %3393
      %vm3396 = vcmask 523648
      %3397 = vst.msk [vmem:[%s278] sm:$0xff] %vm3396, %v3394
      %3398 = vrot.lane.b32.xlu0 %v3374, 101
      %v3399 = vpop.permute.xlu0 %3398
      %vm3401 = vcmask 654848
      %3402 = vst.msk [vmem:[%s278] sm:$0xff] %vm3401, %v3399
      %3403 = vrot.lane.b32.xlu0 %v3374, 99
      %v3404 = vpop.permute.xlu0 %3403
      %vm3406 = vcmask 786048
      %3407 = vst.msk [vmem:[%s278] sm:$0xff] %vm3406, %v3404
      %3409 = vrot.lane.b32.xlu0 %v3374, 97
      %v3410 = vpop.permute.xlu0 %3409
      %3411 = vrot.lane.b32.xlu0 %v3375, 97
      %v3412 = vpop.permute.xlu0 %3411
      %vm3413 = vcmask 793600
      %v3414 = vsel %vm3413, %v3410, %v3412
      %vm3416 = vcmask 917248
      %3417 = vst.msk [vmem:[%s278] sm:$0xff] %vm3416, %v3414
      %3418 = vrot.lane.b32.xlu0 %v3375, 95
      %v3419 = vpop.permute.xlu0 %3418
      %vm3421 = vcmask 1048448
      %3422 = vst.msk [vmem:[%s278] sm:$0xff] %vm3421, %v3419
      %3423 = vrot.lane.b32.xlu0 %v3375, 93
      %v3424 = vpop.permute.xlu0 %3423
      %3426 = vst.msk [vmem:[%s278 + $0x8] sm:$0xff] %vm3381, %v3424
      %3427 = vrot.lane.b32.xlu0 %v3375, 91
      %v3428 = vpop.permute.xlu0 %3427
      %3430 = vst.msk [vmem:[%s278 + $0x8] sm:$0xff] %vm3386, %v3428
      %3431 = vrot.lane.b32.xlu0 %v3375, 89
      %v3432 = vpop.permute.xlu0 %3431
      %3434 = vst.msk [vmem:[%s278 + $0x8] sm:$0xff] %vm3391, %v3432
      %3435 = vrot.lane.b32.xlu0 %v3375, 87
      %v3436 = vpop.permute.xlu0 %3435
      %3438 = vst.msk [vmem:[%s278 + $0x8] sm:$0xff] %vm3396, %v3436
      %3439 = vrot.lane.b32.xlu0 %v3375, 85
      %v3440 = vpop.permute.xlu0 %3439
      %3442 = vst.msk [vmem:[%s278 + $0x8] sm:$0xff] %vm3401, %v3440
      %3444 = vrot.lane.b32.xlu0 %v3375, 83
      %v3445 = vpop.permute.xlu0 %3444
      %3446 = vrot.lane.b32.xlu0 %v3376, 83
      %v3447 = vpop.permute.xlu0 %3446
      %vm3448 = vcmask 678912
      %v3449 = vsel %vm3448, %v3445, %v3447
      %3451 = vst.msk [vmem:[%s278 + $0x8] sm:$0xff] %vm3406, %v3449
      %3452 = vrot.lane.b32.xlu0 %v3376, 81
      %v3453 = vpop.permute.xlu0 %3452
      %3455 = vst.msk [vmem:[%s278 + $0x8] sm:$0xff] %vm3416, %v3453
      %3456 = vrot.lane.b32.xlu0 %v3376, 79
      %v3457 = vpop.permute.xlu0 %3456
      %3459 = vst.msk [vmem:[%s278 + $0x8] sm:$0xff] %vm3421, %v3457
      %p3460 = scmp.lt.s32.totalorder %s18, 1
      %s3461 = scalar_select %p3460, %s18, 1
      %s3462 = smul.addr %s3461, 2
      %s3463 = smul.addr %s3462, 8
      %s3464 = scalar_lea.vmem %s7, %s3463
      // Predicated region
      $region49: #{structure_encoder_block.1} parent=47 // pred_check
        %p3465 = pneg %p188
      $region50: #{structure_encoder_block.1} parent=47 // pred_check_branch
        %3467 = sbr.rel (%p3465) target = $region52
      $region51: #{structure_encoder_block.1} parent=47 // pred_region
        _
      $region52: #{structure_encoder_block.1} parent=47 // pred_fallthru
        _
    $region48: #{structure_encoder_block.1} parent=5 // pred_fallthru
      _
    %p3468 = scmp.le.s32.totalorder 2, %s13
    // Predicated region
    $region53: #{structure_encoder_block.1} parent=5 // pred_check
      %p3469 = pneg %p3468
    $region54: #{structure_encoder_block.1} parent=5 // pred_check_branch
      %3471 = sbr.rel (%p3469) target = $region56
    $region55: #{structure_encoder_block.1} parent=5 // pred_region
      %s3472 = ssub.s32 %s13, 2
      // Predicated region
      $region57: #{structure_encoder_block.1} parent=55 // pred_check
        %p3473 = pneg %p194
      $region58: #{structure_encoder_block.1} parent=55 // pred_check_branch
        %3475 = sbr.rel (%p3473) target = $region60
      $region59: #{structure_encoder_block.1} parent=55 // pred_region
        %p3476 = scmp.lt.s32.totalorder %s19, 1
        %s3477 = scalar_select %p3476, %s19, 1
        %s3478 = smul.addr %s3477, 2
        %s3479 = smul.addr %s3478, 8
        %s3480 = scalar_lea.vmem %s7, %s3479
      $region60: #{structure_encoder_block.1} parent=55 // pred_fallthru
        _
    $region56: #{structure_encoder_block.1} parent=5 // pred_fallthru
      _
  $region6: #{structure_encoder_block.1} parent=0 // loop_footer
    %s17 = sadd.s32 1, %s13
  $region7: #{structure_encoder_block.1} parent=0 // loop_footer_branch
    %12 = sbr.rel target = $region3
  $region8: #{structure_encoder_block.1} parent=0 // loop_exit
    _

</llo_original>
